<compile_context>
chip_gen: v6e
topology: v6e:2x2x1
jax: 0.10.0
libtpu: 0.0.40
codegen_flags: <defaults>
</compile_context>

<pallas_src>
import jax
import jax.numpy as jnp
from jax.experimental import pallas as pl
from jax.experimental.pallas import tpu as pltpu

D_MODEL = 64
NHEAD = 4                  # documented only; heads never mix lanes when seq_len == 1
HEAD_DIM = D_MODEL // NHEAD
D_FF = 2048                # nn.TransformerEncoderLayer default dim_feedforward
NUM_LAYERS = 2
LN_EPS = 1e-5              # nn.LayerNorm default eps
OUT_PAD = 128              # lane-dense combined output width (main=cols 0:5, lucky=col 5)


def _layernorm(x, g, b):
    mu = jnp.mean(x, axis=-1, keepdims=True)
    xc = x - mu
    var = jnp.mean(xc * xc, axis=-1, keepdims=True)
    return xc * jax.lax.rsqrt(var + LN_EPS) * g + b


def _lottery_kernel(x_ref, emb_w, emb_b, vpw, vpb, ow, ob, f1w, f1b, f2w, f2b,
                    g1, b1, g2, b2, mw1, mb1, mw2p, mb2p, lw1, lb1, lw2p, lb2p,
                    out_ref):
    # embedding (bf16 operands, f32 accumulation)
    h = jnp.dot(x_ref[...].astype(jnp.bfloat16), emb_w[...],
                preferred_element_type=jnp.float32) + emb_b[...]

    # transformer encoder: 2 post-norm layers, unrolled (layer params stacked on axis 0).
    # seq_len == 1 -> softmax over a single key == 1 exactly, so attention is just
    # the value projection followed by the output projection.
    for l in range(NUM_LAYERS):
        hb = h.astype(jnp.bfloat16)
        v = jnp.dot(hb, vpw[l], preferred_element_type=jnp.float32) + vpb[l:l + 1, :]
        attn = (jnp.dot(v.astype(jnp.bfloat16), ow[l],
                        preferred_element_type=jnp.float32) + ob[l:l + 1, :])
        h = _layernorm(h + attn, g1[l:l + 1, :], b1[l:l + 1, :])

        hb = h.astype(jnp.bfloat16)
        ff = jnp.maximum(
            jnp.dot(hb, f1w[l], preferred_element_type=jnp.float32)
            + f1b[l:l + 1, :], 0.0)
        ff = (jnp.dot(ff.astype(jnp.bfloat16), f2w[l],
                      preferred_element_type=jnp.float32) + f2b[l:l + 1, :])
        h = _layernorm(h + ff, g2[l:l + 1, :], b2[l:l + 1, :])

    hb = h.astype(jnp.bfloat16)
    # main numbers head: Linear(64,128) -> ReLU -> Linear(128,5)   (output cols 0:5)
    mh = jnp.maximum(
        jnp.dot(hb, mw1[...], preferred_element_type=jnp.float32) + mb1[...], 0.0)
    out = jnp.dot(mh.astype(jnp.bfloat16), mw2p[...],
                  preferred_element_type=jnp.float32) + mb2p[...]
    # lucky number head: Linear(64,64) -> ReLU -> Linear(64,1)     (output col 5)
    lh = jnp.maximum(
        jnp.dot(hb, lw1[...], preferred_element_type=jnp.float32) + lb1[...], 0.0)
    out = out + (jnp.dot(lh.astype(jnp.bfloat16), lw2p[...],
                         preferred_element_type=jnp.float32) + lb2p[...])
    out_ref[...] = out


def _prepare_params(params):
    """Slice in_proj to the value rows, cast matmul weights to bf16, and pad the
    two head output projections into one lane-dense 128-wide slab."""
    (emb_w, emb_b, ipw, ipb, ow, ob, f1w, f1b, f2w, f2b,
     g1, b1, g2, b2, mw1, mb1, mw2, mb2, lw1, lb1, lw2, lb2) = params
    bf = lambda a: a.astype(jnp.bfloat16)
    vpw = ipw[:, :, 2 * D_MODEL:]                    # value projection only (q/k unused)
    vpb = ipb[:, 2 * D_MODEL:]
    mw2p = jnp.zeros((mw2.shape[0], OUT_PAD), jnp.float32).at[:, 0:5].set(mw2)
    mb2p = jnp.zeros((1, OUT_PAD), jnp.float32).at[:, 0:5].set(mb2)
    lw2p = jnp.zeros((lw2.shape[0], OUT_PAD), jnp.float32).at[:, 5:6].set(lw2)
    lb2p = jnp.zeros((1, OUT_PAD), jnp.float32).at[:, 5:6].set(lb2)
    return (bf(emb_w), emb_b, bf(vpw), vpb, bf(ow), ob, bf(f1w), f1b, bf(f2w),
            f2b, g1, b1, g2, b2, bf(mw1), mb1, bf(mw2p), mb2p, bf(lw1), lb1,
            bf(lw2p), lb2p)


def _const_spec(arr):
    """Whole-array weight block with a constant index map, single-buffered."""
    nd = arr.ndim
    idx = lambda i, _nd=nd: (0,) * _nd
    try:
        return pl.BlockSpec(arr.shape, idx, pipeline_mode=pl.Buffered(1))
    except (TypeError, AttributeError):   # older jax without pipeline_mode
        return pl.BlockSpec(arr.shape, idx)


def lottery_transformer(x, params, tm=256):
    """Forward pass.  `tm` is the row tile (multiple of 8).  Rows are zero-padded
    to a multiple of the tile; on v7x pick tm so that n_pad // tm >= 2 so both
    TensorCores get grid steps."""
    n, in_dim = x.shape
    kparams = _prepare_params(params)

    n8 = ((n + 7) // 8) * 8
    tm_eff = ((min(tm, n8) + 7) // 8) * 8
    n_pad = ((n + tm_eff - 1) // tm_eff) * tm_eff
    if n_pad != n:
        x = jnp.pad(x, ((0, n_pad - n), (0, 0)))
    grid = (n_pad // tm_eff,)

    in_specs = ([pl.BlockSpec((tm_eff, in_dim), lambda i: (i, 0))]
                + [_const_spec(p) for p in kparams])
    out_specs = pl.BlockSpec((tm_eff, OUT_PAD), lambda i: (i, 0))
    out_shape = jax.ShapeDtypeStruct((n_pad, OUT_PAD), jnp.float32)

    flops = 2 * n_pad * (
        in_dim * D_MODEL
        + NUM_LAYERS * (2 * D_MODEL * D_MODEL + 2 * D_MODEL * D_FF)
        + D_MODEL * 128 + 128 * OUT_PAD + D_MODEL * 64 + 64 * OUT_PAD)
    bytes_accessed = (x.size * x.dtype.itemsize
                      + sum(p.size * p.dtype.itemsize for p in kparams)
                      + n_pad * OUT_PAD * 4)
    cost = pl.CostEstimate(flops=int(flops), transcendentals=0,
                           bytes_accessed=int(bytes_accessed))

    out = pl.pallas_call(
        _lottery_kernel,
        grid=grid,
        in_specs=in_specs,
        out_specs=out_specs,
        out_shape=out_shape,
        cost_estimate=cost,
        compiler_params=pltpu.CompilerParams(
            dimension_semantics=("parallel",),
            vmem_limit_bytes=32 * 1024 * 1024),
    )(x, *kparams)

    return out[:n, 0:5], out[:n, 5:6]


def init_params(key, input_dim):
    """Deterministic synthetic parameters (not a checkpoint load).  Linear
    weights are stored pre-transposed (in, out); encoder-layer params are
    stacked on a leading layer axis."""
    keys = iter(jax.random.split(key, 32))

    def w(shape, scale=0.05):
        return (scale * jax.random.normal(next(keys), shape)).astype(jnp.float32)

    L = NUM_LAYERS
    params = (
        w((input_dim, D_MODEL)),            # emb_w
        w((1, D_MODEL)),                    # emb_b
        w((L, D_MODEL, 3 * D_MODEL)),       # in_proj weight (stacked, transposed)
        w((L, 3 * D_MODEL)),                # in_proj bias
        w((L, D_MODEL, D_MODEL)),           # out_proj weight
        w((L, D_MODEL)),                    # out_proj bias
        w((L, D_MODEL, D_FF)),              # linear1 weight
        w((L, D_FF)),                       # linear1 bias
        w((L, D_FF, D_MODEL)),              # linear2 weight
        w((L, D_MODEL)),                    # linear2 bias
        jnp.ones((L, D_MODEL), jnp.float32),   # norm1 gamma
        jnp.zeros((L, D_MODEL), jnp.float32),  # norm1 beta
        jnp.ones((L, D_MODEL), jnp.float32),   # norm2 gamma
        jnp.zeros((L, D_MODEL), jnp.float32),  # norm2 beta
        w((D_MODEL, 128)),                  # main head linear1
        w((1, 128)),
        w((128, 5)),                        # main head linear2
        w((1, 5)),
        w((D_MODEL, 64)),                   # lucky head linear1
        w((1, 64)),
        w((64, 1)),                         # lucky head linear2
        w((1, 1)),
    )
    return params


def reference_forward(x, params):
    """Pure-JAX reference mirroring the PyTorch forward (eval mode)."""
    (emb_w, emb_b, ipw, ipb, ow, ob, f1w, f1b, f2w, f2b,
     g1, b1, g2, b2, mw1, mb1, mw2, mb2, lw1, lb1, lw2, lb2) = params

    def ln(v, g, b):
        mu = v.mean(-1, keepdims=True)
        var = ((v - mu) ** 2).mean(-1, keepdims=True)
        return (v - mu) / jnp.sqrt(var + LN_EPS) * g + b

    h = x @ emb_w + emb_b
    for l in range(NUM_LAYERS):
        qkv = h @ ipw[l] + ipb[l]
        v = qkv[:, 2 * D_MODEL:]            # softmax over a single key == 1
        attn = v @ ow[l] + ob[l]
        h = ln(h + attn, g1[l], b1[l])
        ff = jnp.maximum(h @ f1w[l] + f1b[l], 0.0) @ f2w[l] + f2b[l]
        h = ln(h + ff, g2[l], b2[l])
    main = jnp.maximum(h @ mw1 + mb1, 0.0) @ mw2 + mb2
    lucky = jnp.maximum(h @ lw1 + lb1, 0.0) @ lw2 + lb2
    return main, lucky


if __name__ == "__main__":
    INPUT_DIM = 10
    N_ROWS = 12            # deliberately not a multiple of 8: exercises row padding

    key = jax.random.PRNGKey(0)
    kx, kp = jax.random.split(key)
    x = jax.random.normal(kx, (N_ROWS, INPUT_DIM), dtype=jnp.float32)
    params = init_params(kp, INPUT_DIM)

    # TODO(synk): dropout layers are treated as identity (inference semantics).
    fwd = jax.jit(lottery_transformer, static_argnames="tm")

    main, lucky = jax.block_until_ready(fwd(x, params))           # single-tile path
    main2, lucky2 = jax.block_until_ready(fwd(x, params, tm=8))   # multi-step grid path

    ref_main, ref_lucky = reference_forward(x, params)
    assert main.shape == (N_ROWS, 5) and lucky.shape == (N_ROWS, 1)
    assert jnp.allclose(main, ref_main, atol=2e-2, rtol=2e-2)
    assert jnp.allclose(lucky, ref_lucky, atol=2e-2, rtol=2e-2)
    assert jnp.allclose(main2, ref_main, atol=2e-2, rtol=2e-2)
    assert jnp.allclose(lucky2, ref_lucky, atol=2e-2, rtol=2e-2)

    print("KERNEL_OK")
</pallas_src>

<mosaic_0001>
module attributes {stable_mosaic.version = 11 : i64} {
  func.func @_lottery_kernel(%arg0: i32, %arg1: memref<16x10xf32, #tpu.memory_space<vmem>>, %arg2: memref<10x64xbf16, #tpu.memory_space<vmem>>, %arg3: memref<1x64xf32, #tpu.memory_space<vmem>>, %arg4: memref<2x64x64xbf16, #tpu.memory_space<vmem>>, %arg5: memref<2x64xf32, #tpu.memory_space<vmem>>, %arg6: memref<2x64x64xbf16, #tpu.memory_space<vmem>>, %arg7: memref<2x64xf32, #tpu.memory_space<vmem>>, %arg8: memref<2x64x2048xbf16, #tpu.memory_space<vmem>>, %arg9: memref<2x2048xf32, #tpu.memory_space<vmem>>, %arg10: memref<2x2048x64xbf16, #tpu.memory_space<vmem>>, %arg11: memref<2x64xf32, #tpu.memory_space<vmem>>, %arg12: memref<2x64xf32, #tpu.memory_space<vmem>>, %arg13: memref<2x64xf32, #tpu.memory_space<vmem>>, %arg14: memref<2x64xf32, #tpu.memory_space<vmem>>, %arg15: memref<2x64xf32, #tpu.memory_space<vmem>>, %arg16: memref<64x128xbf16, #tpu.memory_space<vmem>>, %arg17: memref<1x128xf32, #tpu.memory_space<vmem>>, %arg18: memref<128x128xbf16, #tpu.memory_space<vmem>>, %arg19: memref<1x128xf32, #tpu.memory_space<vmem>>, %arg20: memref<64x64xbf16, #tpu.memory_space<vmem>>, %arg21: memref<1x64xf32, #tpu.memory_space<vmem>>, %arg22: memref<64x128xbf16, #tpu.memory_space<vmem>>, %arg23: memref<1x128xf32, #tpu.memory_space<vmem>>, %arg24: memref<16x128xf32, #tpu.memory_space<vmem>>) attributes {dimension_semantics = [#tpu.dimension_semantics<parallel>], iteration_bounds = array<i64: 1>, scalar_prefetch = 0 : i64, scratch_operands = 0 : i64, tpu.core_type = #tpu.core_type<tc>, window_params = [{transform_indices = @transform_0, window_bounds = array<i64: 16, 10>}, {pipeline_mode = #tpu.pipeline_mode<synchronous>, transform_indices = @transform_1, window_bounds = array<i64: 10, 64>}, {pipeline_mode = #tpu.pipeline_mode<synchronous>, transform_indices = @transform_2, window_bounds = array<i64: 1, 64>}, {pipeline_mode = #tpu.pipeline_mode<synchronous>, transform_indices = @transform_3, window_bounds = array<i64: 2, 64, 64>}, {pipeline_mode = #tpu.pipeline_mode<synchronous>, transform_indices = @transform_4, window_bounds = array<i64: 2, 64>}, {pipeline_mode = #tpu.pipeline_mode<synchronous>, transform_indices = @transform_5, window_bounds = array<i64: 2, 64, 64>}, {pipeline_mode = #tpu.pipeline_mode<synchronous>, transform_indices = @transform_6, window_bounds = array<i64: 2, 64>}, {pipeline_mode = #tpu.pipeline_mode<synchronous>, transform_indices = @transform_7, window_bounds = array<i64: 2, 64, 2048>}, {pipeline_mode = #tpu.pipeline_mode<synchronous>, transform_indices = @transform_8, window_bounds = array<i64: 2, 2048>}, {pipeline_mode = #tpu.pipeline_mode<synchronous>, transform_indices = @transform_9, window_bounds = array<i64: 2, 2048, 64>}, {pipeline_mode = #tpu.pipeline_mode<synchronous>, transform_indices = @transform_10, window_bounds = array<i64: 2, 64>}, {pipeline_mode = #tpu.pipeline_mode<synchronous>, transform_indices = @transform_11, window_bounds = array<i64: 2, 64>}, {pipeline_mode = #tpu.pipeline_mode<synchronous>, transform_indices = @transform_12, window_bounds = array<i64: 2, 64>}, {pipeline_mode = #tpu.pipeline_mode<synchronous>, transform_indices = @transform_13, window_bounds = array<i64: 2, 64>}, {pipeline_mode = #tpu.pipeline_mode<synchronous>, transform_indices = @transform_14, window_bounds = array<i64: 2, 64>}, {pipeline_mode = #tpu.pipeline_mode<synchronous>, transform_indices = @transform_15, window_bounds = array<i64: 64, 128>}, {pipeline_mode = #tpu.pipeline_mode<synchronous>, transform_indices = @transform_16, window_bounds = array<i64: 1, 128>}, {pipeline_mode = #tpu.pipeline_mode<synchronous>, transform_indices = @transform_17, window_bounds = array<i64: 128, 128>}, {pipeline_mode = #tpu.pipeline_mode<synchronous>, transform_indices = @transform_18, window_bounds = array<i64: 1, 128>}, {pipeline_mode = #tpu.pipeline_mode<synchronous>, transform_indices = @transform_19, window_bounds = array<i64: 64, 64>}, {pipeline_mode = #tpu.pipeline_mode<synchronous>, transform_indices = @transform_20, window_bounds = array<i64: 1, 64>}, {pipeline_mode = #tpu.pipeline_mode<synchronous>, transform_indices = @transform_21, window_bounds = array<i64: 64, 128>}, {pipeline_mode = #tpu.pipeline_mode<synchronous>, transform_indices = @transform_22, window_bounds = array<i64: 1, 128>}, {transform_indices = @transform_23, window_bounds = array<i64: 16, 128>}]} {
    %c0 = arith.constant 0 : index
    %c0_0 = arith.constant 0 : index
    %0 = vector.load %arg1[%c0, %c0_0] : memref<16x10xf32, #tpu.memory_space<vmem>>, vector<16x10xf32>
    %1 = arith.truncf %0 : vector<16x10xf32> to vector<16x10xbf16>
    %c0_1 = arith.constant 0 : index
    %c0_2 = arith.constant 0 : index
    %2 = vector.load %arg2[%c0_1, %c0_2] : memref<10x64xbf16, #tpu.memory_space<vmem>>, vector<10x64xbf16>
    %cst = arith.constant dense<0.000000e+00> : vector<16x64xf32>
    %3 = tpu.matmul %1, %2, %cst {dimension_numbers = #tpu.dot_dimension_numbers<[1], [0], [0], [1], [0, 0, 1, 1], [], []>} : vector<16x10xbf16>, vector<10x64xbf16>, vector<16x64xf32> -> vector<16x64xf32>
    %c0_3 = arith.constant 0 : index
    %c0_4 = arith.constant 0 : index
    %4 = vector.load %arg3[%c0_3, %c0_4] : memref<1x64xf32, #tpu.memory_space<vmem>>, vector<1x64xf32>
    %5 = vector.broadcast %4 : vector<1x64xf32> to vector<16x64xf32>
    %6 = arith.addf %3, %5 : vector<16x64xf32>
    %7 = arith.truncf %6 : vector<16x64xf32> to vector<16x64xbf16>
    %c0_5 = arith.constant 0 : index
    %c0_6 = arith.constant 0 : index
    %c0_7 = arith.constant 0 : index
    %8 = vector.load %arg4[%c0_5, %c0_6, %c0_7] : memref<2x64x64xbf16, #tpu.memory_space<vmem>>, vector<1x64x64xbf16>
    %9 = vector.shape_cast %8 : vector<1x64x64xbf16> to vector<64x64xbf16>
    %cst_8 = arith.constant dense<0.000000e+00> : vector<16x64xf32>
    %10 = tpu.matmul %7, %9, %cst_8 {dimension_numbers = #tpu.dot_dimension_numbers<[1], [0], [0], [1], [0, 0, 1, 1], [], []>} : vector<16x64xbf16>, vector<64x64xbf16>, vector<16x64xf32> -> vector<16x64xf32>
    %c0_9 = arith.constant 0 : index
    %c0_10 = arith.constant 0 : index
    %11 = vector.load %arg5[%c0_9, %c0_10] : memref<2x64xf32, #tpu.memory_space<vmem>>, vector<1x64xf32>
    %12 = vector.broadcast %11 : vector<1x64xf32> to vector<16x64xf32>
    %13 = arith.addf %10, %12 : vector<16x64xf32>
    %14 = arith.truncf %13 : vector<16x64xf32> to vector<16x64xbf16>
    %c0_11 = arith.constant 0 : index
    %c0_12 = arith.constant 0 : index
    %c0_13 = arith.constant 0 : index
    %15 = vector.load %arg6[%c0_11, %c0_12, %c0_13] : memref<2x64x64xbf16, #tpu.memory_space<vmem>>, vector<1x64x64xbf16>
    %16 = vector.shape_cast %15 : vector<1x64x64xbf16> to vector<64x64xbf16>
    %cst_14 = arith.constant dense<0.000000e+00> : vector<16x64xf32>
    %17 = tpu.matmul %14, %16, %cst_14 {dimension_numbers = #tpu.dot_dimension_numbers<[1], [0], [0], [1], [0, 0, 1, 1], [], []>} : vector<16x64xbf16>, vector<64x64xbf16>, vector<16x64xf32> -> vector<16x64xf32>
    %c0_15 = arith.constant 0 : index
    %c0_16 = arith.constant 0 : index
    %18 = vector.load %arg7[%c0_15, %c0_16] : memref<2x64xf32, #tpu.memory_space<vmem>>, vector<1x64xf32>
    %19 = vector.broadcast %18 : vector<1x64xf32> to vector<16x64xf32>
    %20 = arith.addf %17, %19 : vector<16x64xf32>
    %21 = arith.addf %6, %20 : vector<16x64xf32>
    %c0_17 = arith.constant 0 : index
    %c0_18 = arith.constant 0 : index
    %22 = vector.load %arg12[%c0_17, %c0_18] : memref<2x64xf32, #tpu.memory_space<vmem>>, vector<1x64xf32>
    %c0_19 = arith.constant 0 : index
    %c0_20 = arith.constant 0 : index
    %23 = vector.load %arg13[%c0_19, %c0_20] : memref<2x64xf32, #tpu.memory_space<vmem>>, vector<1x64xf32>
    %cst_21 = arith.constant dense<0.000000e+00> : vector<16xf32>
    %24 = vector.multi_reduction <add>, %21, %cst_21 [1] : vector<16x64xf32> to vector<16xf32>
    %25 = vector.shape_cast %24 : vector<16xf32> to vector<16x1xf32>
    %cst_22 = arith.constant 6.400000e+01 : f32
    %26 = vector.broadcast %cst_22 : f32 to vector<16x1xf32>
    %27 = arith.divf %25, %26 : vector<16x1xf32>
    %28 = vector.broadcast %27 : vector<16x1xf32> to vector<16x64xf32>
    %29 = arith.subf %21, %28 : vector<16x64xf32>
    %30 = arith.mulf %29, %29 : vector<16x64xf32>
    %cst_23 = arith.constant dense<0.000000e+00> : vector<16xf32>
    %31 = vector.multi_reduction <add>, %30, %cst_23 [1] : vector<16x64xf32> to vector<16xf32>
    %32 = vector.shape_cast %31 : vector<16xf32> to vector<16x1xf32>
    %cst_24 = arith.constant 6.400000e+01 : f32
    %33 = vector.broadcast %cst_24 : f32 to vector<16x1xf32>
    %34 = arith.divf %32, %33 : vector<16x1xf32>
    %cst_25 = arith.constant 9.99999974E-6 : f32
    %35 = vector.broadcast %cst_25 : f32 to vector<16x1xf32>
    %36 = arith.addf %34, %35 : vector<16x1xf32>
    %37 = math.rsqrt %36 : vector<16x1xf32>
    %38 = vector.broadcast %37 : vector<16x1xf32> to vector<16x64xf32>
    %39 = arith.mulf %29, %38 : vector<16x64xf32>
    %40 = vector.broadcast %22 : vector<1x64xf32> to vector<16x64xf32>
    %41 = arith.mulf %39, %40 : vector<16x64xf32>
    %42 = vector.broadcast %23 : vector<1x64xf32> to vector<16x64xf32>
    %43 = arith.addf %41, %42 : vector<16x64xf32>
    %44 = arith.truncf %43 : vector<16x64xf32> to vector<16x64xbf16>
    %c0_26 = arith.constant 0 : index
    %c0_27 = arith.constant 0 : index
    %c0_28 = arith.constant 0 : index
    %45 = vector.load %arg8[%c0_26, %c0_27, %c0_28] : memref<2x64x2048xbf16, #tpu.memory_space<vmem>>, vector<1x64x2048xbf16>
    %46 = vector.shape_cast %45 : vector<1x64x2048xbf16> to vector<64x2048xbf16>
    %cst_29 = arith.constant dense<0.000000e+00> : vector<16x2048xf32>
    %47 = tpu.matmul %44, %46, %cst_29 {dimension_numbers = #tpu.dot_dimension_numbers<[1], [0], [0], [1], [0, 0, 1, 1], [], []>} : vector<16x64xbf16>, vector<64x2048xbf16>, vector<16x2048xf32> -> vector<16x2048xf32>
    %c0_30 = arith.constant 0 : index
    %c0_31 = arith.constant 0 : index
    %48 = vector.load %arg9[%c0_30, %c0_31] : memref<2x2048xf32, #tpu.memory_space<vmem>>, vector<1x2048xf32>
    %49 = vector.broadcast %48 : vector<1x2048xf32> to vector<16x2048xf32>
    %50 = arith.addf %47, %49 : vector<16x2048xf32>
    %cst_32 = arith.constant 0.000000e+00 : f32
    %51 = vector.broadcast %cst_32 : f32 to vector<16x2048xf32>
    %52 = arith.maximumf %50, %51 : vector<16x2048xf32>
    %53 = arith.truncf %52 : vector<16x2048xf32> to vector<16x2048xbf16>
    %c0_33 = arith.constant 0 : index
    %c0_34 = arith.constant 0 : index
    %c0_35 = arith.constant 0 : index
    %54 = vector.load %arg10[%c0_33, %c0_34, %c0_35] : memref<2x2048x64xbf16, #tpu.memory_space<vmem>>, vector<1x2048x64xbf16>
    %55 = vector.shape_cast %54 : vector<1x2048x64xbf16> to vector<2048x64xbf16>
    %cst_36 = arith.constant dense<0.000000e+00> : vector<16x64xf32>
    %56 = tpu.matmul %53, %55, %cst_36 {dimension_numbers = #tpu.dot_dimension_numbers<[1], [0], [0], [1], [0, 0, 1, 1], [], []>} : vector<16x2048xbf16>, vector<2048x64xbf16>, vector<16x64xf32> -> vector<16x64xf32>
    %c0_37 = arith.constant 0 : index
    %c0_38 = arith.constant 0 : index
    %57 = vector.load %arg11[%c0_37, %c0_38] : memref<2x64xf32, #tpu.memory_space<vmem>>, vector<1x64xf32>
    %58 = vector.broadcast %57 : vector<1x64xf32> to vector<16x64xf32>
    %59 = arith.addf %56, %58 : vector<16x64xf32>
    %60 = arith.addf %43, %59 : vector<16x64xf32>
    %c0_39 = arith.constant 0 : index
    %c0_40 = arith.constant 0 : index
    %61 = vector.load %arg14[%c0_39, %c0_40] : memref<2x64xf32, #tpu.memory_space<vmem>>, vector<1x64xf32>
    %c0_41 = arith.constant 0 : index
    %c0_42 = arith.constant 0 : index
    %62 = vector.load %arg15[%c0_41, %c0_42] : memref<2x64xf32, #tpu.memory_space<vmem>>, vector<1x64xf32>
    %cst_43 = arith.constant dense<0.000000e+00> : vector<16xf32>
    %63 = vector.multi_reduction <add>, %60, %cst_43 [1] : vector<16x64xf32> to vector<16xf32>
    %64 = vector.shape_cast %63 : vector<16xf32> to vector<16x1xf32>
    %cst_44 = arith.constant 6.400000e+01 : f32
    %65 = vector.broadcast %cst_44 : f32 to vector<16x1xf32>
    %66 = arith.divf %64, %65 : vector<16x1xf32>
    %67 = vector.broadcast %66 : vector<16x1xf32> to vector<16x64xf32>
    %68 = arith.subf %60, %67 : vector<16x64xf32>
    %69 = arith.mulf %68, %68 : vector<16x64xf32>
    %cst_45 = arith.constant dense<0.000000e+00> : vector<16xf32>
    %70 = vector.multi_reduction <add>, %69, %cst_45 [1] : vector<16x64xf32> to vector<16xf32>
    %71 = vector.shape_cast %70 : vector<16xf32> to vector<16x1xf32>
    %cst_46 = arith.constant 6.400000e+01 : f32
    %72 = vector.broadcast %cst_46 : f32 to vector<16x1xf32>
    %73 = arith.divf %71, %72 : vector<16x1xf32>
    %cst_47 = arith.constant 9.99999974E-6 : f32
    %74 = vector.broadcast %cst_47 : f32 to vector<16x1xf32>
    %75 = arith.addf %73, %74 : vector<16x1xf32>
    %76 = math.rsqrt %75 : vector<16x1xf32>
    %77 = vector.broadcast %76 : vector<16x1xf32> to vector<16x64xf32>
    %78 = arith.mulf %68, %77 : vector<16x64xf32>
    %79 = vector.broadcast %61 : vector<1x64xf32> to vector<16x64xf32>
    %80 = arith.mulf %78, %79 : vector<16x64xf32>
    %81 = vector.broadcast %62 : vector<1x64xf32> to vector<16x64xf32>
    %82 = arith.addf %80, %81 : vector<16x64xf32>
    %83 = arith.truncf %82 : vector<16x64xf32> to vector<16x64xbf16>
    %c1 = arith.constant 1 : index
    %c0_48 = arith.constant 0 : index
    %c0_49 = arith.constant 0 : index
    %84 = vector.load %arg4[%c1, %c0_48, %c0_49] : memref<2x64x64xbf16, #tpu.memory_space<vmem>>, vector<1x64x64xbf16>
    %85 = vector.shape_cast %84 : vector<1x64x64xbf16> to vector<64x64xbf16>
    %cst_50 = arith.constant dense<0.000000e+00> : vector<16x64xf32>
    %86 = tpu.matmul %83, %85, %cst_50 {dimension_numbers = #tpu.dot_dimension_numbers<[1], [0], [0], [1], [0, 0, 1, 1], [], []>} : vector<16x64xbf16>, vector<64x64xbf16>, vector<16x64xf32> -> vector<16x64xf32>
    %c1_51 = arith.constant 1 : index
    %c0_52 = arith.constant 0 : index
    %87 = vector.load %arg5[%c1_51, %c0_52] : memref<2x64xf32, #tpu.memory_space<vmem>>, vector<1x64xf32>
    %88 = vector.broadcast %87 : vector<1x64xf32> to vector<16x64xf32>
    %89 = arith.addf %86, %88 : vector<16x64xf32>
    %90 = arith.truncf %89 : vector<16x64xf32> to vector<16x64xbf16>
    %c1_53 = arith.constant 1 : index
    %c0_54 = arith.constant 0 : index
    %c0_55 = arith.constant 0 : index
    %91 = vector.load %arg6[%c1_53, %c0_54, %c0_55] : memref<2x64x64xbf16, #tpu.memory_space<vmem>>, vector<1x64x64xbf16>
    %92 = vector.shape_cast %91 : vector<1x64x64xbf16> to vector<64x64xbf16>
    %cst_56 = arith.constant dense<0.000000e+00> : vector<16x64xf32>
    %93 = tpu.matmul %90, %92, %cst_56 {dimension_numbers = #tpu.dot_dimension_numbers<[1], [0], [0], [1], [0, 0, 1, 1], [], []>} : vector<16x64xbf16>, vector<64x64xbf16>, vector<16x64xf32> -> vector<16x64xf32>
    %c1_57 = arith.constant 1 : index
    %c0_58 = arith.constant 0 : index
    %94 = vector.load %arg7[%c1_57, %c0_58] : memref<2x64xf32, #tpu.memory_space<vmem>>, vector<1x64xf32>
    %95 = vector.broadcast %94 : vector<1x64xf32> to vector<16x64xf32>
    %96 = arith.addf %93, %95 : vector<16x64xf32>
    %97 = arith.addf %82, %96 : vector<16x64xf32>
    %c1_59 = arith.constant 1 : index
    %c0_60 = arith.constant 0 : index
    %98 = vector.load %arg12[%c1_59, %c0_60] : memref<2x64xf32, #tpu.memory_space<vmem>>, vector<1x64xf32>
    %c1_61 = arith.constant 1 : index
    %c0_62 = arith.constant 0 : index
    %99 = vector.load %arg13[%c1_61, %c0_62] : memref<2x64xf32, #tpu.memory_space<vmem>>, vector<1x64xf32>
    %cst_63 = arith.constant dense<0.000000e+00> : vector<16xf32>
    %100 = vector.multi_reduction <add>, %97, %cst_63 [1] : vector<16x64xf32> to vector<16xf32>
    %101 = vector.shape_cast %100 : vector<16xf32> to vector<16x1xf32>
    %cst_64 = arith.constant 6.400000e+01 : f32
    %102 = vector.broadcast %cst_64 : f32 to vector<16x1xf32>
    %103 = arith.divf %101, %102 : vector<16x1xf32>
    %104 = vector.broadcast %103 : vector<16x1xf32> to vector<16x64xf32>
    %105 = arith.subf %97, %104 : vector<16x64xf32>
    %106 = arith.mulf %105, %105 : vector<16x64xf32>
    %cst_65 = arith.constant dense<0.000000e+00> : vector<16xf32>
    %107 = vector.multi_reduction <add>, %106, %cst_65 [1] : vector<16x64xf32> to vector<16xf32>
    %108 = vector.shape_cast %107 : vector<16xf32> to vector<16x1xf32>
    %cst_66 = arith.constant 6.400000e+01 : f32
    %109 = vector.broadcast %cst_66 : f32 to vector<16x1xf32>
    %110 = arith.divf %108, %109 : vector<16x1xf32>
    %cst_67 = arith.constant 9.99999974E-6 : f32
    %111 = vector.broadcast %cst_67 : f32 to vector<16x1xf32>
    %112 = arith.addf %110, %111 : vector<16x1xf32>
    %113 = math.rsqrt %112 : vector<16x1xf32>
    %114 = vector.broadcast %113 : vector<16x1xf32> to vector<16x64xf32>
    %115 = arith.mulf %105, %114 : vector<16x64xf32>
    %116 = vector.broadcast %98 : vector<1x64xf32> to vector<16x64xf32>
    %117 = arith.mulf %115, %116 : vector<16x64xf32>
    %118 = vector.broadcast %99 : vector<1x64xf32> to vector<16x64xf32>
    %119 = arith.addf %117, %118 : vector<16x64xf32>
    %120 = arith.truncf %119 : vector<16x64xf32> to vector<16x64xbf16>
    %c1_68 = arith.constant 1 : index
    %c0_69 = arith.constant 0 : index
    %c0_70 = arith.constant 0 : index
    %121 = vector.load %arg8[%c1_68, %c0_69, %c0_70] : memref<2x64x2048xbf16, #tpu.memory_space<vmem>>, vector<1x64x2048xbf16>
    %122 = vector.shape_cast %121 : vector<1x64x2048xbf16> to vector<64x2048xbf16>
    %cst_71 = arith.constant dense<0.000000e+00> : vector<16x2048xf32>
    %123 = tpu.matmul %120, %122, %cst_71 {dimension_numbers = #tpu.dot_dimension_numbers<[1], [0], [0], [1], [0, 0, 1, 1], [], []>} : vector<16x64xbf16>, vector<64x2048xbf16>, vector<16x2048xf32> -> vector<16x2048xf32>
    %c1_72 = arith.constant 1 : index
    %c0_73 = arith.constant 0 : index
    %124 = vector.load %arg9[%c1_72, %c0_73] : memref<2x2048xf32, #tpu.memory_space<vmem>>, vector<1x2048xf32>
    %125 = vector.broadcast %124 : vector<1x2048xf32> to vector<16x2048xf32>
    %126 = arith.addf %123, %125 : vector<16x2048xf32>
    %cst_74 = arith.constant 0.000000e+00 : f32
    %127 = vector.broadcast %cst_74 : f32 to vector<16x2048xf32>
    %128 = arith.maximumf %126, %127 : vector<16x2048xf32>
    %129 = arith.truncf %128 : vector<16x2048xf32> to vector<16x2048xbf16>
    %c1_75 = arith.constant 1 : index
    %c0_76 = arith.constant 0 : index
    %c0_77 = arith.constant 0 : index
    %130 = vector.load %arg10[%c1_75, %c0_76, %c0_77] : memref<2x2048x64xbf16, #tpu.memory_space<vmem>>, vector<1x2048x64xbf16>
    %131 = vector.shape_cast %130 : vector<1x2048x64xbf16> to vector<2048x64xbf16>
    %cst_78 = arith.constant dense<0.000000e+00> : vector<16x64xf32>
    %132 = tpu.matmul %129, %131, %cst_78 {dimension_numbers = #tpu.dot_dimension_numbers<[1], [0], [0], [1], [0, 0, 1, 1], [], []>} : vector<16x2048xbf16>, vector<2048x64xbf16>, vector<16x64xf32> -> vector<16x64xf32>
    %c1_79 = arith.constant 1 : index
    %c0_80 = arith.constant 0 : index
    %133 = vector.load %arg11[%c1_79, %c0_80] : memref<2x64xf32, #tpu.memory_space<vmem>>, vector<1x64xf32>
    %134 = vector.broadcast %133 : vector<1x64xf32> to vector<16x64xf32>
    %135 = arith.addf %132, %134 : vector<16x64xf32>
    %136 = arith.addf %119, %135 : vector<16x64xf32>
    %c1_81 = arith.constant 1 : index
    %c0_82 = arith.constant 0 : index
    %137 = vector.load %arg14[%c1_81, %c0_82] : memref<2x64xf32, #tpu.memory_space<vmem>>, vector<1x64xf32>
    %c1_83 = arith.constant 1 : index
    %c0_84 = arith.constant 0 : index
    %138 = vector.load %arg15[%c1_83, %c0_84] : memref<2x64xf32, #tpu.memory_space<vmem>>, vector<1x64xf32>
    %cst_85 = arith.constant dense<0.000000e+00> : vector<16xf32>
    %139 = vector.multi_reduction <add>, %136, %cst_85 [1] : vector<16x64xf32> to vector<16xf32>
    %140 = vector.shape_cast %139 : vector<16xf32> to vector<16x1xf32>
    %cst_86 = arith.constant 6.400000e+01 : f32
    %141 = vector.broadcast %cst_86 : f32 to vector<16x1xf32>
    %142 = arith.divf %140, %141 : vector<16x1xf32>
    %143 = vector.broadcast %142 : vector<16x1xf32> to vector<16x64xf32>
    %144 = arith.subf %136, %143 : vector<16x64xf32>
    %145 = arith.mulf %144, %144 : vector<16x64xf32>
    %cst_87 = arith.constant dense<0.000000e+00> : vector<16xf32>
    %146 = vector.multi_reduction <add>, %145, %cst_87 [1] : vector<16x64xf32> to vector<16xf32>
    %147 = vector.shape_cast %146 : vector<16xf32> to vector<16x1xf32>
    %cst_88 = arith.constant 6.400000e+01 : f32
    %148 = vector.broadcast %cst_88 : f32 to vector<16x1xf32>
    %149 = arith.divf %147, %148 : vector<16x1xf32>
    %cst_89 = arith.constant 9.99999974E-6 : f32
    %150 = vector.broadcast %cst_89 : f32 to vector<16x1xf32>
    %151 = arith.addf %149, %150 : vector<16x1xf32>
    %152 = math.rsqrt %151 : vector<16x1xf32>
    %153 = vector.broadcast %152 : vector<16x1xf32> to vector<16x64xf32>
    %154 = arith.mulf %144, %153 : vector<16x64xf32>
    %155 = vector.broadcast %137 : vector<1x64xf32> to vector<16x64xf32>
    %156 = arith.mulf %154, %155 : vector<16x64xf32>
    %157 = vector.broadcast %138 : vector<1x64xf32> to vector<16x64xf32>
    %158 = arith.addf %156, %157 : vector<16x64xf32>
    %159 = arith.truncf %158 : vector<16x64xf32> to vector<16x64xbf16>
    %c0_90 = arith.constant 0 : index
    %c0_91 = arith.constant 0 : index
    %160 = vector.load %arg16[%c0_90, %c0_91] : memref<64x128xbf16, #tpu.memory_space<vmem>>, vector<64x128xbf16>
    %cst_92 = arith.constant dense<0.000000e+00> : vector<16x128xf32>
    %161 = tpu.matmul %159, %160, %cst_92 {dimension_numbers = #tpu.dot_dimension_numbers<[1], [0], [0], [1], [0, 0, 1, 1], [], []>} : vector<16x64xbf16>, vector<64x128xbf16>, vector<16x128xf32> -> vector<16x128xf32>
    %c0_93 = arith.constant 0 : index
    %c0_94 = arith.constant 0 : index
    %162 = vector.load %arg17[%c0_93, %c0_94] : memref<1x128xf32, #tpu.memory_space<vmem>>, vector<1x128xf32>
    %163 = vector.broadcast %162 : vector<1x128xf32> to vector<16x128xf32>
    %164 = arith.addf %161, %163 : vector<16x128xf32>
    %cst_95 = arith.constant 0.000000e+00 : f32
    %165 = vector.broadcast %cst_95 : f32 to vector<16x128xf32>
    %166 = arith.maximumf %164, %165 : vector<16x128xf32>
    %167 = arith.truncf %166 : vector<16x128xf32> to vector<16x128xbf16>
    %c0_96 = arith.constant 0 : index
    %c0_97 = arith.constant 0 : index
    %168 = vector.load %arg18[%c0_96, %c0_97] : memref<128x128xbf16, #tpu.memory_space<vmem>>, vector<128x128xbf16>
    %cst_98 = arith.constant dense<0.000000e+00> : vector<16x128xf32>
    %169 = tpu.matmul %167, %168, %cst_98 {dimension_numbers = #tpu.dot_dimension_numbers<[1], [0], [0], [1], [0, 0, 1, 1], [], []>} : vector<16x128xbf16>, vector<128x128xbf16>, vector<16x128xf32> -> vector<16x128xf32>
    %c0_99 = arith.constant 0 : index
    %c0_100 = arith.constant 0 : index
    %170 = vector.load %arg19[%c0_99, %c0_100] : memref<1x128xf32, #tpu.memory_space<vmem>>, vector<1x128xf32>
    %171 = vector.broadcast %170 : vector<1x128xf32> to vector<16x128xf32>
    %172 = arith.addf %169, %171 : vector<16x128xf32>
    %c0_101 = arith.constant 0 : index
    %c0_102 = arith.constant 0 : index
    %173 = vector.load %arg20[%c0_101, %c0_102] : memref<64x64xbf16, #tpu.memory_space<vmem>>, vector<64x64xbf16>
    %cst_103 = arith.constant dense<0.000000e+00> : vector<16x64xf32>
    %174 = tpu.matmul %159, %173, %cst_103 {dimension_numbers = #tpu.dot_dimension_numbers<[1], [0], [0], [1], [0, 0, 1, 1], [], []>} : vector<16x64xbf16>, vector<64x64xbf16>, vector<16x64xf32> -> vector<16x64xf32>
    %c0_104 = arith.constant 0 : index
    %c0_105 = arith.constant 0 : index
    %175 = vector.load %arg21[%c0_104, %c0_105] : memref<1x64xf32, #tpu.memory_space<vmem>>, vector<1x64xf32>
    %176 = vector.broadcast %175 : vector<1x64xf32> to vector<16x64xf32>
    %177 = arith.addf %174, %176 : vector<16x64xf32>
    %cst_106 = arith.constant 0.000000e+00 : f32
    %178 = vector.broadcast %cst_106 : f32 to vector<16x64xf32>
    %179 = arith.maximumf %177, %178 : vector<16x64xf32>
    %180 = arith.truncf %179 : vector<16x64xf32> to vector<16x64xbf16>
    %c0_107 = arith.constant 0 : index
    %c0_108 = arith.constant 0 : index
    %181 = vector.load %arg22[%c0_107, %c0_108] : memref<64x128xbf16, #tpu.memory_space<vmem>>, vector<64x128xbf16>
    %cst_109 = arith.constant dense<0.000000e+00> : vector<16x128xf32>
    %182 = tpu.matmul %180, %181, %cst_109 {dimension_numbers = #tpu.dot_dimension_numbers<[1], [0], [0], [1], [0, 0, 1, 1], [], []>} : vector<16x64xbf16>, vector<64x128xbf16>, vector<16x128xf32> -> vector<16x128xf32>
    %c0_110 = arith.constant 0 : index
    %c0_111 = arith.constant 0 : index
    %183 = vector.load %arg23[%c0_110, %c0_111] : memref<1x128xf32, #tpu.memory_space<vmem>>, vector<1x128xf32>
    %184 = vector.broadcast %183 : vector<1x128xf32> to vector<16x128xf32>
    %185 = arith.addf %182, %184 : vector<16x128xf32>
    %186 = arith.addf %172, %185 : vector<16x128xf32>
    %c0_112 = arith.constant 0 : index
    %c0_113 = arith.constant 0 : index
    %187 = vector.load %arg24[%c0_112, %c0_113] : memref<16x128xf32, #tpu.memory_space<vmem>>, vector<16x128xf32>
    tpu.vector_store %arg24[%c0_112, %c0_113], %186 {strides = array<i32>} : memref<16x128xf32, #tpu.memory_space<vmem>>, vector<16x128xf32>,
    return
  }
  func.func @transform_0(%arg0: i32) -> (i32, i32) {
    %c0_i32 = arith.constant 0 : i32
    %c0_i32_0 = arith.constant 0 : i32
    return %arg0, %c0_i32 : i32, i32
  }
  func.func @transform_1(%arg0: i32) -> (i32, i32) {
    %c0_i32 = arith.constant 0 : i32
    %c0_i32_0 = arith.constant 0 : i32
    %c0_i32_1 = arith.constant 0 : i32
    return %c0_i32, %c0_i32_0 : i32, i32
  }
  func.func @transform_2(%arg0: i32) -> (i32, i32) {
    %c0_i32 = arith.constant 0 : i32
    %c0_i32_0 = arith.constant 0 : i32
    %c0_i32_1 = arith.constant 0 : i32
    return %c0_i32, %c0_i32_0 : i32, i32
  }
  func.func @transform_3(%arg0: i32) -> (i32, i32, i32) {
    %c0_i32 = arith.constant 0 : i32
    %c0_i32_0 = arith.constant 0 : i32
    %c0_i32_1 = arith.constant 0 : i32
    %c0_i32_2 = arith.constant 0 : i32
    return %c0_i32, %c0_i32_0, %c0_i32_1 : i32, i32, i32
  }
  func.func @transform_4(%arg0: i32) -> (i32, i32) {
    %c0_i32 = arith.constant 0 : i32
    %c0_i32_0 = arith.constant 0 : i32
    %c0_i32_1 = arith.constant 0 : i32
    return %c0_i32, %c0_i32_0 : i32, i32
  }
  func.func @transform_5(%arg0: i32) -> (i32, i32, i32) {
    %c0_i32 = arith.constant 0 : i32
    %c0_i32_0 = arith.constant 0 : i32
    %c0_i32_1 = arith.constant 0 : i32
    %c0_i32_2 = arith.constant 0 : i32
    return %c0_i32, %c0_i32_0, %c0_i32_1 : i32, i32, i32
  }
  func.func @transform_6(%arg0: i32) -> (i32, i32) {
    %c0_i32 = arith.constant 0 : i32
    %c0_i32_0 = arith.constant 0 : i32
    %c0_i32_1 = arith.constant 0 : i32
    return %c0_i32, %c0_i32_0 : i32, i32
  }
  func.func @transform_7(%arg0: i32) -> (i32, i32, i32) {
    %c0_i32 = arith.constant 0 : i32
    %c0_i32_0 = arith.constant 0 : i32
    %c0_i32_1 = arith.constant 0 : i32
    %c0_i32_2 = arith.constant 0 : i32
    return %c0_i32, %c0_i32_0, %c0_i32_1 : i32, i32, i32
  }
  func.func @transform_8(%arg0: i32) -> (i32, i32) {
    %c0_i32 = arith.constant 0 : i32
    %c0_i32_0 = arith.constant 0 : i32
    %c0_i32_1 = arith.constant 0 : i32
    return %c0_i32, %c0_i32_0 : i32, i32
  }
  func.func @transform_9(%arg0: i32) -> (i32, i32, i32) {
    %c0_i32 = arith.constant 0 : i32
    %c0_i32_0 = arith.constant 0 : i32
    %c0_i32_1 = arith.constant 0 : i32
    %c0_i32_2 = arith.constant 0 : i32
    return %c0_i32, %c0_i32_0, %c0_i32_1 : i32, i32, i32
  }
  func.func @transform_10(%arg0: i32) -> (i32, i32) {
    %c0_i32 = arith.constant 0 : i32
    %c0_i32_0 = arith.constant 0 : i32
    %c0_i32_1 = arith.constant 0 : i32
    return %c0_i32, %c0_i32_0 : i32, i32
  }
  func.func @transform_11(%arg0: i32) -> (i32, i32) {
    %c0_i32 = arith.constant 0 : i32
    %c0_i32_0 = arith.constant 0 : i32
    %c0_i32_1 = arith.constant 0 : i32
    return %c0_i32, %c0_i32_0 : i32, i32
  }
  func.func @transform_12(%arg0: i32) -> (i32, i32) {
    %c0_i32 = arith.constant 0 : i32
    %c0_i32_0 = arith.constant 0 : i32
    %c0_i32_1 = arith.constant 0 : i32
    return %c0_i32, %c0_i32_0 : i32, i32
  }
  func.func @transform_13(%arg0: i32) -> (i32, i32) {
    %c0_i32 = arith.constant 0 : i32
    %c0_i32_0 = arith.constant 0 : i32
    %c0_i32_1 = arith.constant 0 : i32
    return %c0_i32, %c0_i32_0 : i32, i32
  }
  func.func @transform_14(%arg0: i32) -> (i32, i32) {
    %c0_i32 = arith.constant 0 : i32
    %c0_i32_0 = arith.constant 0 : i32
    %c0_i32_1 = arith.constant 0 : i32
    return %c0_i32, %c0_i32_0 : i32, i32
  }
  func.func @transform_15(%arg0: i32) -> (i32, i32) {
    %c0_i32 = arith.constant 0 : i32
    %c0_i32_0 = arith.constant 0 : i32
    %c0_i32_1 = arith.constant 0 : i32
    return %c0_i32, %c0_i32_0 : i32, i32
  }
  func.func @transform_16(%arg0: i32) -> (i32, i32) {
    %c0_i32 = arith.constant 0 : i32
    %c0_i32_0 = arith.constant 0 : i32
    %c0_i32_1 = arith.constant 0 : i32
    return %c0_i32, %c0_i32_0 : i32, i32
  }
  func.func @transform_17(%arg0: i32) -> (i32, i32) {
    %c0_i32 = arith.constant 0 : i32
    %c0_i32_0 = arith.constant 0 : i32
    %c0_i32_1 = arith.constant 0 : i32
    return %c0_i32, %c0_i32_0 : i32, i32
  }
  func.func @transform_18(%arg0: i32) -> (i32, i32) {
    %c0_i32 = arith.constant 0 : i32
    %c0_i32_0 = arith.constant 0 : i32
    %c0_i32_1 = arith.constant 0 : i32
    return %c0_i32, %c0_i32_0 : i32, i32
  }
  func.func @transform_19(%arg0: i32) -> (i32, i32) {
    %c0_i32 = arith.constant 0 : i32
    %c0_i32_0 = arith.constant 0 : i32
    %c0_i32_1 = arith.constant 0 : i32
    return %c0_i32, %c0_i32_0 : i32, i32
  }
  func.func @transform_20(%arg0: i32) -> (i32, i32) {
    %c0_i32 = arith.constant 0 : i32
    %c0_i32_0 = arith.constant 0 : i32
    %c0_i32_1 = arith.constant 0 : i32
    return %c0_i32, %c0_i32_0 : i32, i32
  }
  func.func @transform_21(%arg0: i32) -> (i32, i32) {
    %c0_i32 = arith.constant 0 : i32
    %c0_i32_0 = arith.constant 0 : i32
    %c0_i32_1 = arith.constant 0 : i32
    return %c0_i32, %c0_i32_0 : i32, i32
  }
  func.func @transform_22(%arg0: i32) -> (i32, i32) {
    %c0_i32 = arith.constant 0 : i32
    %c0_i32_0 = arith.constant 0 : i32
    %c0_i32_1 = arith.constant 0 : i32
    return %c0_i32, %c0_i32_0 : i32, i32
  }
  func.func @transform_23(%arg0: i32) -> (i32, i32) {
    %c0_i32 = arith.constant 0 : i32
    %c0_i32_0 = arith.constant 0 : i32
    return %arg0, %c0_i32 : i32, i32
  }
}

</mosaic_0001>

<llo_original>
// kernel: lottery_transformer.1
$region0: #{lottery_transformer.1}
  #allocation0 [shape = 'u32[]', space=smem, size = 0x4, offset = 0x4, fixed_abs, tag = 'smem constant byte address 0x4 - core index']
  #allocation1 [shape = 'u32[144,128]{1,0:T(1,128)}', space=vmem, size = 0x12000, scoped, tag = 'internal scratch']
  %s0 = inlined_call_operand.vmem [shape: f32[16,10], index: 0, kind: input, shape index: {}]
  %s1 = inlined_call_operand.vmem [shape: bf16[10,64], index: 1, kind: input, shape index: {}]
  %s2 = inlined_call_operand.vmem [shape: f32[1,64], index: 2, kind: input, shape index: {}]
  %s3 = inlined_call_operand.vmem [shape: bf16[2,64,64], index: 3, kind: input, shape index: {}]
  %s4 = inlined_call_operand.vmem [shape: f32[2,64], index: 4, kind: input, shape index: {}]
  %s5 = inlined_call_operand.vmem [shape: bf16[2,64,64], index: 5, kind: input, shape index: {}]
  %s6 = inlined_call_operand.vmem [shape: f32[2,64], index: 6, kind: input, shape index: {}]
  %s7 = inlined_call_operand.vmem [shape: bf16[2,64,2048], index: 7, kind: input, shape index: {}]
  %s8 = inlined_call_operand.vmem [shape: f32[2,2048], index: 8, kind: input, shape index: {}]
  %s9 = inlined_call_operand.vmem [shape: bf16[2,2048,64], index: 9, kind: input, shape index: {}]
  %s10 = inlined_call_operand.vmem [shape: f32[2,64], index: 10, kind: input, shape index: {}]
  %s11 = inlined_call_operand.vmem [shape: f32[2,64], index: 11, kind: input, shape index: {}]
  %s12 = inlined_call_operand.vmem [shape: f32[2,64], index: 12, kind: input, shape index: {}]
  %s13 = inlined_call_operand.vmem [shape: f32[2,64], index: 13, kind: input, shape index: {}]
  %s14 = inlined_call_operand.vmem [shape: f32[2,64], index: 14, kind: input, shape index: {}]
  %s15 = inlined_call_operand.vmem [shape: bf16[64,128], index: 15, kind: input, shape index: {}]
  %s16 = inlined_call_operand.vmem [shape: f32[1,128], index: 16, kind: input, shape index: {}]
  %s17 = inlined_call_operand.vmem [shape: bf16[128,128], index: 17, kind: input, shape index: {}]
  %s18 = inlined_call_operand.vmem [shape: f32[1,128], index: 18, kind: input, shape index: {}]
  %s19 = inlined_call_operand.vmem [shape: bf16[64,64], index: 19, kind: input, shape index: {}]
  %s20 = inlined_call_operand.vmem [shape: f32[1,64], index: 20, kind: input, shape index: {}]
  %s21 = inlined_call_operand.vmem [shape: bf16[64,128], index: 21, kind: input, shape index: {}]
  %s22 = inlined_call_operand.vmem [shape: f32[1,128], index: 22, kind: input, shape index: {}]
  %s23 = inlined_call_operand.vmem [shape: f32[16,128], index: 23, kind: output, shape index: {}]
  %s24 = sld [smem:[#allocation0]]
  $region102: #{lottery_transformer.1} parent=0
    _
  %s26 = ssub.s32 1, %s24
  %s27 = scalar_select 0, %s26, %s24
  // Predicated region
  $region2: #{lottery_transformer.1} parent=0 // pred_check
    _
  $region3: #{lottery_transformer.1} parent=0 // pred_check_branch
    %29 = sbr.rel (0) target = $region5
  $region4: #{lottery_transformer.1} parent=0 // pred_region
    _
  $region5: #{lottery_transformer.1} parent=0 // pred_fallthru
    _
  // Predicated region
  $region6: #{lottery_transformer.1} parent=0 // pred_check
    _
  $region7: #{lottery_transformer.1} parent=0 // pred_check_branch
    %31 = sbr.rel (0) target = $region9
  $region8: #{lottery_transformer.1} parent=0 // pred_region
    _
  $region9: #{lottery_transformer.1} parent=0 // pred_fallthru
    _
  // Predicated region
  $region10: #{lottery_transformer.1} parent=0 // pred_check
    _
  $region11: #{lottery_transformer.1} parent=0 // pred_check_branch
    %33 = sbr.rel (0) target = $region13
  $region12: #{lottery_transformer.1} parent=0 // pred_region
    _
  $region13: #{lottery_transformer.1} parent=0 // pred_fallthru
    _
  // Predicated region
  $region14: #{lottery_transformer.1} parent=0 // pred_check
    _
  $region15: #{lottery_transformer.1} parent=0 // pred_check_branch
    %35 = sbr.rel (0) target = $region17
  $region16: #{lottery_transformer.1} parent=0 // pred_region
    _
  $region17: #{lottery_transformer.1} parent=0 // pred_fallthru
    _
  // Predicated region
  $region18: #{lottery_transformer.1} parent=0 // pred_check
    _
  $region19: #{lottery_transformer.1} parent=0 // pred_check_branch
    %37 = sbr.rel (0) target = $region21
  $region20: #{lottery_transformer.1} parent=0 // pred_region
    _
  $region21: #{lottery_transformer.1} parent=0 // pred_fallthru
    _
  // Predicated region
  $region22: #{lottery_transformer.1} parent=0 // pred_check
    _
  $region23: #{lottery_transformer.1} parent=0 // pred_check_branch
    %39 = sbr.rel (0) target = $region25
  $region24: #{lottery_transformer.1} parent=0 // pred_region
    _
  $region25: #{lottery_transformer.1} parent=0 // pred_fallthru
    _
  // Predicated region
  $region26: #{lottery_transformer.1} parent=0 // pred_check
    _
  $region27: #{lottery_transformer.1} parent=0 // pred_check_branch
    %41 = sbr.rel (0) target = $region29
  $region28: #{lottery_transformer.1} parent=0 // pred_region
    _
  $region29: #{lottery_transformer.1} parent=0 // pred_fallthru
    _
  // Predicated region
  $region30: #{lottery_transformer.1} parent=0 // pred_check
    _
  $region31: #{lottery_transformer.1} parent=0 // pred_check_branch
    %43 = sbr.rel (0) target = $region33
  $region32: #{lottery_transformer.1} parent=0 // pred_region
    _
  $region33: #{lottery_transformer.1} parent=0 // pred_fallthru
    _
  // Predicated region
  $region34: #{lottery_transformer.1} parent=0 // pred_check
    _
  $region35: #{lottery_transformer.1} parent=0 // pred_check_branch
    %45 = sbr.rel (0) target = $region37
  $region36: #{lottery_transformer.1} parent=0 // pred_region
    _
  $region37: #{lottery_transformer.1} parent=0 // pred_fallthru
    _
  // Predicated region
  $region38: #{lottery_transformer.1} parent=0 // pred_check
    _
  $region39: #{lottery_transformer.1} parent=0 // pred_check_branch
    %47 = sbr.rel (0) target = $region41
  $region40: #{lottery_transformer.1} parent=0 // pred_region
    _
  $region41: #{lottery_transformer.1} parent=0 // pred_fallthru
    _
  // Predicated region
  $region42: #{lottery_transformer.1} parent=0 // pred_check
    _
  $region43: #{lottery_transformer.1} parent=0 // pred_check_branch
    %49 = sbr.rel (0) target = $region45
  $region44: #{lottery_transformer.1} parent=0 // pred_region
    _
  $region45: #{lottery_transformer.1} parent=0 // pred_fallthru
    _
  // Predicated region
  $region46: #{lottery_transformer.1} parent=0 // pred_check
    _
  $region47: #{lottery_transformer.1} parent=0 // pred_check_branch
    %51 = sbr.rel (0) target = $region49
  $region48: #{lottery_transformer.1} parent=0 // pred_region
    _
  $region49: #{lottery_transformer.1} parent=0 // pred_fallthru
    _
  // Predicated region
  $region50: #{lottery_transformer.1} parent=0 // pred_check
    _
  $region51: #{lottery_transformer.1} parent=0 // pred_check_branch
    %53 = sbr.rel (0) target = $region53
  $region52: #{lottery_transformer.1} parent=0 // pred_region
    _
  $region53: #{lottery_transformer.1} parent=0 // pred_fallthru
    _
  // Predicated region
  $region54: #{lottery_transformer.1} parent=0 // pred_check
    _
  $region55: #{lottery_transformer.1} parent=0 // pred_check_branch
    %55 = sbr.rel (0) target = $region57
  $region56: #{lottery_transformer.1} parent=0 // pred_region
    _
  $region57: #{lottery_transformer.1} parent=0 // pred_fallthru
    _
  // Predicated region
  $region58: #{lottery_transformer.1} parent=0 // pred_check
    _
  $region59: #{lottery_transformer.1} parent=0 // pred_check_branch
    %57 = sbr.rel (0) target = $region61
  $region60: #{lottery_transformer.1} parent=0 // pred_region
    _
  $region61: #{lottery_transformer.1} parent=0 // pred_fallthru
    _
  // Predicated region
  $region62: #{lottery_transformer.1} parent=0 // pred_check
    _
  $region63: #{lottery_transformer.1} parent=0 // pred_check_branch
    %59 = sbr.rel (0) target = $region65
  $region64: #{lottery_transformer.1} parent=0 // pred_region
    _
  $region65: #{lottery_transformer.1} parent=0 // pred_fallthru
    _
  // Predicated region
  $region66: #{lottery_transformer.1} parent=0 // pred_check
    _
  $region67: #{lottery_transformer.1} parent=0 // pred_check_branch
    %61 = sbr.rel (0) target = $region69
  $region68: #{lottery_transformer.1} parent=0 // pred_region
    _
  $region69: #{lottery_transformer.1} parent=0 // pred_fallthru
    _
  // Predicated region
  $region70: #{lottery_transformer.1} parent=0 // pred_check
    _
  $region71: #{lottery_transformer.1} parent=0 // pred_check_branch
    %63 = sbr.rel (0) target = $region73
  $region72: #{lottery_transformer.1} parent=0 // pred_region
    _
  $region73: #{lottery_transformer.1} parent=0 // pred_fallthru
    _
  // Predicated region
  $region74: #{lottery_transformer.1} parent=0 // pred_check
    _
  $region75: #{lottery_transformer.1} parent=0 // pred_check_branch
    %65 = sbr.rel (0) target = $region77
  $region76: #{lottery_transformer.1} parent=0 // pred_region
    _
  $region77: #{lottery_transformer.1} parent=0 // pred_fallthru
    _
  // Predicated region
  $region78: #{lottery_transformer.1} parent=0 // pred_check
    _
  $region79: #{lottery_transformer.1} parent=0 // pred_check_branch
    %67 = sbr.rel (0) target = $region81
  $region80: #{lottery_transformer.1} parent=0 // pred_region
    _
  $region81: #{lottery_transformer.1} parent=0 // pred_fallthru
    _
  // Predicated region
  $region82: #{lottery_transformer.1} parent=0 // pred_check
    _
  $region83: #{lottery_transformer.1} parent=0 // pred_check_branch
    %69 = sbr.rel (0) target = $region85
  $region84: #{lottery_transformer.1} parent=0 // pred_region
    _
  $region85: #{lottery_transformer.1} parent=0 // pred_fallthru
    _
  // Predicated region
  $region86: #{lottery_transformer.1} parent=0 // pred_check
    _
  $region87: #{lottery_transformer.1} parent=0 // pred_check_branch
    %71 = sbr.rel (0) target = $region89
  $region88: #{lottery_transformer.1} parent=0 // pred_region
    _
  $region89: #{lottery_transformer.1} parent=0 // pred_fallthru
    _
  // Predicated region
  $region90: #{lottery_transformer.1} parent=0 // pred_check
    _
  $region91: #{lottery_transformer.1} parent=0 // pred_check_branch
    %73 = sbr.rel (0) target = $region93
  $region92: #{lottery_transformer.1} parent=0 // pred_region
    _
  $region93: #{lottery_transformer.1} parent=0 // pred_fallthru
    _
  %v75 = vld [vmem:[%s0] sm:$0xff]
  %v76 = vld [vmem:[%s0 + $0x8] sm:$0xff]
  %v77 = vpack.c.bf16 %v76, %v75
  %v78 = vld [vmem:[%s1] sm:$0xf]
  %v79 = vld [vmem:[%s1 + $0x4] sm:$0x1]
  %v80 = vld [vmem:[%s2] sm:$0x1]
  %v82 = vlaneseq
  %v83 = vshrl.u32 %v82, 7
  %v84 = vsub.s32 0, %v83
  %v85 = vrot.slane %v80, %v84
  %v89 = vunpack.c.l.b16 %v78
  %v90 = vunpack.c.l.b16 %v79
  %v91 = vpack.c.b16 %v90, %v89
  %vm92 = vcmask 80896
  %v94 = vsel %vm92, %v77, 0
  %vm96 = vcmask 1044480
  %v98 = vsel %vm96, %v91, 0
  %100 = vmatprep.subr.bf16.mxu0 0
  %101 = vmatpush1.bf16.msra.mxu0 0
  %102 = vmatprep.subr.bf16.mxu0 0
  %103 = vmatpush1.bf16.msra.mxu0 0
  %104 = vmatprep.subr.bf16.mxu0 0
  %105 = vmatpush1.bf16.msra.mxu0 0
  %106 = vmatprep.subr.bf16.mxu0 0
  %107 = vmatpush1.bf16.msra.mxu0 0
  %108 = vmatprep.subr.bf16.mxu0 0
  %109 = vmatpush1.bf16.msra.mxu0 0
  %110 = vmatprep.subr.bf16.mxu0 0
  %111 = vmatpush1.bf16.msra.mxu0 0
  %112 = vmatprep.subr.bf16.mxu0 0
  %113 = vmatpush1.bf16.msra.mxu0 0
  %114 = vmatprep.subr.bf16.mxu0 0
  %115 = vmatpush1.bf16.msra.mxu0 %v98
  %116 = vmatprep.subr.bf16.mxu0 0
  %117 = vmatpush2.bf16.msra.mxu0 0
  %118 = vmatprep.subr.bf16.mxu0 0
  %119 = vmatpush2.bf16.msra.mxu0 0
  %120 = vmatprep.subr.bf16.mxu0 0
  %121 = vmatpush2.bf16.msra.mxu0 0
  %122 = vmatprep.subr.bf16.mxu0 0
  %123 = vmatpush2.bf16.msra.mxu0 0
  %124 = vmatprep.subr.bf16.mxu0 0
  %125 = vmatpush2.bf16.msra.mxu0 0
  %126 = vmatprep.subr.bf16.mxu0 0
  %127 = vmatpush2.bf16.msra.mxu0 0
  %128 = vmatprep.subr.bf16.mxu0 0
  %129 = vmatpush2.bf16.msra.mxu0 0
  %130 = vmatprep.subr.bf16.mxu0 0
  %131 = vmatpush2.bf16.msra.mxu0 0
  %132 = vmatprep.mubr.bf16.mxu0 0
  %133 = vmatmul.mubr.bf16.gmra.mxu0 %v94
  %v134 = vpop.f32.mrf.mxu0
  %v135 = vadd.f32 %v85, %v134
  %v136 = vpop.f32.mrf.mxu0
  %v137 = vpop.f32.mrf.mxu0
  %v138 = vadd.f32 %v85, %v137
  %v139 = vpop.f32.mrf.mxu0
  %140 = vdwg.mxu0
  %v141 = vpack.c.bf16 %v138, %v135
  %v142 = vld [vmem:[%s3] sm:$0xf]
  %v143 = vld [vmem:[%s3 + $0x4] sm:$0xf]
  %v144 = vld [vmem:[%s3 + $0x8] sm:$0xf]
  %v145 = vld [vmem:[%s3 + $0xc] sm:$0xf]
  %v146 = vld [vmem:[%s3 + $0x10] sm:$0xf]
  %v147 = vld [vmem:[%s3 + $0x14] sm:$0xf]
  %v148 = vld [vmem:[%s3 + $0x18] sm:$0xf]
  %v149 = vld [vmem:[%s3 + $0x1c] sm:$0xf]
  %v150 = vld [vmem:[%s4] sm:$0x1]
  %v151 = vlaneseq
  %v152 = vshrl.u32 %v151, 7
  %v153 = vsub.s32 0, %v152
  %v154 = vrot.slane %v150, %v153
  %v163 = vunpack.c.l.b16 %v142
  %v164 = vunpack.c.l.b16 %v143
  %v165 = vunpack.c.l.b16 %v144
  %v166 = vunpack.c.l.b16 %v145
  %v167 = vunpack.c.l.b16 %v146
  %v168 = vunpack.c.l.b16 %v147
  %v169 = vunpack.c.l.b16 %v148
  %v170 = vunpack.c.l.b16 %v149
  %v171 = vpack.c.b16 %v164, %v163
  %v172 = vpack.c.b16 %v166, %v165
  %v173 = vpack.c.b16 %v168, %v167
  %v174 = vpack.c.b16 %v170, %v169
  %vm179 = vcmask 523264
  %v181 = vsel %vm179, %v141, 0
  %183 = vmatprep.subr.bf16.mxu0 0
  %184 = vmatpush1.bf16.msra.mxu0 0
  %185 = vmatprep.subr.bf16.mxu0 0
  %186 = vmatpush1.bf16.msra.mxu0 0
  %187 = vmatprep.subr.bf16.mxu0 0
  %188 = vmatpush1.bf16.msra.mxu0 0
  %189 = vmatprep.subr.bf16.mxu0 0
  %190 = vmatpush1.bf16.msra.mxu0 0
  %191 = vmatprep.subr.bf16.mxu0 0
  %192 = vmatpush1.bf16.msra.mxu0 %v174
  %193 = vmatprep.subr.bf16.mxu0 0
  %194 = vmatpush1.bf16.msra.mxu0 %v173
  %195 = vmatprep.subr.bf16.mxu0 0
  %196 = vmatpush1.bf16.msra.mxu0 %v172
  %197 = vmatprep.subr.bf16.mxu0 0
  %198 = vmatpush1.bf16.msra.mxu0 %v171
  %199 = vmatprep.subr.bf16.mxu0 0
  %200 = vmatpush2.bf16.msra.mxu0 0
  %201 = vmatprep.subr.bf16.mxu0 0
  %202 = vmatpush2.bf16.msra.mxu0 0
  %203 = vmatprep.subr.bf16.mxu0 0
  %204 = vmatpush2.bf16.msra.mxu0 0
  %205 = vmatprep.subr.bf16.mxu0 0
  %206 = vmatpush2.bf16.msra.mxu0 0
  %207 = vmatprep.subr.bf16.mxu0 0
  %208 = vmatpush2.bf16.msra.mxu0 0
  %209 = vmatprep.subr.bf16.mxu0 0
  %210 = vmatpush2.bf16.msra.mxu0 0
  %211 = vmatprep.subr.bf16.mxu0 0
  %212 = vmatpush2.bf16.msra.mxu0 0
  %213 = vmatprep.subr.bf16.mxu0 0
  %214 = vmatpush2.bf16.msra.mxu0 0
  %215 = vmatprep.mubr.bf16.mxu0 0
  %216 = vmatmul.mubr.bf16.gmra.mxu0 %v181
  %v217 = vpop.f32.mrf.mxu0
  %v218 = vadd.f32 %v154, %v217
  %v219 = vpop.f32.mrf.mxu0
  %v220 = vpop.f32.mrf.mxu0
  %v221 = vadd.f32 %v154, %v220
  %v222 = vpop.f32.mrf.mxu0
  %223 = vdwg.mxu0
  %v224 = vpack.c.bf16 %v221, %v218
  %v225 = vld [vmem:[%s5] sm:$0xf]
  %v226 = vld [vmem:[%s5 + $0x4] sm:$0xf]
  %v227 = vld [vmem:[%s5 + $0x8] sm:$0xf]
  %v228 = vld [vmem:[%s5 + $0xc] sm:$0xf]
  %v229 = vld [vmem:[%s5 + $0x10] sm:$0xf]
  %v230 = vld [vmem:[%s5 + $0x14] sm:$0xf]
  %v231 = vld [vmem:[%s5 + $0x18] sm:$0xf]
  %v232 = vld [vmem:[%s5 + $0x1c] sm:$0xf]
  %v233 = vld [vmem:[%s6] sm:$0x1]
  %v234 = vlaneseq
  %v235 = vshrl.u32 %v234, 7
  %v236 = vsub.s32 0, %v235
  %v237 = vrot.slane %v233, %v236
  %v246 = vunpack.c.l.b16 %v225
  %v247 = vunpack.c.l.b16 %v226
  %v248 = vunpack.c.l.b16 %v227
  %v249 = vunpack.c.l.b16 %v228
  %v250 = vunpack.c.l.b16 %v229
  %v251 = vunpack.c.l.b16 %v230
  %v252 = vunpack.c.l.b16 %v231
  %v253 = vunpack.c.l.b16 %v232
  %v254 = vpack.c.b16 %v247, %v246
  %v255 = vpack.c.b16 %v249, %v248
  %v256 = vpack.c.b16 %v251, %v250
  %v257 = vpack.c.b16 %v253, %v252
  %v263 = vsel %vm179, %v224, 0
  %265 = vmatprep.subr.bf16.mxu0 0
  %266 = vmatpush1.bf16.msra.mxu0 0
  %267 = vmatprep.subr.bf16.mxu0 0
  %268 = vmatpush1.bf16.msra.mxu0 0
  %269 = vmatprep.subr.bf16.mxu0 0
  %270 = vmatpush1.bf16.msra.mxu0 0
  %271 = vmatprep.subr.bf16.mxu0 0
  %272 = vmatpush1.bf16.msra.mxu0 0
  %273 = vmatprep.subr.bf16.mxu0 0
  %274 = vmatpush1.bf16.msra.mxu0 %v257
  %275 = vmatprep.subr.bf16.mxu0 0
  %276 = vmatpush1.bf16.msra.mxu0 %v256
  %277 = vmatprep.subr.bf16.mxu0 0
  %278 = vmatpush1.bf16.msra.mxu0 %v255
  %279 = vmatprep.subr.bf16.mxu0 0
  %280 = vmatpush1.bf16.msra.mxu0 %v254
  %281 = vmatprep.subr.bf16.mxu0 0
  %282 = vmatpush2.bf16.msra.mxu0 0
  %283 = vmatprep.subr.bf16.mxu0 0
  %284 = vmatpush2.bf16.msra.mxu0 0
  %285 = vmatprep.subr.bf16.mxu0 0
  %286 = vmatpush2.bf16.msra.mxu0 0
  %287 = vmatprep.subr.bf16.mxu0 0
  %288 = vmatpush2.bf16.msra.mxu0 0
  %289 = vmatprep.subr.bf16.mxu0 0
  %290 = vmatpush2.bf16.msra.mxu0 0
  %291 = vmatprep.subr.bf16.mxu0 0
  %292 = vmatpush2.bf16.msra.mxu0 0
  %293 = vmatprep.subr.bf16.mxu0 0
  %294 = vmatpush2.bf16.msra.mxu0 0
  %295 = vmatprep.subr.bf16.mxu0 0
  %296 = vmatpush2.bf16.msra.mxu0 0
  %297 = vmatprep.mubr.bf16.mxu0 0
  %298 = vmatmul.mubr.bf16.gmra.mxu0 %v263
  %v299 = vpop.f32.mrf.mxu0
  %v300 = vadd.f32 %v237, %v299
  %v301 = vpop.f32.mrf.mxu0
  %v302 = vpop.f32.mrf.mxu0
  %v303 = vadd.f32 %v237, %v302
  %v304 = vpop.f32.mrf.mxu0
  %305 = vdwg.mxu0
  %v306 = vadd.f32 %v135, %v300
  %v307 = vadd.f32 %v138, %v303
  %v308 = vld [vmem:[%s11] sm:$0x1]
  %v309 = vld [vmem:[%s12] sm:$0x1]
  %v310 = vsel %vm179, %v306, 0.0
  %311 = vadd.xlane.f32.xlu0 %v310
  %v312 = vpop.xlane.xlu0 %311
  %v313 = vsel %vm179, %v307, 0.0
  %314 = vadd.xlane.f32.xlu0 %v313
  %v315 = vpop.xlane.xlu0 %314
  %v316 = vrcp.pop 64.0
  %v317 = vmul.f32 %v312, %v316
  %v318 = vmul.f32 %v315, %v316
  %v319 = vsub.f32 %v306, %v317
  %v320 = vsub.f32 %v307, %v318
  %v321 = vmul.f32 %v319, %v319
  %v322 = vmul.f32 %v320, %v320
  %v323 = vsel %vm179, %v321, 0.0
  %324 = vadd.xlane.f32.xlu0 %v323
  %v325 = vpop.xlane.xlu0 %324
  %v326 = vsel %vm179, %v322, 0.0
  %327 = vadd.xlane.f32.xlu0 %v326
  %v328 = vpop.xlane.xlu0 %327
  %v329 = vmul.f32 %v325, %v316
  %v330 = vmul.f32 %v328, %v316
  %v331 = vadd.f32 %v329, 1e-05
  %v332 = vadd.f32 %v330, 1e-05
  %v333 = vrsqrt.pop %v331
  %v334 = vrsqrt.pop %v332
  %v335 = vmul.f32 %v319, %v333
  %v336 = vmul.f32 %v320, %v334
  %v337 = vlaneseq
  %v338 = vshrl.u32 %v337, 7
  %v339 = vsub.s32 0, %v338
  %v340 = vrot.slane %v308, %v339
  %v341 = vmul.f32 %v335, %v340
  %v342 = vmul.f32 %v336, %v340
  %v343 = vlaneseq
  %v344 = vshrl.u32 %v343, 7
  %v345 = vsub.s32 0, %v344
  %v346 = vrot.slane %v309, %v345
  %v347 = vadd.f32 %v341, %v346
  %v348 = vadd.f32 %v342, %v346
  %v349 = vpack.c.bf16 %v348, %v347
  %v350 = vld [vmem:[%s7] sm:$0xff]
  %v351 = vld [vmem:[%s7 + $0x8] sm:$0xff]
  %v352 = vld [vmem:[%s7 + $0x10] sm:$0xff]
  %v353 = vld [vmem:[%s7 + $0x18] sm:$0xff]
  %v354 = vld [vmem:[%s7 + $0x20] sm:$0xff]
  %v355 = vld [vmem:[%s7 + $0x28] sm:$0xff]
  %v356 = vld [vmem:[%s7 + $0x30] sm:$0xff]
  %v357 = vld [vmem:[%s7 + $0x38] sm:$0xff]
  %v358 = vld [vmem:[%s7 + $0x40] sm:$0xff]
  %v359 = vld [vmem:[%s7 + $0x48] sm:$0xff]
  %v360 = vld [vmem:[%s7 + $0x50] sm:$0xff]
  %v361 = vld [vmem:[%s7 + $0x58] sm:$0xff]
  %v362 = vld [vmem:[%s7 + $0x60] sm:$0xff]
  %v363 = vld [vmem:[%s7 + $0x68] sm:$0xff]
  %v364 = vld [vmem:[%s7 + $0x70] sm:$0xff]
  %v365 = vld [vmem:[%s7 + $0x78] sm:$0xff]
  %v366 = vld [vmem:[%s7 + $0x80] sm:$0xff]
  %v367 = vld [vmem:[%s7 + $0x88] sm:$0xff]
  %v368 = vld [vmem:[%s7 + $0x90] sm:$0xff]
  %v369 = vld [vmem:[%s7 + $0x98] sm:$0xff]
  %v370 = vld [vmem:[%s7 + $0xa0] sm:$0xff]
  %v371 = vld [vmem:[%s7 + $0xa8] sm:$0xff]
  %v372 = vld [vmem:[%s7 + $0xb0] sm:$0xff]
  %v373 = vld [vmem:[%s7 + $0xb8] sm:$0xff]
  %v374 = vld [vmem:[%s7 + $0xc0] sm:$0xff]
  %v375 = vld [vmem:[%s7 + $0xc8] sm:$0xff]
  %v376 = vld [vmem:[%s7 + $0xd0] sm:$0xff]
  %v377 = vld [vmem:[%s7 + $0xd8] sm:$0xff]
  %v378 = vld [vmem:[%s7 + $0xe0] sm:$0xff]
  %v379 = vld [vmem:[%s7 + $0xe8] sm:$0xff]
  %v380 = vld [vmem:[%s7 + $0xf0] sm:$0xff]
  %v381 = vld [vmem:[%s7 + $0xf8] sm:$0xff]
  %v382 = vld [vmem:[%s7 + $0x100] sm:$0xff]
  %v383 = vld [vmem:[%s7 + $0x108] sm:$0xff]
  %v384 = vld [vmem:[%s7 + $0x110] sm:$0xff]
  %v385 = vld [vmem:[%s7 + $0x118] sm:$0xff]
  %v386 = vld [vmem:[%s7 + $0x120] sm:$0xff]
  %v387 = vld [vmem:[%s7 + $0x128] sm:$0xff]
  %v388 = vld [vmem:[%s7 + $0x130] sm:$0xff]
  %v389 = vld [vmem:[%s7 + $0x138] sm:$0xff]
  %v390 = vld [vmem:[%s7 + $0x140] sm:$0xff]
  %v391 = vld [vmem:[%s7 + $0x148] sm:$0xff]
  %v392 = vld [vmem:[%s7 + $0x150] sm:$0xff]
  %v393 = vld [vmem:[%s7 + $0x158] sm:$0xff]
  %v394 = vld [vmem:[%s7 + $0x160] sm:$0xff]
  %v395 = vld [vmem:[%s7 + $0x168] sm:$0xff]
  %v396 = vld [vmem:[%s7 + $0x170] sm:$0xff]
  %v397 = vld [vmem:[%s7 + $0x178] sm:$0xff]
  %v398 = vld [vmem:[%s7 + $0x180] sm:$0xff]
  %v399 = vld [vmem:[%s7 + $0x188] sm:$0xff]
  %v400 = vld [vmem:[%s7 + $0x190] sm:$0xff]
  %v401 = vld [vmem:[%s7 + $0x198] sm:$0xff]
  %v402 = vld [vmem:[%s7 + $0x1a0] sm:$0xff]
  %v403 = vld [vmem:[%s7 + $0x1a8] sm:$0xff]
  %v404 = vld [vmem:[%s7 + $0x1b0] sm:$0xff]
  %v405 = vld [vmem:[%s7 + $0x1b8] sm:$0xff]
  %v406 = vld [vmem:[%s7 + $0x1c0] sm:$0xff]
  %v407 = vld [vmem:[%s7 + $0x1c8] sm:$0xff]
  %v408 = vld [vmem:[%s7 + $0x1d0] sm:$0xff]
  %v409 = vld [vmem:[%s7 + $0x1d8] sm:$0xff]
  %v410 = vld [vmem:[%s7 + $0x1e0] sm:$0xff]
  %v411 = vld [vmem:[%s7 + $0x1e8] sm:$0xff]
  %v412 = vld [vmem:[%s7 + $0x1f0] sm:$0xff]
  %v413 = vld [vmem:[%s7 + $0x1f8] sm:$0xff]
  %v414 = vld [vmem:[%s8] ss:$2 sm:$0xff]
  %s415 = scalar_lea.vmem %s8, 16
  %v416 = vld [vmem:[%s415] ss:$2 sm:$0xff]
  %v419 = vlaneseq
  %v420 = vshrl.u32 %v419, 7
  %v421 = vsub.s32 0, %v420
  %v422 = vrot.slane %v414, %v421
  %v423 = vlaneseq
  %v424 = vshrl.u32 %v423, 7
  %v425 = vsub.s32 1, %v424
  %v426 = vrot.slane %v414, %v425
  %v427 = vlaneseq
  %v428 = vshrl.u32 %v427, 7
  %v429 = vsub.s32 2, %v428
  %v430 = vrot.slane %v414, %v429
  %v431 = vlaneseq
  %v432 = vshrl.u32 %v431, 7
  %v433 = vsub.s32 3, %v432
  %v434 = vrot.slane %v414, %v433
  %v435 = vlaneseq
  %v436 = vshrl.u32 %v435, 7
  %v437 = vsub.s32 4, %v436
  %v438 = vrot.slane %v414, %v437
  %v439 = vlaneseq
  %v440 = vshrl.u32 %v439, 7
  %v441 = vsub.s32 5, %v440
  %v442 = vrot.slane %v414, %v441
  %v443 = vlaneseq
  %v444 = vshrl.u32 %v443, 7
  %v445 = vsub.s32 6, %v444
  %v446 = vrot.slane %v414, %v445
  %v447 = vlaneseq
  %v448 = vshrl.u32 %v447, 7
  %v449 = vsub.s32 7, %v448
  %v450 = vrot.slane %v414, %v449
  %v451 = vlaneseq
  %v452 = vshrl.u32 %v451, 7
  %v453 = vsub.s32 0, %v452
  %v454 = vrot.slane %v416, %v453
  %v455 = vlaneseq
  %v456 = vshrl.u32 %v455, 7
  %v457 = vsub.s32 1, %v456
  %v458 = vrot.slane %v416, %v457
  %v459 = vlaneseq
  %v460 = vshrl.u32 %v459, 7
  %v461 = vsub.s32 2, %v460
  %v462 = vrot.slane %v416, %v461
  %v463 = vlaneseq
  %v464 = vshrl.u32 %v463, 7
  %v465 = vsub.s32 3, %v464
  %v466 = vrot.slane %v416, %v465
  %v467 = vlaneseq
  %v468 = vshrl.u32 %v467, 7
  %v469 = vsub.s32 4, %v468
  %v470 = vrot.slane %v416, %v469
  %v471 = vlaneseq
  %v472 = vshrl.u32 %v471, 7
  %v473 = vsub.s32 5, %v472
  %v474 = vrot.slane %v416, %v473
  %v475 = vlaneseq
  %v476 = vshrl.u32 %v475, 7
  %v477 = vsub.s32 6, %v476
  %v478 = vrot.slane %v416, %v477
  %v479 = vlaneseq
  %v480 = vshrl.u32 %v479, 7
  %v481 = vsub.s32 7, %v480
  %v482 = vrot.slane %v416, %v481
  %v563 = vunpack.c.l.b16 %v350
  %v564 = vunpack.c.h.b16 %v350
  %v565 = vunpack.c.l.b16 %v351
  %v566 = vunpack.c.h.b16 %v351
  %v567 = vunpack.c.l.b16 %v352
  %v568 = vunpack.c.h.b16 %v352
  %v569 = vunpack.c.l.b16 %v353
  %v570 = vunpack.c.h.b16 %v353
  %v571 = vunpack.c.l.b16 %v354
  %v572 = vunpack.c.h.b16 %v354
  %v573 = vunpack.c.l.b16 %v355
  %v574 = vunpack.c.h.b16 %v355
  %v575 = vunpack.c.l.b16 %v356
  %v576 = vunpack.c.h.b16 %v356
  %v577 = vunpack.c.l.b16 %v357
  %v578 = vunpack.c.h.b16 %v357
  %v579 = vunpack.c.l.b16 %v358
  %v580 = vunpack.c.h.b16 %v358
  %v581 = vunpack.c.l.b16 %v359
  %v582 = vunpack.c.h.b16 %v359
  %v583 = vunpack.c.l.b16 %v360
  %v584 = vunpack.c.h.b16 %v360
  %v585 = vunpack.c.l.b16 %v361
  %v586 = vunpack.c.h.b16 %v361
  %v587 = vunpack.c.l.b16 %v362
  %v588 = vunpack.c.h.b16 %v362
  %v589 = vunpack.c.l.b16 %v363
  %v590 = vunpack.c.h.b16 %v363
  %v591 = vunpack.c.l.b16 %v364
  %v592 = vunpack.c.h.b16 %v364
  %v593 = vunpack.c.l.b16 %v365
  %v594 = vunpack.c.h.b16 %v365
  %v595 = vunpack.c.l.b16 %v366
  %v596 = vunpack.c.h.b16 %v366
  %v597 = vunpack.c.l.b16 %v367
  %v598 = vunpack.c.h.b16 %v367
  %v599 = vunpack.c.l.b16 %v368
  %v600 = vunpack.c.h.b16 %v368
  %v601 = vunpack.c.l.b16 %v369
  %v602 = vunpack.c.h.b16 %v369
  %v603 = vunpack.c.l.b16 %v370
  %v604 = vunpack.c.h.b16 %v370
  %v605 = vunpack.c.l.b16 %v371
  %v606 = vunpack.c.h.b16 %v371
  %v607 = vunpack.c.l.b16 %v372
  %v608 = vunpack.c.h.b16 %v372
  %v609 = vunpack.c.l.b16 %v373
  %v610 = vunpack.c.h.b16 %v373
  %v611 = vunpack.c.l.b16 %v374
  %v612 = vunpack.c.h.b16 %v374
  %v613 = vunpack.c.l.b16 %v375
  %v614 = vunpack.c.h.b16 %v375
  %v615 = vunpack.c.l.b16 %v376
  %v616 = vunpack.c.h.b16 %v376
  %v617 = vunpack.c.l.b16 %v377
  %v618 = vunpack.c.h.b16 %v377
  %v619 = vunpack.c.l.b16 %v378
  %v620 = vunpack.c.h.b16 %v378
  %v621 = vunpack.c.l.b16 %v379
  %v622 = vunpack.c.h.b16 %v379
  %v623 = vunpack.c.l.b16 %v380
  %v624 = vunpack.c.h.b16 %v380
  %v625 = vunpack.c.l.b16 %v381
  %v626 = vunpack.c.h.b16 %v381
  %v627 = vunpack.c.l.b16 %v382
  %v628 = vunpack.c.h.b16 %v382
  %v629 = vunpack.c.l.b16 %v383
  %v630 = vunpack.c.h.b16 %v383
  %v631 = vunpack.c.l.b16 %v384
  %v632 = vunpack.c.h.b16 %v384
  %v633 = vunpack.c.l.b16 %v385
  %v634 = vunpack.c.h.b16 %v385
  %v635 = vunpack.c.l.b16 %v386
  %v636 = vunpack.c.h.b16 %v386
  %v637 = vunpack.c.l.b16 %v387
  %v638 = vunpack.c.h.b16 %v387
  %v639 = vunpack.c.l.b16 %v388
  %v640 = vunpack.c.h.b16 %v388
  %v641 = vunpack.c.l.b16 %v389
  %v642 = vunpack.c.h.b16 %v389
  %v643 = vunpack.c.l.b16 %v390
  %v644 = vunpack.c.h.b16 %v390
  %v645 = vunpack.c.l.b16 %v391
  %v646 = vunpack.c.h.b16 %v391
  %v647 = vunpack.c.l.b16 %v392
  %v648 = vunpack.c.h.b16 %v392
  %v649 = vunpack.c.l.b16 %v393
  %v650 = vunpack.c.h.b16 %v393
  %v651 = vunpack.c.l.b16 %v394
  %v652 = vunpack.c.h.b16 %v394
  %v653 = vunpack.c.l.b16 %v395
  %v654 = vunpack.c.h.b16 %v395
  %v655 = vunpack.c.l.b16 %v396
  %v656 = vunpack.c.h.b16 %v396
  %v657 = vunpack.c.l.b16 %v397
  %v658 = vunpack.c.h.b16 %v397
  %v659 = vunpack.c.l.b16 %v398
  %v660 = vunpack.c.h.b16 %v398
  %v661 = vunpack.c.l.b16 %v399
  %v662 = vunpack.c.h.b16 %v399
  %v663 = vunpack.c.l.b16 %v400
  %v664 = vunpack.c.h.b16 %v400
  %v665 = vunpack.c.l.b16 %v401
  %v666 = vunpack.c.h.b16 %v401
  %v667 = vunpack.c.l.b16 %v402
  %v668 = vunpack.c.h.b16 %v402
  %v669 = vunpack.c.l.b16 %v403
  %v670 = vunpack.c.h.b16 %v403
  %v671 = vunpack.c.l.b16 %v404
  %v672 = vunpack.c.h.b16 %v404
  %v673 = vunpack.c.l.b16 %v405
  %v674 = vunpack.c.h.b16 %v405
  %v675 = vunpack.c.l.b16 %v406
  %v676 = vunpack.c.h.b16 %v406
  %v677 = vunpack.c.l.b16 %v407
  %v678 = vunpack.c.h.b16 %v407
  %v679 = vunpack.c.l.b16 %v408
  %v680 = vunpack.c.h.b16 %v408
  %v681 = vunpack.c.l.b16 %v409
  %v682 = vunpack.c.h.b16 %v409
  %v683 = vunpack.c.l.b16 %v410
  %v684 = vunpack.c.h.b16 %v410
  %v685 = vunpack.c.l.b16 %v411
  %v686 = vunpack.c.h.b16 %v411
  %v687 = vunpack.c.l.b16 %v412
  %v688 = vunpack.c.h.b16 %v412
  %v689 = vunpack.c.l.b16 %v413
  %v690 = vunpack.c.h.b16 %v413
  %v691 = vpack.c.b16 %v579, %v563
  %v692 = vpack.c.b16 %v580, %v564
  %v693 = vpack.c.b16 %v581, %v565
  %v694 = vpack.c.b16 %v582, %v566
  %v695 = vpack.c.b16 %v583, %v567
  %v696 = vpack.c.b16 %v584, %v568
  %v697 = vpack.c.b16 %v585, %v569
  %v698 = vpack.c.b16 %v586, %v570
  %v699 = vpack.c.b16 %v587, %v571
  %v700 = vpack.c.b16 %v588, %v572
  %v701 = vpack.c.b16 %v589, %v573
  %v702 = vpack.c.b16 %v590, %v574
  %v703 = vpack.c.b16 %v591, %v575
  %v704 = vpack.c.b16 %v592, %v576
  %v705 = vpack.c.b16 %v593, %v577
  %v706 = vpack.c.b16 %v594, %v578
  %v707 = vpack.c.b16 %v611, %v595
  %v708 = vpack.c.b16 %v612, %v596
  %v709 = vpack.c.b16 %v613, %v597
  %v710 = vpack.c.b16 %v614, %v598
  %v711 = vpack.c.b16 %v615, %v599
  %v712 = vpack.c.b16 %v616, %v600
  %v713 = vpack.c.b16 %v617, %v601
  %v714 = vpack.c.b16 %v618, %v602
  %v715 = vpack.c.b16 %v619, %v603
  %v716 = vpack.c.b16 %v620, %v604
  %v717 = vpack.c.b16 %v621, %v605
  %v718 = vpack.c.b16 %v622, %v606
  %v719 = vpack.c.b16 %v623, %v607
  %v720 = vpack.c.b16 %v624, %v608
  %v721 = vpack.c.b16 %v625, %v609
  %v722 = vpack.c.b16 %v626, %v610
  %v723 = vpack.c.b16 %v643, %v627
  %v724 = vpack.c.b16 %v644, %v628
  %v725 = vpack.c.b16 %v645, %v629
  %v726 = vpack.c.b16 %v646, %v630
  %v727 = vpack.c.b16 %v647, %v631
  %v728 = vpack.c.b16 %v648, %v632
  %v729 = vpack.c.b16 %v649, %v633
  %v730 = vpack.c.b16 %v650, %v634
  %v731 = vpack.c.b16 %v651, %v635
  %v732 = vpack.c.b16 %v652, %v636
  %v733 = vpack.c.b16 %v653, %v637
  %v734 = vpack.c.b16 %v654, %v638
  %v735 = vpack.c.b16 %v655, %v639
  %v736 = vpack.c.b16 %v656, %v640
  %v737 = vpack.c.b16 %v657, %v641
  %v738 = vpack.c.b16 %v658, %v642
  %v739 = vpack.c.b16 %v675, %v659
  %v740 = vpack.c.b16 %v676, %v660
  %v741 = vpack.c.b16 %v677, %v661
  %v742 = vpack.c.b16 %v678, %v662
  %v743 = vpack.c.b16 %v679, %v663
  %v744 = vpack.c.b16 %v680, %v664
  %v745 = vpack.c.b16 %v681, %v665
  %v746 = vpack.c.b16 %v682, %v666
  %v747 = vpack.c.b16 %v683, %v667
  %v748 = vpack.c.b16 %v684, %v668
  %v749 = vpack.c.b16 %v685, %v669
  %v750 = vpack.c.b16 %v686, %v670
  %v751 = vpack.c.b16 %v687, %v671
  %v752 = vpack.c.b16 %v688, %v672
  %v753 = vpack.c.b16 %v689, %v673
  %v754 = vpack.c.b16 %v690, %v674
  %v820 = vsel %vm179, %v349, 0
  %822 = vmatprep.subr.bf16.mxu0 0
  %823 = vmatpush1.bf16.msra.mxu0 0
  %824 = vmatprep.subr.bf16.mxu0 0
  %825 = vmatpush1.bf16.msra.mxu0 0
  %826 = vmatprep.subr.bf16.mxu0 0
  %827 = vmatpush1.bf16.msra.mxu0 0
  %828 = vmatprep.subr.bf16.mxu0 0
  %829 = vmatpush1.bf16.msra.mxu0 0
  %830 = vmatprep.subr.bf16.mxu0 %v740
  %831 = vmatpush1.bf16.msra.mxu0 %v739
  %832 = vmatprep.subr.bf16.mxu0 %v724
  %833 = vmatpush1.bf16.msra.mxu0 %v723
  %834 = vmatprep.subr.bf16.mxu0 %v708
  %835 = vmatpush1.bf16.msra.mxu0 %v707
  %836 = vmatprep.subr.bf16.mxu0 %v692
  %837 = vmatpush1.bf16.msra.mxu0 %v691
  %838 = vmatprep.subr.bf16.mxu0 0
  %839 = vmatpush2.bf16.msra.mxu0 0
  %840 = vmatprep.subr.bf16.mxu0 0
  %841 = vmatpush2.bf16.msra.mxu0 0
  %842 = vmatprep.subr.bf16.mxu0 0
  %843 = vmatpush2.bf16.msra.mxu0 0
  %844 = vmatprep.subr.bf16.mxu0 0
  %845 = vmatpush2.bf16.msra.mxu0 0
  %846 = vmatprep.subr.bf16.mxu0 0
  %847 = vmatpush2.bf16.msra.mxu0 0
  %848 = vmatprep.subr.bf16.mxu0 0
  %849 = vmatpush2.bf16.msra.mxu0 0
  %850 = vmatprep.subr.bf16.mxu0 0
  %851 = vmatpush2.bf16.msra.mxu0 0
  %852 = vmatprep.subr.bf16.mxu0 0
  %853 = vmatpush2.bf16.msra.mxu0 0
  %854 = vmatprep.mubr.bf16.mxu0 0
  %855 = vmatmul.mubr.bf16.gmra.mxu0 %v820
  %v856 = vpop.f32.mrf.mxu0
  %v857 = vadd.f32 %v422, %v856
  %v858 = vpop.f32.mrf.mxu0
  %v859 = vadd.f32 %v426, %v858
  %v860 = vpop.f32.mrf.mxu0
  %v861 = vadd.f32 %v422, %v860
  %v862 = vpop.f32.mrf.mxu0
  %v863 = vadd.f32 %v426, %v862
  %864 = vdwg.mxu0
  %865 = vmatprep.subr.bf16.mxu0 0
  %866 = vmatpush1.bf16.msra.mxu0 0
  %867 = vmatprep.subr.bf16.mxu0 0
  %868 = vmatpush1.bf16.msra.mxu0 0
  %869 = vmatprep.subr.bf16.mxu0 0
  %870 = vmatpush1.bf16.msra.mxu0 0
  %871 = vmatprep.subr.bf16.mxu0 0
  %872 = vmatpush1.bf16.msra.mxu0 0
  %873 = vmatprep.subr.bf16.mxu0 %v742
  %874 = vmatpush1.bf16.msra.mxu0 %v741
  %875 = vmatprep.subr.bf16.mxu0 %v726
  %876 = vmatpush1.bf16.msra.mxu0 %v725
  %877 = vmatprep.subr.bf16.mxu0 %v710
  %878 = vmatpush1.bf16.msra.mxu0 %v709
  %879 = vmatprep.subr.bf16.mxu0 %v694
  %880 = vmatpush1.bf16.msra.mxu0 %v693
  %881 = vmatprep.subr.bf16.mxu0 0
  %882 = vmatpush2.bf16.msra.mxu0 0
  %883 = vmatprep.subr.bf16.mxu0 0
  %884 = vmatpush2.bf16.msra.mxu0 0
  %885 = vmatprep.subr.bf16.mxu0 0
  %886 = vmatpush2.bf16.msra.mxu0 0
  %887 = vmatprep.subr.bf16.mxu0 0
  %888 = vmatpush2.bf16.msra.mxu0 0
  %889 = vmatprep.subr.bf16.mxu0 0
  %890 = vmatpush2.bf16.msra.mxu0 0
  %891 = vmatprep.subr.bf16.mxu0 0
  %892 = vmatpush2.bf16.msra.mxu0 0
  %893 = vmatprep.subr.bf16.mxu0 0
  %894 = vmatpush2.bf16.msra.mxu0 0
  %895 = vmatprep.subr.bf16.mxu0 0
  %896 = vmatpush2.bf16.msra.mxu0 0
  %897 = vmatprep.mubr.bf16.mxu0 0
  %898 = vmatmul.mubr.bf16.gmra.mxu0 %v820
  %v899 = vpop.f32.mrf.mxu0
  %v900 = vadd.f32 %v430, %v899
  %v901 = vpop.f32.mrf.mxu0
  %v902 = vadd.f32 %v434, %v901
  %v903 = vpop.f32.mrf.mxu0
  %v904 = vadd.f32 %v430, %v903
  %v905 = vpop.f32.mrf.mxu0
  %v906 = vadd.f32 %v434, %v905
  %907 = vdwg.mxu0
  %908 = vmatprep.subr.bf16.mxu0 0
  %909 = vmatpush1.bf16.msra.mxu0 0
  %910 = vmatprep.subr.bf16.mxu0 0
  %911 = vmatpush1.bf16.msra.mxu0 0
  %912 = vmatprep.subr.bf16.mxu0 0
  %913 = vmatpush1.bf16.msra.mxu0 0
  %914 = vmatprep.subr.bf16.mxu0 0
  %915 = vmatpush1.bf16.msra.mxu0 0
  %916 = vmatprep.subr.bf16.mxu0 %v744
  %917 = vmatpush1.bf16.msra.mxu0 %v743
  %918 = vmatprep.subr.bf16.mxu0 %v728
  %919 = vmatpush1.bf16.msra.mxu0 %v727
  %920 = vmatprep.subr.bf16.mxu0 %v712
  %921 = vmatpush1.bf16.msra.mxu0 %v711
  %922 = vmatprep.subr.bf16.mxu0 %v696
  %923 = vmatpush1.bf16.msra.mxu0 %v695
  %924 = vmatprep.subr.bf16.mxu0 0
  %925 = vmatpush2.bf16.msra.mxu0 0
  %926 = vmatprep.subr.bf16.mxu0 0
  %927 = vmatpush2.bf16.msra.mxu0 0
  %928 = vmatprep.subr.bf16.mxu0 0
  %929 = vmatpush2.bf16.msra.mxu0 0
  %930 = vmatprep.subr.bf16.mxu0 0
  %931 = vmatpush2.bf16.msra.mxu0 0
  %932 = vmatprep.subr.bf16.mxu0 0
  %933 = vmatpush2.bf16.msra.mxu0 0
  %934 = vmatprep.subr.bf16.mxu0 0
  %935 = vmatpush2.bf16.msra.mxu0 0
  %936 = vmatprep.subr.bf16.mxu0 0
  %937 = vmatpush2.bf16.msra.mxu0 0
  %938 = vmatprep.subr.bf16.mxu0 0
  %939 = vmatpush2.bf16.msra.mxu0 0
  %940 = vmatprep.mubr.bf16.mxu0 0
  %941 = vmatmul.mubr.bf16.gmra.mxu0 %v820
  %v942 = vpop.f32.mrf.mxu0
  %v943 = vadd.f32 %v438, %v942
  %v944 = vpop.f32.mrf.mxu0
  %v945 = vadd.f32 %v442, %v944
  %v946 = vpop.f32.mrf.mxu0
  %v947 = vadd.f32 %v438, %v946
  %v948 = vpop.f32.mrf.mxu0
  %v949 = vadd.f32 %v442, %v948
  %950 = vdwg.mxu0
  %951 = vmatprep.subr.bf16.mxu0 0
  %952 = vmatpush1.bf16.msra.mxu0 0
  %953 = vmatprep.subr.bf16.mxu0 0
  %954 = vmatpush1.bf16.msra.mxu0 0
  %955 = vmatprep.subr.bf16.mxu0 0
  %956 = vmatpush1.bf16.msra.mxu0 0
  %957 = vmatprep.subr.bf16.mxu0 0
  %958 = vmatpush1.bf16.msra.mxu0 0
  %959 = vmatprep.subr.bf16.mxu0 %v746
  %960 = vmatpush1.bf16.msra.mxu0 %v745
  %961 = vmatprep.subr.bf16.mxu0 %v730
  %962 = vmatpush1.bf16.msra.mxu0 %v729
  %963 = vmatprep.subr.bf16.mxu0 %v714
  %964 = vmatpush1.bf16.msra.mxu0 %v713
  %965 = vmatprep.subr.bf16.mxu0 %v698
  %966 = vmatpush1.bf16.msra.mxu0 %v697
  %967 = vmatprep.subr.bf16.mxu0 0
  %968 = vmatpush2.bf16.msra.mxu0 0
  %969 = vmatprep.subr.bf16.mxu0 0
  %970 = vmatpush2.bf16.msra.mxu0 0
  %971 = vmatprep.subr.bf16.mxu0 0
  %972 = vmatpush2.bf16.msra.mxu0 0
  %973 = vmatprep.subr.bf16.mxu0 0
  %974 = vmatpush2.bf16.msra.mxu0 0
  %975 = vmatprep.subr.bf16.mxu0 0
  %976 = vmatpush2.bf16.msra.mxu0 0
  %977 = vmatprep.subr.bf16.mxu0 0
  %978 = vmatpush2.bf16.msra.mxu0 0
  %979 = vmatprep.subr.bf16.mxu0 0
  %980 = vmatpush2.bf16.msra.mxu0 0
  %981 = vmatprep.subr.bf16.mxu0 0
  %982 = vmatpush2.bf16.msra.mxu0 0
  %983 = vmatprep.mubr.bf16.mxu0 0
  %984 = vmatmul.mubr.bf16.gmra.mxu0 %v820
  %v985 = vpop.f32.mrf.mxu0
  %v986 = vadd.f32 %v446, %v985
  %v987 = vpop.f32.mrf.mxu0
  %v988 = vadd.f32 %v450, %v987
  %v989 = vpop.f32.mrf.mxu0
  %v990 = vadd.f32 %v446, %v989
  %v991 = vpop.f32.mrf.mxu0
  %v992 = vadd.f32 %v450, %v991
  %993 = vdwg.mxu0
  %994 = vmatprep.subr.bf16.mxu0 0
  %995 = vmatpush1.bf16.msra.mxu0 0
  %996 = vmatprep.subr.bf16.mxu0 0
  %997 = vmatpush1.bf16.msra.mxu0 0
  %998 = vmatprep.subr.bf16.mxu0 0
  %999 = vmatpush1.bf16.msra.mxu0 0
  %1000 = vmatprep.subr.bf16.mxu0 0
  %1001 = vmatpush1.bf16.msra.mxu0 0
  %1002 = vmatprep.subr.bf16.mxu0 %v748
  %1003 = vmatpush1.bf16.msra.mxu0 %v747
  %1004 = vmatprep.subr.bf16.mxu0 %v732
  %1005 = vmatpush1.bf16.msra.mxu0 %v731
  %1006 = vmatprep.subr.bf16.mxu0 %v716
  %1007 = vmatpush1.bf16.msra.mxu0 %v715
  %1008 = vmatprep.subr.bf16.mxu0 %v700
  %1009 = vmatpush1.bf16.msra.mxu0 %v699
  %1010 = vmatprep.subr.bf16.mxu0 0
  %1011 = vmatpush2.bf16.msra.mxu0 0
  %1012 = vmatprep.subr.bf16.mxu0 0
  %1013 = vmatpush2.bf16.msra.mxu0 0
  %1014 = vmatprep.subr.bf16.mxu0 0
  %1015 = vmatpush2.bf16.msra.mxu0 0
  %1016 = vmatprep.subr.bf16.mxu0 0
  %1017 = vmatpush2.bf16.msra.mxu0 0
  %1018 = vmatprep.subr.bf16.mxu0 0
  %1019 = vmatpush2.bf16.msra.mxu0 0
  %1020 = vmatprep.subr.bf16.mxu0 0
  %1021 = vmatpush2.bf16.msra.mxu0 0
  %1022 = vmatprep.subr.bf16.mxu0 0
  %1023 = vmatpush2.bf16.msra.mxu0 0
  %1024 = vmatprep.subr.bf16.mxu0 0
  %1025 = vmatpush2.bf16.msra.mxu0 0
  %1026 = vmatprep.mubr.bf16.mxu0 0
  %1027 = vmatmul.mubr.bf16.gmra.mxu0 %v820
  %v1028 = vpop.f32.mrf.mxu0
  %v1029 = vadd.f32 %v454, %v1028
  %v1030 = vpop.f32.mrf.mxu0
  %v1031 = vadd.f32 %v458, %v1030
  %v1032 = vpop.f32.mrf.mxu0
  %v1033 = vadd.f32 %v454, %v1032
  %v1034 = vpop.f32.mrf.mxu0
  %v1035 = vadd.f32 %v458, %v1034
  %1036 = vdwg.mxu0
  %1037 = vmatprep.subr.bf16.mxu0 0
  %1038 = vmatpush1.bf16.msra.mxu0 0
  %1039 = vmatprep.subr.bf16.mxu0 0
  %1040 = vmatpush1.bf16.msra.mxu0 0
  %1041 = vmatprep.subr.bf16.mxu0 0
  %1042 = vmatpush1.bf16.msra.mxu0 0
  %1043 = vmatprep.subr.bf16.mxu0 0
  %1044 = vmatpush1.bf16.msra.mxu0 0
  %1045 = vmatprep.subr.bf16.mxu0 %v750
  %1046 = vmatpush1.bf16.msra.mxu0 %v749
  %1047 = vmatprep.subr.bf16.mxu0 %v734
  %1048 = vmatpush1.bf16.msra.mxu0 %v733
  %1049 = vmatprep.subr.bf16.mxu0 %v718
  %1050 = vmatpush1.bf16.msra.mxu0 %v717
  %1051 = vmatprep.subr.bf16.mxu0 %v702
  %1052 = vmatpush1.bf16.msra.mxu0 %v701
  %1053 = vmatprep.subr.bf16.mxu0 0
  %1054 = vmatpush2.bf16.msra.mxu0 0
  %1055 = vmatprep.subr.bf16.mxu0 0
  %1056 = vmatpush2.bf16.msra.mxu0 0
  %1057 = vmatprep.subr.bf16.mxu0 0
  %1058 = vmatpush2.bf16.msra.mxu0 0
  %1059 = vmatprep.subr.bf16.mxu0 0
  %1060 = vmatpush2.bf16.msra.mxu0 0
  %1061 = vmatprep.subr.bf16.mxu0 0
  %1062 = vmatpush2.bf16.msra.mxu0 0
  %1063 = vmatprep.subr.bf16.mxu0 0
  %1064 = vmatpush2.bf16.msra.mxu0 0
  %1065 = vmatprep.subr.bf16.mxu0 0
  %1066 = vmatpush2.bf16.msra.mxu0 0
  %1067 = vmatprep.subr.bf16.mxu0 0
  %1068 = vmatpush2.bf16.msra.mxu0 0
  %1069 = vmatprep.mubr.bf16.mxu0 0
  %1070 = vmatmul.mubr.bf16.gmra.mxu0 %v820
  %v1071 = vpop.f32.mrf.mxu0
  %v1072 = vadd.f32 %v462, %v1071
  %v1073 = vpop.f32.mrf.mxu0
  %v1074 = vadd.f32 %v466, %v1073
  %v1075 = vpop.f32.mrf.mxu0
  %v1076 = vadd.f32 %v462, %v1075
  %v1077 = vpop.f32.mrf.mxu0
  %v1078 = vadd.f32 %v466, %v1077
  %1079 = vdwg.mxu0
  %1080 = vmatprep.subr.bf16.mxu0 0
  %1081 = vmatpush1.bf16.msra.mxu0 0
  %1082 = vmatprep.subr.bf16.mxu0 0
  %1083 = vmatpush1.bf16.msra.mxu0 0
  %1084 = vmatprep.subr.bf16.mxu0 0
  %1085 = vmatpush1.bf16.msra.mxu0 0
  %1086 = vmatprep.subr.bf16.mxu0 0
  %1087 = vmatpush1.bf16.msra.mxu0 0
  %1088 = vmatprep.subr.bf16.mxu0 %v752
  %1089 = vmatpush1.bf16.msra.mxu0 %v751
  %1090 = vmatprep.subr.bf16.mxu0 %v736
  %1091 = vmatpush1.bf16.msra.mxu0 %v735
  %1092 = vmatprep.subr.bf16.mxu0 %v720
  %1093 = vmatpush1.bf16.msra.mxu0 %v719
  %1094 = vmatprep.subr.bf16.mxu0 %v704
  %1095 = vmatpush1.bf16.msra.mxu0 %v703
  %1096 = vmatprep.subr.bf16.mxu0 0
  %1097 = vmatpush2.bf16.msra.mxu0 0
  %1098 = vmatprep.subr.bf16.mxu0 0
  %1099 = vmatpush2.bf16.msra.mxu0 0
  %1100 = vmatprep.subr.bf16.mxu0 0
  %1101 = vmatpush2.bf16.msra.mxu0 0
  %1102 = vmatprep.subr.bf16.mxu0 0
  %1103 = vmatpush2.bf16.msra.mxu0 0
  %1104 = vmatprep.subr.bf16.mxu0 0
  %1105 = vmatpush2.bf16.msra.mxu0 0
  %1106 = vmatprep.subr.bf16.mxu0 0
  %1107 = vmatpush2.bf16.msra.mxu0 0
  %1108 = vmatprep.subr.bf16.mxu0 0
  %1109 = vmatpush2.bf16.msra.mxu0 0
  %1110 = vmatprep.subr.bf16.mxu0 0
  %1111 = vmatpush2.bf16.msra.mxu0 0
  %1112 = vmatprep.mubr.bf16.mxu0 0
  %1113 = vmatmul.mubr.bf16.gmra.mxu0 %v820
  %v1114 = vpop.f32.mrf.mxu0
  %v1115 = vadd.f32 %v470, %v1114
  %v1116 = vpop.f32.mrf.mxu0
  %v1117 = vadd.f32 %v474, %v1116
  %v1118 = vpop.f32.mrf.mxu0
  %v1119 = vadd.f32 %v470, %v1118
  %v1120 = vpop.f32.mrf.mxu0
  %v1121 = vadd.f32 %v474, %v1120
  %1122 = vdwg.mxu0
  %1123 = vmatprep.subr.bf16.mxu0 0
  %1124 = vmatpush1.bf16.msra.mxu0 0
  %1125 = vmatprep.subr.bf16.mxu0 0
  %1126 = vmatpush1.bf16.msra.mxu0 0
  %1127 = vmatprep.subr.bf16.mxu0 0
  %1128 = vmatpush1.bf16.msra.mxu0 0
  %1129 = vmatprep.subr.bf16.mxu0 0
  %1130 = vmatpush1.bf16.msra.mxu0 0
  %1131 = vmatprep.subr.bf16.mxu0 %v754
  %1132 = vmatpush1.bf16.msra.mxu0 %v753
  %1133 = vmatprep.subr.bf16.mxu0 %v738
  %1134 = vmatpush1.bf16.msra.mxu0 %v737
  %1135 = vmatprep.subr.bf16.mxu0 %v722
  %1136 = vmatpush1.bf16.msra.mxu0 %v721
  %1137 = vmatprep.subr.bf16.mxu0 %v706
  %1138 = vmatpush1.bf16.msra.mxu0 %v705
  %1139 = vmatprep.subr.bf16.mxu0 0
  %1140 = vmatpush2.bf16.msra.mxu0 0
  %1141 = vmatprep.subr.bf16.mxu0 0
  %1142 = vmatpush2.bf16.msra.mxu0 0
  %1143 = vmatprep.subr.bf16.mxu0 0
  %1144 = vmatpush2.bf16.msra.mxu0 0
  %1145 = vmatprep.subr.bf16.mxu0 0
  %1146 = vmatpush2.bf16.msra.mxu0 0
  %1147 = vmatprep.subr.bf16.mxu0 0
  %1148 = vmatpush2.bf16.msra.mxu0 0
  %1149 = vmatprep.subr.bf16.mxu0 0
  %1150 = vmatpush2.bf16.msra.mxu0 0
  %1151 = vmatprep.subr.bf16.mxu0 0
  %1152 = vmatpush2.bf16.msra.mxu0 0
  %1153 = vmatprep.subr.bf16.mxu0 0
  %1154 = vmatpush2.bf16.msra.mxu0 0
  %1155 = vmatprep.mubr.bf16.mxu0 0
  %1156 = vmatmul.mubr.bf16.gmra.mxu0 %v820
  %v1157 = vpop.f32.mrf.mxu0
  %v1158 = vadd.f32 %v478, %v1157
  %v1159 = vpop.f32.mrf.mxu0
  %v1160 = vadd.f32 %v482, %v1159
  %v1161 = vpop.f32.mrf.mxu0
  %v1162 = vadd.f32 %v478, %v1161
  %v1163 = vpop.f32.mrf.mxu0
  %v1164 = vadd.f32 %v482, %v1163
  %1165 = vdwg.mxu0
  %v1166 = vmax.f32 %v857, 0.0
  %v1167 = vmax.f32 %v859, 0.0
  %v1168 = vmax.f32 %v900, 0.0
  %v1169 = vmax.f32 %v902, 0.0
  %v1170 = vmax.f32 %v943, 0.0
  %v1171 = vmax.f32 %v945, 0.0
  %v1172 = vmax.f32 %v986, 0.0
  %v1173 = vmax.f32 %v988, 0.0
  %v1174 = vmax.f32 %v1029, 0.0
  %v1175 = vmax.f32 %v1031, 0.0
  %v1176 = vmax.f32 %v1072, 0.0
  %v1177 = vmax.f32 %v1074, 0.0
  %v1178 = vmax.f32 %v1115, 0.0
  %v1179 = vmax.f32 %v1117, 0.0
  %v1180 = vmax.f32 %v1158, 0.0
  %v1181 = vmax.f32 %v1160, 0.0
  %v1182 = vmax.f32 %v861, 0.0
  %v1183 = vmax.f32 %v863, 0.0
  %v1184 = vmax.f32 %v904, 0.0
  %v1185 = vmax.f32 %v906, 0.0
  %v1186 = vmax.f32 %v947, 0.0
  %v1187 = vmax.f32 %v949, 0.0
  %v1188 = vmax.f32 %v990, 0.0
  %v1189 = vmax.f32 %v992, 0.0
  %v1190 = vmax.f32 %v1033, 0.0
  %v1191 = vmax.f32 %v1035, 0.0
  %v1192 = vmax.f32 %v1076, 0.0
  %v1193 = vmax.f32 %v1078, 0.0
  %v1194 = vmax.f32 %v1119, 0.0
  %v1195 = vmax.f32 %v1121, 0.0
  %v1196 = vmax.f32 %v1162, 0.0
  %v1197 = vmax.f32 %v1164, 0.0
  %v1198 = vpack.c.bf16 %v1182, %v1166
  %v1199 = vpack.c.bf16 %v1183, %v1167
  %v1200 = vpack.c.bf16 %v1184, %v1168
  %v1201 = vpack.c.bf16 %v1185, %v1169
  %v1202 = vpack.c.bf16 %v1186, %v1170
  %v1203 = vpack.c.bf16 %v1187, %v1171
  %v1204 = vpack.c.bf16 %v1188, %v1172
  %v1205 = vpack.c.bf16 %v1189, %v1173
  %v1206 = vpack.c.bf16 %v1190, %v1174
  %v1207 = vpack.c.bf16 %v1191, %v1175
  %v1208 = vpack.c.bf16 %v1192, %v1176
  %v1209 = vpack.c.bf16 %v1193, %v1177
  %v1210 = vpack.c.bf16 %v1194, %v1178
  %v1211 = vpack.c.bf16 %v1195, %v1179
  %v1212 = vpack.c.bf16 %v1196, %v1180
  %v1213 = vpack.c.bf16 %v1197, %v1181
  %v1214 = vld [vmem:[%s9] sm:$0xf]
  %v1215 = vld [vmem:[%s9 + $0x4] sm:$0xf]
  %v1216 = vld [vmem:[%s9 + $0x8] sm:$0xf]
  %v1217 = vld [vmem:[%s9 + $0xc] sm:$0xf]
  %v1218 = vld [vmem:[%s9 + $0x10] sm:$0xf]
  %v1219 = vld [vmem:[%s9 + $0x14] sm:$0xf]
  %v1220 = vld [vmem:[%s9 + $0x18] sm:$0xf]
  %v1221 = vld [vmem:[%s9 + $0x1c] sm:$0xf]
  %v1222 = vld [vmem:[%s9 + $0x20] sm:$0xf]
  %v1223 = vld [vmem:[%s9 + $0x24] sm:$0xf]
  %v1224 = vld [vmem:[%s9 + $0x28] sm:$0xf]
  %v1225 = vld [vmem:[%s9 + $0x2c] sm:$0xf]
  %v1226 = vld [vmem:[%s9 + $0x30] sm:$0xf]
  %v1227 = vld [vmem:[%s9 + $0x34] sm:$0xf]
  %v1228 = vld [vmem:[%s9 + $0x38] sm:$0xf]
  %v1229 = vld [vmem:[%s9 + $0x3c] sm:$0xf]
  %v1230 = vld [vmem:[%s9 + $0x40] sm:$0xf]
  %v1231 = vld [vmem:[%s9 + $0x44] sm:$0xf]
  %v1232 = vld [vmem:[%s9 + $0x48] sm:$0xf]
  %v1233 = vld [vmem:[%s9 + $0x4c] sm:$0xf]
  %v1234 = vld [vmem:[%s9 + $0x50] sm:$0xf]
  %v1235 = vld [vmem:[%s9 + $0x54] sm:$0xf]
  %v1236 = vld [vmem:[%s9 + $0x58] sm:$0xf]
  %v1237 = vld [vmem:[%s9 + $0x5c] sm:$0xf]
  %v1238 = vld [vmem:[%s9 + $0x60] sm:$0xf]
  %v1239 = vld [vmem:[%s9 + $0x64] sm:$0xf]
  %v1240 = vld [vmem:[%s9 + $0x68] sm:$0xf]
  %v1241 = vld [vmem:[%s9 + $0x6c] sm:$0xf]
  %v1242 = vld [vmem:[%s9 + $0x70] sm:$0xf]
  %v1243 = vld [vmem:[%s9 + $0x74] sm:$0xf]
  %v1244 = vld [vmem:[%s9 + $0x78] sm:$0xf]
  %v1245 = vld [vmem:[%s9 + $0x7c] sm:$0xf]
  %v1246 = vld [vmem:[%s9 + $0x80] sm:$0xf]
  %v1247 = vld [vmem:[%s9 + $0x84] sm:$0xf]
  %v1248 = vld [vmem:[%s9 + $0x88] sm:$0xf]
  %v1249 = vld [vmem:[%s9 + $0x8c] sm:$0xf]
  %v1250 = vld [vmem:[%s9 + $0x90] sm:$0xf]
  %v1251 = vld [vmem:[%s9 + $0x94] sm:$0xf]
  %v1252 = vld [vmem:[%s9 + $0x98] sm:$0xf]
  %v1253 = vld [vmem:[%s9 + $0x9c] sm:$0xf]
  %v1254 = vld [vmem:[%s9 + $0xa0] sm:$0xf]
  %v1255 = vld [vmem:[%s9 + $0xa4] sm:$0xf]
  %v1256 = vld [vmem:[%s9 + $0xa8] sm:$0xf]
  %v1257 = vld [vmem:[%s9 + $0xac] sm:$0xf]
  %v1258 = vld [vmem:[%s9 + $0xb0] sm:$0xf]
  %v1259 = vld [vmem:[%s9 + $0xb4] sm:$0xf]
  %v1260 = vld [vmem:[%s9 + $0xb8] sm:$0xf]
  %v1261 = vld [vmem:[%s9 + $0xbc] sm:$0xf]
  %v1262 = vld [vmem:[%s9 + $0xc0] sm:$0xf]
  %v1263 = vld [vmem:[%s9 + $0xc4] sm:$0xf]
  %v1264 = vld [vmem:[%s9 + $0xc8] sm:$0xf]
  %v1265 = vld [vmem:[%s9 + $0xcc] sm:$0xf]
  %v1266 = vld [vmem:[%s9 + $0xd0] sm:$0xf]
  %v1267 = vld [vmem:[%s9 + $0xd4] sm:$0xf]
  %v1268 = vld [vmem:[%s9 + $0xd8] sm:$0xf]
  %v1269 = vld [vmem:[%s9 + $0xdc] sm:$0xf]
  %v1270 = vld [vmem:[%s9 + $0xe0] sm:$0xf]
  %v1271 = vld [vmem:[%s9 + $0xe4] sm:$0xf]
  %v1272 = vld [vmem:[%s9 + $0xe8] sm:$0xf]
  %v1273 = vld [vmem:[%s9 + $0xec] sm:$0xf]
  %v1274 = vld [vmem:[%s9 + $0xf0] sm:$0xf]
  %v1275 = vld [vmem:[%s9 + $0xf4] sm:$0xf]
  %v1276 = vld [vmem:[%s9 + $0xf8] sm:$0xf]
  %v1277 = vld [vmem:[%s9 + $0xfc] sm:$0xf]
  %v1278 = vld [vmem:[%s9 + $0x100] sm:$0xf]
  %v1279 = vld [vmem:[%s9 + $0x104] sm:$0xf]
  %v1280 = vld [vmem:[%s9 + $0x108] sm:$0xf]
  %v1281 = vld [vmem:[%s9 + $0x10c] sm:$0xf]
  %v1282 = vld [vmem:[%s9 + $0x110] sm:$0xf]
  %v1283 = vld [vmem:[%s9 + $0x114] sm:$0xf]
  %v1284 = vld [vmem:[%s9 + $0x118] sm:$0xf]
  %v1285 = vld [vmem:[%s9 + $0x11c] sm:$0xf]
  %v1286 = vld [vmem:[%s9 + $0x120] sm:$0xf]
  %v1287 = vld [vmem:[%s9 + $0x124] sm:$0xf]
  %v1288 = vld [vmem:[%s9 + $0x128] sm:$0xf]
  %v1289 = vld [vmem:[%s9 + $0x12c] sm:$0xf]
  %v1290 = vld [vmem:[%s9 + $0x130] sm:$0xf]
  %v1291 = vld [vmem:[%s9 + $0x134] sm:$0xf]
  %v1292 = vld [vmem:[%s9 + $0x138] sm:$0xf]
  %v1293 = vld [vmem:[%s9 + $0x13c] sm:$0xf]
  %v1294 = vld [vmem:[%s9 + $0x140] sm:$0xf]
  %v1295 = vld [vmem:[%s9 + $0x144] sm:$0xf]
  %v1296 = vld [vmem:[%s9 + $0x148] sm:$0xf]
  %v1297 = vld [vmem:[%s9 + $0x14c] sm:$0xf]
  %v1298 = vld [vmem:[%s9 + $0x150] sm:$0xf]
  %v1299 = vld [vmem:[%s9 + $0x154] sm:$0xf]
  %v1300 = vld [vmem:[%s9 + $0x158] sm:$0xf]
  %v1301 = vld [vmem:[%s9 + $0x15c] sm:$0xf]
  %v1302 = vld [vmem:[%s9 + $0x160] sm:$0xf]
  %v1303 = vld [vmem:[%s9 + $0x164] sm:$0xf]
  %v1304 = vld [vmem:[%s9 + $0x168] sm:$0xf]
  %v1305 = vld [vmem:[%s9 + $0x16c] sm:$0xf]
  %v1306 = vld [vmem:[%s9 + $0x170] sm:$0xf]
  %v1307 = vld [vmem:[%s9 + $0x174] sm:$0xf]
  %v1308 = vld [vmem:[%s9 + $0x178] sm:$0xf]
  %v1309 = vld [vmem:[%s9 + $0x17c] sm:$0xf]
  %v1310 = vld [vmem:[%s9 + $0x180] sm:$0xf]
  %v1311 = vld [vmem:[%s9 + $0x184] sm:$0xf]
  %v1312 = vld [vmem:[%s9 + $0x188] sm:$0xf]
  %v1313 = vld [vmem:[%s9 + $0x18c] sm:$0xf]
  %v1314 = vld [vmem:[%s9 + $0x190] sm:$0xf]
  %v1315 = vld [vmem:[%s9 + $0x194] sm:$0xf]
  %v1316 = vld [vmem:[%s9 + $0x198] sm:$0xf]
  %v1317 = vld [vmem:[%s9 + $0x19c] sm:$0xf]
  %v1318 = vld [vmem:[%s9 + $0x1a0] sm:$0xf]
  %v1319 = vld [vmem:[%s9 + $0x1a4] sm:$0xf]
  %v1320 = vld [vmem:[%s9 + $0x1a8] sm:$0xf]
  %v1321 = vld [vmem:[%s9 + $0x1ac] sm:$0xf]
  %v1322 = vld [vmem:[%s9 + $0x1b0] sm:$0xf]
  %v1323 = vld [vmem:[%s9 + $0x1b4] sm:$0xf]
  %v1324 = vld [vmem:[%s9 + $0x1b8] sm:$0xf]
  %v1325 = vld [vmem:[%s9 + $0x1bc] sm:$0xf]
  %v1326 = vld [vmem:[%s9 + $0x1c0] sm:$0xf]
  %v1327 = vld [vmem:[%s9 + $0x1c4] sm:$0xf]
  %v1328 = vld [vmem:[%s9 + $0x1c8] sm:$0xf]
  %v1329 = vld [vmem:[%s9 + $0x1cc] sm:$0xf]
  %v1330 = vld [vmem:[%s9 + $0x1d0] sm:$0xf]
  %v1331 = vld [vmem:[%s9 + $0x1d4] sm:$0xf]
  %v1332 = vld [vmem:[%s9 + $0x1d8] sm:$0xf]
  %v1333 = vld [vmem:[%s9 + $0x1dc] sm:$0xf]
  %v1334 = vld [vmem:[%s9 + $0x1e0] sm:$0xf]
  %v1335 = vld [vmem:[%s9 + $0x1e4] sm:$0xf]
  %v1336 = vld [vmem:[%s9 + $0x1e8] sm:$0xf]
  %v1337 = vld [vmem:[%s9 + $0x1ec] sm:$0xf]
  %v1338 = vld [vmem:[%s9 + $0x1f0] sm:$0xf]
  %v1339 = vld [vmem:[%s9 + $0x1f4] sm:$0xf]
  %v1340 = vld [vmem:[%s9 + $0x1f8] sm:$0xf]
  %v1341 = vld [vmem:[%s9 + $0x1fc] sm:$0xf]
  %v1342 = vld [vmem:[%s9 + $0x200] sm:$0xf]
  %v1343 = vld [vmem:[%s9 + $0x204] sm:$0xf]
  %v1344 = vld [vmem:[%s9 + $0x208] sm:$0xf]
  %v1345 = vld [vmem:[%s9 + $0x20c] sm:$0xf]
  %v1346 = vld [vmem:[%s9 + $0x210] sm:$0xf]
  %v1347 = vld [vmem:[%s9 + $0x214] sm:$0xf]
  %v1348 = vld [vmem:[%s9 + $0x218] sm:$0xf]
  %v1349 = vld [vmem:[%s9 + $0x21c] sm:$0xf]
  %v1350 = vld [vmem:[%s9 + $0x220] sm:$0xf]
  %v1351 = vld [vmem:[%s9 + $0x224] sm:$0xf]
  %v1352 = vld [vmem:[%s9 + $0x228] sm:$0xf]
  %v1353 = vld [vmem:[%s9 + $0x22c] sm:$0xf]
  %v1354 = vld [vmem:[%s9 + $0x230] sm:$0xf]
  %v1355 = vld [vmem:[%s9 + $0x234] sm:$0xf]
  %v1356 = vld [vmem:[%s9 + $0x238] sm:$0xf]
  %v1357 = vld [vmem:[%s9 + $0x23c] sm:$0xf]
  %v1358 = vld [vmem:[%s9 + $0x240] sm:$0xf]
  %v1359 = vld [vmem:[%s9 + $0x244] sm:$0xf]
  %v1360 = vld [vmem:[%s9 + $0x248] sm:$0xf]
  %v1361 = vld [vmem:[%s9 + $0x24c] sm:$0xf]
  %v1362 = vld [vmem:[%s9 + $0x250] sm:$0xf]
  %v1363 = vld [vmem:[%s9 + $0x254] sm:$0xf]
  %v1364 = vld [vmem:[%s9 + $0x258] sm:$0xf]
  %v1365 = vld [vmem:[%s9 + $0x25c] sm:$0xf]
  %v1366 = vld [vmem:[%s9 + $0x260] sm:$0xf]
  %v1367 = vld [vmem:[%s9 + $0x264] sm:$0xf]
  %v1368 = vld [vmem:[%s9 + $0x268] sm:$0xf]
  %v1369 = vld [vmem:[%s9 + $0x26c] sm:$0xf]
  %v1370 = vld [vmem:[%s9 + $0x270] sm:$0xf]
  %v1371 = vld [vmem:[%s9 + $0x274] sm:$0xf]
  %v1372 = vld [vmem:[%s9 + $0x278] sm:$0xf]
  %v1373 = vld [vmem:[%s9 + $0x27c] sm:$0xf]
  %v1374 = vld [vmem:[%s9 + $0x280] sm:$0xf]
  %v1375 = vld [vmem:[%s9 + $0x284] sm:$0xf]
  %v1376 = vld [vmem:[%s9 + $0x288] sm:$0xf]
  %v1377 = vld [vmem:[%s9 + $0x28c] sm:$0xf]
  %v1378 = vld [vmem:[%s9 + $0x290] sm:$0xf]
  %v1379 = vld [vmem:[%s9 + $0x294] sm:$0xf]
  %v1380 = vld [vmem:[%s9 + $0x298] sm:$0xf]
  %v1381 = vld [vmem:[%s9 + $0x29c] sm:$0xf]
  %v1382 = vld [vmem:[%s9 + $0x2a0] sm:$0xf]
  %v1383 = vld [vmem:[%s9 + $0x2a4] sm:$0xf]
  %v1384 = vld [vmem:[%s9 + $0x2a8] sm:$0xf]
  %v1385 = vld [vmem:[%s9 + $0x2ac] sm:$0xf]
  %v1386 = vld [vmem:[%s9 + $0x2b0] sm:$0xf]
  %v1387 = vld [vmem:[%s9 + $0x2b4] sm:$0xf]
  %v1388 = vld [vmem:[%s9 + $0x2b8] sm:$0xf]
  %v1389 = vld [vmem:[%s9 + $0x2bc] sm:$0xf]
  %v1390 = vld [vmem:[%s9 + $0x2c0] sm:$0xf]
  %v1391 = vld [vmem:[%s9 + $0x2c4] sm:$0xf]
  %v1392 = vld [vmem:[%s9 + $0x2c8] sm:$0xf]
  %v1393 = vld [vmem:[%s9 + $0x2cc] sm:$0xf]
  %v1394 = vld [vmem:[%s9 + $0x2d0] sm:$0xf]
  %v1395 = vld [vmem:[%s9 + $0x2d4] sm:$0xf]
  %v1396 = vld [vmem:[%s9 + $0x2d8] sm:$0xf]
  %v1397 = vld [vmem:[%s9 + $0x2dc] sm:$0xf]
  %v1398 = vld [vmem:[%s9 + $0x2e0] sm:$0xf]
  %v1399 = vld [vmem:[%s9 + $0x2e4] sm:$0xf]
  %v1400 = vld [vmem:[%s9 + $0x2e8] sm:$0xf]
  %v1401 = vld [vmem:[%s9 + $0x2ec] sm:$0xf]
  %v1402 = vld [vmem:[%s9 + $0x2f0] sm:$0xf]
  %v1403 = vld [vmem:[%s9 + $0x2f4] sm:$0xf]
  %v1404 = vld [vmem:[%s9 + $0x2f8] sm:$0xf]
  %v1405 = vld [vmem:[%s9 + $0x2fc] sm:$0xf]
  %v1406 = vld [vmem:[%s9 + $0x300] sm:$0xf]
  %v1407 = vld [vmem:[%s9 + $0x304] sm:$0xf]
  %v1408 = vld [vmem:[%s9 + $0x308] sm:$0xf]
  %v1409 = vld [vmem:[%s9 + $0x30c] sm:$0xf]
  %v1410 = vld [vmem:[%s9 + $0x310] sm:$0xf]
  %v1411 = vld [vmem:[%s9 + $0x314] sm:$0xf]
  %v1412 = vld [vmem:[%s9 + $0x318] sm:$0xf]
  %v1413 = vld [vmem:[%s9 + $0x31c] sm:$0xf]
  %v1414 = vld [vmem:[%s9 + $0x320] sm:$0xf]
  %v1415 = vld [vmem:[%s9 + $0x324] sm:$0xf]
  %v1416 = vld [vmem:[%s9 + $0x328] sm:$0xf]
  %v1417 = vld [vmem:[%s9 + $0x32c] sm:$0xf]
  %v1418 = vld [vmem:[%s9 + $0x330] sm:$0xf]
  %v1419 = vld [vmem:[%s9 + $0x334] sm:$0xf]
  %v1420 = vld [vmem:[%s9 + $0x338] sm:$0xf]
  %v1421 = vld [vmem:[%s9 + $0x33c] sm:$0xf]
  %v1422 = vld [vmem:[%s9 + $0x340] sm:$0xf]
  %v1423 = vld [vmem:[%s9 + $0x344] sm:$0xf]
  %v1424 = vld [vmem:[%s9 + $0x348] sm:$0xf]
  %v1425 = vld [vmem:[%s9 + $0x34c] sm:$0xf]
  %v1426 = vld [vmem:[%s9 + $0x350] sm:$0xf]
  %v1427 = vld [vmem:[%s9 + $0x354] sm:$0xf]
  %v1428 = vld [vmem:[%s9 + $0x358] sm:$0xf]
  %v1429 = vld [vmem:[%s9 + $0x35c] sm:$0xf]
  %v1430 = vld [vmem:[%s9 + $0x360] sm:$0xf]
  %v1431 = vld [vmem:[%s9 + $0x364] sm:$0xf]
  %v1432 = vld [vmem:[%s9 + $0x368] sm:$0xf]
  %v1433 = vld [vmem:[%s9 + $0x36c] sm:$0xf]
  %v1434 = vld [vmem:[%s9 + $0x370] sm:$0xf]
  %v1435 = vld [vmem:[%s9 + $0x374] sm:$0xf]
  %v1436 = vld [vmem:[%s9 + $0x378] sm:$0xf]
  %v1437 = vld [vmem:[%s9 + $0x37c] sm:$0xf]
  %v1438 = vld [vmem:[%s9 + $0x380] sm:$0xf]
  %v1439 = vld [vmem:[%s9 + $0x384] sm:$0xf]
  %v1440 = vld [vmem:[%s9 + $0x388] sm:$0xf]
  %v1441 = vld [vmem:[%s9 + $0x38c] sm:$0xf]
  %v1442 = vld [vmem:[%s9 + $0x390] sm:$0xf]
  %v1443 = vld [vmem:[%s9 + $0x394] sm:$0xf]
  %v1444 = vld [vmem:[%s9 + $0x398] sm:$0xf]
  %v1445 = vld [vmem:[%s9 + $0x39c] sm:$0xf]
  %v1446 = vld [vmem:[%s9 + $0x3a0] sm:$0xf]
  %v1447 = vld [vmem:[%s9 + $0x3a4] sm:$0xf]
  %v1448 = vld [vmem:[%s9 + $0x3a8] sm:$0xf]
  %v1449 = vld [vmem:[%s9 + $0x3ac] sm:$0xf]
  %v1450 = vld [vmem:[%s9 + $0x3b0] sm:$0xf]
  %v1451 = vld [vmem:[%s9 + $0x3b4] sm:$0xf]
  %v1452 = vld [vmem:[%s9 + $0x3b8] sm:$0xf]
  %v1453 = vld [vmem:[%s9 + $0x3bc] sm:$0xf]
  %v1454 = vld [vmem:[%s9 + $0x3c0] sm:$0xf]
  %v1455 = vld [vmem:[%s9 + $0x3c4] sm:$0xf]
  %v1456 = vld [vmem:[%s9 + $0x3c8] sm:$0xf]
  %v1457 = vld [vmem:[%s9 + $0x3cc] sm:$0xf]
  %v1458 = vld [vmem:[%s9 + $0x3d0] sm:$0xf]
  %v1459 = vld [vmem:[%s9 + $0x3d4] sm:$0xf]
  %v1460 = vld [vmem:[%s9 + $0x3d8] sm:$0xf]
  %v1461 = vld [vmem:[%s9 + $0x3dc] sm:$0xf]
  %v1462 = vld [vmem:[%s9 + $0x3e0] sm:$0xf]
  %v1463 = vld [vmem:[%s9 + $0x3e4] sm:$0xf]
  %v1464 = vld [vmem:[%s9 + $0x3e8] sm:$0xf]
  %v1465 = vld [vmem:[%s9 + $0x3ec] sm:$0xf]
  %v1466 = vld [vmem:[%s9 + $0x3f0] sm:$0xf]
  %v1467 = vld [vmem:[%s9 + $0x3f4] sm:$0xf]
  %v1468 = vld [vmem:[%s9 + $0x3f8] sm:$0xf]
  %v1469 = vld [vmem:[%s9 + $0x3fc] sm:$0xf]
  %v1470 = vld [vmem:[%s10] sm:$0x1]
  %v1471 = vlaneseq
  %v1472 = vshrl.u32 %v1471, 7
  %v1473 = vsub.s32 0, %v1472
  %v1474 = vrot.slane %v1470, %v1473
  %v1731 = vunpack.c.l.b16 %v1214
  %v1732 = vunpack.c.l.b16 %v1215
  %v1733 = vunpack.c.l.b16 %v1216
  %v1734 = vunpack.c.l.b16 %v1217
  %v1735 = vunpack.c.l.b16 %v1218
  %v1736 = vunpack.c.l.b16 %v1219
  %v1737 = vunpack.c.l.b16 %v1220
  %v1738 = vunpack.c.l.b16 %v1221
  %v1739 = vunpack.c.l.b16 %v1222
  %v1740 = vunpack.c.l.b16 %v1223
  %v1741 = vunpack.c.l.b16 %v1224
  %v1742 = vunpack.c.l.b16 %v1225
  %v1743 = vunpack.c.l.b16 %v1226
  %v1744 = vunpack.c.l.b16 %v1227
  %v1745 = vunpack.c.l.b16 %v1228
  %v1746 = vunpack.c.l.b16 %v1229
  %v1747 = vunpack.c.l.b16 %v1230
  %v1748 = vunpack.c.l.b16 %v1231
  %v1749 = vunpack.c.l.b16 %v1232
  %v1750 = vunpack.c.l.b16 %v1233
  %v1751 = vunpack.c.l.b16 %v1234
  %v1752 = vunpack.c.l.b16 %v1235
  %v1753 = vunpack.c.l.b16 %v1236
  %v1754 = vunpack.c.l.b16 %v1237
  %v1755 = vunpack.c.l.b16 %v1238
  %v1756 = vunpack.c.l.b16 %v1239
  %v1757 = vunpack.c.l.b16 %v1240
  %v1758 = vunpack.c.l.b16 %v1241
  %v1759 = vunpack.c.l.b16 %v1242
  %v1760 = vunpack.c.l.b16 %v1243
  %v1761 = vunpack.c.l.b16 %v1244
  %v1762 = vunpack.c.l.b16 %v1245
  %v1763 = vunpack.c.l.b16 %v1246
  %v1764 = vunpack.c.l.b16 %v1247
  %v1765 = vunpack.c.l.b16 %v1248
  %v1766 = vunpack.c.l.b16 %v1249
  %v1767 = vunpack.c.l.b16 %v1250
  %v1768 = vunpack.c.l.b16 %v1251
  %v1769 = vunpack.c.l.b16 %v1252
  %v1770 = vunpack.c.l.b16 %v1253
  %v1771 = vunpack.c.l.b16 %v1254
  %v1772 = vunpack.c.l.b16 %v1255
  %v1773 = vunpack.c.l.b16 %v1256
  %v1774 = vunpack.c.l.b16 %v1257
  %v1775 = vunpack.c.l.b16 %v1258
  %v1776 = vunpack.c.l.b16 %v1259
  %v1777 = vunpack.c.l.b16 %v1260
  %v1778 = vunpack.c.l.b16 %v1261
  %v1779 = vunpack.c.l.b16 %v1262
  %v1780 = vunpack.c.l.b16 %v1263
  %v1781 = vunpack.c.l.b16 %v1264
  %v1782 = vunpack.c.l.b16 %v1265
  %v1783 = vunpack.c.l.b16 %v1266
  %v1784 = vunpack.c.l.b16 %v1267
  %v1785 = vunpack.c.l.b16 %v1268
  %v1786 = vunpack.c.l.b16 %v1269
  %v1787 = vunpack.c.l.b16 %v1270
  %v1788 = vunpack.c.l.b16 %v1271
  %v1789 = vunpack.c.l.b16 %v1272
  %v1790 = vunpack.c.l.b16 %v1273
  %v1791 = vunpack.c.l.b16 %v1274
  %v1792 = vunpack.c.l.b16 %v1275
  %v1793 = vunpack.c.l.b16 %v1276
  %v1794 = vunpack.c.l.b16 %v1277
  %v1795 = vunpack.c.l.b16 %v1278
  %v1796 = vunpack.c.l.b16 %v1279
  %v1797 = vunpack.c.l.b16 %v1280
  %v1798 = vunpack.c.l.b16 %v1281
  %v1799 = vunpack.c.l.b16 %v1282
  %v1800 = vunpack.c.l.b16 %v1283
  %v1801 = vunpack.c.l.b16 %v1284
  %v1802 = vunpack.c.l.b16 %v1285
  %v1803 = vunpack.c.l.b16 %v1286
  %v1804 = vunpack.c.l.b16 %v1287
  %v1805 = vunpack.c.l.b16 %v1288
  %v1806 = vunpack.c.l.b16 %v1289
  %v1807 = vunpack.c.l.b16 %v1290
  %v1808 = vunpack.c.l.b16 %v1291
  %v1809 = vunpack.c.l.b16 %v1292
  %v1810 = vunpack.c.l.b16 %v1293
  %v1811 = vunpack.c.l.b16 %v1294
  %v1812 = vunpack.c.l.b16 %v1295
  %v1813 = vunpack.c.l.b16 %v1296
  %v1814 = vunpack.c.l.b16 %v1297
  %v1815 = vunpack.c.l.b16 %v1298
  %v1816 = vunpack.c.l.b16 %v1299
  %v1817 = vunpack.c.l.b16 %v1300
  %v1818 = vunpack.c.l.b16 %v1301
  %v1819 = vunpack.c.l.b16 %v1302
  %v1820 = vunpack.c.l.b16 %v1303
  %v1821 = vunpack.c.l.b16 %v1304
  %v1822 = vunpack.c.l.b16 %v1305
  %v1823 = vunpack.c.l.b16 %v1306
  %v1824 = vunpack.c.l.b16 %v1307
  %v1825 = vunpack.c.l.b16 %v1308
  %v1826 = vunpack.c.l.b16 %v1309
  %v1827 = vunpack.c.l.b16 %v1310
  %v1828 = vunpack.c.l.b16 %v1311
  %v1829 = vunpack.c.l.b16 %v1312
  %v1830 = vunpack.c.l.b16 %v1313
  %v1831 = vunpack.c.l.b16 %v1314
  %v1832 = vunpack.c.l.b16 %v1315
  %v1833 = vunpack.c.l.b16 %v1316
  %v1834 = vunpack.c.l.b16 %v1317
  %v1835 = vunpack.c.l.b16 %v1318
  %v1836 = vunpack.c.l.b16 %v1319
  %v1837 = vunpack.c.l.b16 %v1320
  %v1838 = vunpack.c.l.b16 %v1321
  %v1839 = vunpack.c.l.b16 %v1322
  %v1840 = vunpack.c.l.b16 %v1323
  %v1841 = vunpack.c.l.b16 %v1324
  %v1842 = vunpack.c.l.b16 %v1325
  %v1843 = vunpack.c.l.b16 %v1326
  %v1844 = vunpack.c.l.b16 %v1327
  %v1845 = vunpack.c.l.b16 %v1328
  %v1846 = vunpack.c.l.b16 %v1329
  %v1847 = vunpack.c.l.b16 %v1330
  %v1848 = vunpack.c.l.b16 %v1331
  %v1849 = vunpack.c.l.b16 %v1332
  %v1850 = vunpack.c.l.b16 %v1333
  %v1851 = vunpack.c.l.b16 %v1334
  %v1852 = vunpack.c.l.b16 %v1335
  %v1853 = vunpack.c.l.b16 %v1336
  %v1854 = vunpack.c.l.b16 %v1337
  %v1855 = vunpack.c.l.b16 %v1338
  %v1856 = vunpack.c.l.b16 %v1339
  %v1857 = vunpack.c.l.b16 %v1340
  %v1858 = vunpack.c.l.b16 %v1341
  %v1859 = vunpack.c.l.b16 %v1342
  %v1860 = vunpack.c.l.b16 %v1343
  %v1861 = vunpack.c.l.b16 %v1344
  %v1862 = vunpack.c.l.b16 %v1345
  %v1863 = vunpack.c.l.b16 %v1346
  %v1864 = vunpack.c.l.b16 %v1347
  %v1865 = vunpack.c.l.b16 %v1348
  %v1866 = vunpack.c.l.b16 %v1349
  %v1867 = vunpack.c.l.b16 %v1350
  %v1868 = vunpack.c.l.b16 %v1351
  %v1869 = vunpack.c.l.b16 %v1352
  %v1870 = vunpack.c.l.b16 %v1353
  %v1871 = vunpack.c.l.b16 %v1354
  %v1872 = vunpack.c.l.b16 %v1355
  %v1873 = vunpack.c.l.b16 %v1356
  %v1874 = vunpack.c.l.b16 %v1357
  %v1875 = vunpack.c.l.b16 %v1358
  %v1876 = vunpack.c.l.b16 %v1359
  %v1877 = vunpack.c.l.b16 %v1360
  %v1878 = vunpack.c.l.b16 %v1361
  %v1879 = vunpack.c.l.b16 %v1362
  %v1880 = vunpack.c.l.b16 %v1363
  %v1881 = vunpack.c.l.b16 %v1364
  %v1882 = vunpack.c.l.b16 %v1365
  %v1883 = vunpack.c.l.b16 %v1366
  %v1884 = vunpack.c.l.b16 %v1367
  %v1885 = vunpack.c.l.b16 %v1368
  %v1886 = vunpack.c.l.b16 %v1369
  %v1887 = vunpack.c.l.b16 %v1370
  %v1888 = vunpack.c.l.b16 %v1371
  %v1889 = vunpack.c.l.b16 %v1372
  %v1890 = vunpack.c.l.b16 %v1373
  %v1891 = vunpack.c.l.b16 %v1374
  %v1892 = vunpack.c.l.b16 %v1375
  %v1893 = vunpack.c.l.b16 %v1376
  %v1894 = vunpack.c.l.b16 %v1377
  %v1895 = vunpack.c.l.b16 %v1378
  %v1896 = vunpack.c.l.b16 %v1379
  %v1897 = vunpack.c.l.b16 %v1380
  %v1898 = vunpack.c.l.b16 %v1381
  %v1899 = vunpack.c.l.b16 %v1382
  %v1900 = vunpack.c.l.b16 %v1383
  %v1901 = vunpack.c.l.b16 %v1384
  %v1902 = vunpack.c.l.b16 %v1385
  %v1903 = vunpack.c.l.b16 %v1386
  %v1904 = vunpack.c.l.b16 %v1387
  %v1905 = vunpack.c.l.b16 %v1388
  %v1906 = vunpack.c.l.b16 %v1389
  %v1907 = vunpack.c.l.b16 %v1390
  %v1908 = vunpack.c.l.b16 %v1391
  %v1909 = vunpack.c.l.b16 %v1392
  %v1910 = vunpack.c.l.b16 %v1393
  %v1911 = vunpack.c.l.b16 %v1394
  %v1912 = vunpack.c.l.b16 %v1395
  %v1913 = vunpack.c.l.b16 %v1396
  %v1914 = vunpack.c.l.b16 %v1397
  %v1915 = vunpack.c.l.b16 %v1398
  %v1916 = vunpack.c.l.b16 %v1399
  %v1917 = vunpack.c.l.b16 %v1400
  %v1918 = vunpack.c.l.b16 %v1401
  %v1919 = vunpack.c.l.b16 %v1402
  %v1920 = vunpack.c.l.b16 %v1403
  %v1921 = vunpack.c.l.b16 %v1404
  %v1922 = vunpack.c.l.b16 %v1405
  %v1923 = vunpack.c.l.b16 %v1406
  %v1924 = vunpack.c.l.b16 %v1407
  %v1925 = vunpack.c.l.b16 %v1408
  %v1926 = vunpack.c.l.b16 %v1409
  %v1927 = vunpack.c.l.b16 %v1410
  %v1928 = vunpack.c.l.b16 %v1411
  %v1929 = vunpack.c.l.b16 %v1412
  %v1930 = vunpack.c.l.b16 %v1413
  %v1931 = vunpack.c.l.b16 %v1414
  %v1932 = vunpack.c.l.b16 %v1415
  %v1933 = vunpack.c.l.b16 %v1416
  %v1934 = vunpack.c.l.b16 %v1417
  %v1935 = vunpack.c.l.b16 %v1418
  %v1936 = vunpack.c.l.b16 %v1419
  %v1937 = vunpack.c.l.b16 %v1420
  %v1938 = vunpack.c.l.b16 %v1421
  %v1939 = vunpack.c.l.b16 %v1422
  %v1940 = vunpack.c.l.b16 %v1423
  %v1941 = vunpack.c.l.b16 %v1424
  %v1942 = vunpack.c.l.b16 %v1425
  %v1943 = vunpack.c.l.b16 %v1426
  %v1944 = vunpack.c.l.b16 %v1427
  %v1945 = vunpack.c.l.b16 %v1428
  %v1946 = vunpack.c.l.b16 %v1429
  %v1947 = vunpack.c.l.b16 %v1430
  %v1948 = vunpack.c.l.b16 %v1431
  %v1949 = vunpack.c.l.b16 %v1432
  %v1950 = vunpack.c.l.b16 %v1433
  %v1951 = vunpack.c.l.b16 %v1434
  %v1952 = vunpack.c.l.b16 %v1435
  %v1953 = vunpack.c.l.b16 %v1436
  %v1954 = vunpack.c.l.b16 %v1437
  %v1955 = vunpack.c.l.b16 %v1438
  %v1956 = vunpack.c.l.b16 %v1439
  %v1957 = vunpack.c.l.b16 %v1440
  %v1958 = vunpack.c.l.b16 %v1441
  %v1959 = vunpack.c.l.b16 %v1442
  %v1960 = vunpack.c.l.b16 %v1443
  %v1961 = vunpack.c.l.b16 %v1444
  %v1962 = vunpack.c.l.b16 %v1445
  %v1963 = vunpack.c.l.b16 %v1446
  %v1964 = vunpack.c.l.b16 %v1447
  %v1965 = vunpack.c.l.b16 %v1448
  %v1966 = vunpack.c.l.b16 %v1449
  %v1967 = vunpack.c.l.b16 %v1450
  %v1968 = vunpack.c.l.b16 %v1451
  %v1969 = vunpack.c.l.b16 %v1452
  %v1970 = vunpack.c.l.b16 %v1453
  %v1971 = vunpack.c.l.b16 %v1454
  %v1972 = vunpack.c.l.b16 %v1455
  %v1973 = vunpack.c.l.b16 %v1456
  %v1974 = vunpack.c.l.b16 %v1457
  %v1975 = vunpack.c.l.b16 %v1458
  %v1976 = vunpack.c.l.b16 %v1459
  %v1977 = vunpack.c.l.b16 %v1460
  %v1978 = vunpack.c.l.b16 %v1461
  %v1979 = vunpack.c.l.b16 %v1462
  %v1980 = vunpack.c.l.b16 %v1463
  %v1981 = vunpack.c.l.b16 %v1464
  %v1982 = vunpack.c.l.b16 %v1465
  %v1983 = vunpack.c.l.b16 %v1466
  %v1984 = vunpack.c.l.b16 %v1467
  %v1985 = vunpack.c.l.b16 %v1468
  %v1986 = vunpack.c.l.b16 %v1469
  %v1987 = vpack.c.b16 %v1732, %v1731
  %v1988 = vpack.c.b16 %v1734, %v1733
  %v1989 = vpack.c.b16 %v1736, %v1735
  %v1990 = vpack.c.b16 %v1738, %v1737
  %v1991 = vpack.c.b16 %v1740, %v1739
  %v1992 = vpack.c.b16 %v1742, %v1741
  %v1993 = vpack.c.b16 %v1744, %v1743
  %v1994 = vpack.c.b16 %v1746, %v1745
  %v1995 = vpack.c.b16 %v1748, %v1747
  %v1996 = vpack.c.b16 %v1750, %v1749
  %v1997 = vpack.c.b16 %v1752, %v1751
  %v1998 = vpack.c.b16 %v1754, %v1753
  %v1999 = vpack.c.b16 %v1756, %v1755
  %v2000 = vpack.c.b16 %v1758, %v1757
  %v2001 = vpack.c.b16 %v1760, %v1759
  %v2002 = vpack.c.b16 %v1762, %v1761
  %v2003 = vpack.c.b16 %v1764, %v1763
  %v2004 = vpack.c.b16 %v1766, %v1765
  %v2005 = vpack.c.b16 %v1768, %v1767
  %v2006 = vpack.c.b16 %v1770, %v1769
  %v2007 = vpack.c.b16 %v1772, %v1771
  %v2008 = vpack.c.b16 %v1774, %v1773
  %v2009 = vpack.c.b16 %v1776, %v1775
  %v2010 = vpack.c.b16 %v1778, %v1777
  %v2011 = vpack.c.b16 %v1780, %v1779
  %v2012 = vpack.c.b16 %v1782, %v1781
  %v2013 = vpack.c.b16 %v1784, %v1783
  %v2014 = vpack.c.b16 %v1786, %v1785
  %v2015 = vpack.c.b16 %v1788, %v1787
  %v2016 = vpack.c.b16 %v1790, %v1789
  %v2017 = vpack.c.b16 %v1792, %v1791
  %v2018 = vpack.c.b16 %v1794, %v1793
  %v2019 = vpack.c.b16 %v1796, %v1795
  %v2020 = vpack.c.b16 %v1798, %v1797
  %v2021 = vpack.c.b16 %v1800, %v1799
  %v2022 = vpack.c.b16 %v1802, %v1801
  %v2023 = vpack.c.b16 %v1804, %v1803
  %v2024 = vpack.c.b16 %v1806, %v1805
  %v2025 = vpack.c.b16 %v1808, %v1807
  %v2026 = vpack.c.b16 %v1810, %v1809
  %v2027 = vpack.c.b16 %v1812, %v1811
  %v2028 = vpack.c.b16 %v1814, %v1813
  %v2029 = vpack.c.b16 %v1816, %v1815
  %v2030 = vpack.c.b16 %v1818, %v1817
  %v2031 = vpack.c.b16 %v1820, %v1819
  %v2032 = vpack.c.b16 %v1822, %v1821
  %v2033 = vpack.c.b16 %v1824, %v1823
  %v2034 = vpack.c.b16 %v1826, %v1825
  %v2035 = vpack.c.b16 %v1828, %v1827
  %v2036 = vpack.c.b16 %v1830, %v1829
  %v2037 = vpack.c.b16 %v1832, %v1831
  %v2038 = vpack.c.b16 %v1834, %v1833
  %v2039 = vpack.c.b16 %v1836, %v1835
  %v2040 = vpack.c.b16 %v1838, %v1837
  %v2041 = vpack.c.b16 %v1840, %v1839
  %v2042 = vpack.c.b16 %v1842, %v1841
  %v2043 = vpack.c.b16 %v1844, %v1843
  %v2044 = vpack.c.b16 %v1846, %v1845
  %v2045 = vpack.c.b16 %v1848, %v1847
  %v2046 = vpack.c.b16 %v1850, %v1849
  %v2047 = vpack.c.b16 %v1852, %v1851
  %v2048 = vpack.c.b16 %v1854, %v1853
  %v2049 = vpack.c.b16 %v1856, %v1855
  %v2050 = vpack.c.b16 %v1858, %v1857
  %v2051 = vpack.c.b16 %v1860, %v1859
  %v2052 = vpack.c.b16 %v1862, %v1861
  %v2053 = vpack.c.b16 %v1864, %v1863
  %v2054 = vpack.c.b16 %v1866, %v1865
  %v2055 = vpack.c.b16 %v1868, %v1867
  %v2056 = vpack.c.b16 %v1870, %v1869
  %v2057 = vpack.c.b16 %v1872, %v1871
  %v2058 = vpack.c.b16 %v1874, %v1873
  %v2059 = vpack.c.b16 %v1876, %v1875
  %v2060 = vpack.c.b16 %v1878, %v1877
  %v2061 = vpack.c.b16 %v1880, %v1879
  %v2062 = vpack.c.b16 %v1882, %v1881
  %v2063 = vpack.c.b16 %v1884, %v1883
  %v2064 = vpack.c.b16 %v1886, %v1885
  %v2065 = vpack.c.b16 %v1888, %v1887
  %v2066 = vpack.c.b16 %v1890, %v1889
  %v2067 = vpack.c.b16 %v1892, %v1891
  %v2068 = vpack.c.b16 %v1894, %v1893
  %v2069 = vpack.c.b16 %v1896, %v1895
  %v2070 = vpack.c.b16 %v1898, %v1897
  %v2071 = vpack.c.b16 %v1900, %v1899
  %v2072 = vpack.c.b16 %v1902, %v1901
  %v2073 = vpack.c.b16 %v1904, %v1903
  %v2074 = vpack.c.b16 %v1906, %v1905
  %v2075 = vpack.c.b16 %v1908, %v1907
  %v2076 = vpack.c.b16 %v1910, %v1909
  %v2077 = vpack.c.b16 %v1912, %v1911
  %v2078 = vpack.c.b16 %v1914, %v1913
  %v2079 = vpack.c.b16 %v1916, %v1915
  %v2080 = vpack.c.b16 %v1918, %v1917
  %v2081 = vpack.c.b16 %v1920, %v1919
  %v2082 = vpack.c.b16 %v1922, %v1921
  %v2083 = vpack.c.b16 %v1924, %v1923
  %v2084 = vpack.c.b16 %v1926, %v1925
  %v2085 = vpack.c.b16 %v1928, %v1927
  %v2086 = vpack.c.b16 %v1930, %v1929
  %v2087 = vpack.c.b16 %v1932, %v1931
  %v2088 = vpack.c.b16 %v1934, %v1933
  %v2089 = vpack.c.b16 %v1936, %v1935
  %v2090 = vpack.c.b16 %v1938, %v1937
  %v2091 = vpack.c.b16 %v1940, %v1939
  %v2092 = vpack.c.b16 %v1942, %v1941
  %v2093 = vpack.c.b16 %v1944, %v1943
  %v2094 = vpack.c.b16 %v1946, %v1945
  %v2095 = vpack.c.b16 %v1948, %v1947
  %v2096 = vpack.c.b16 %v1950, %v1949
  %v2097 = vpack.c.b16 %v1952, %v1951
  %v2098 = vpack.c.b16 %v1954, %v1953
  %v2099 = vpack.c.b16 %v1956, %v1955
  %v2100 = vpack.c.b16 %v1958, %v1957
  %v2101 = vpack.c.b16 %v1960, %v1959
  %v2102 = vpack.c.b16 %v1962, %v1961
  %v2103 = vpack.c.b16 %v1964, %v1963
  %v2104 = vpack.c.b16 %v1966, %v1965
  %v2105 = vpack.c.b16 %v1968, %v1967
  %v2106 = vpack.c.b16 %v1970, %v1969
  %v2107 = vpack.c.b16 %v1972, %v1971
  %v2108 = vpack.c.b16 %v1974, %v1973
  %v2109 = vpack.c.b16 %v1976, %v1975
  %v2110 = vpack.c.b16 %v1978, %v1977
  %v2111 = vpack.c.b16 %v1980, %v1979
  %v2112 = vpack.c.b16 %v1982, %v1981
  %v2113 = vpack.c.b16 %v1984, %v1983
  %v2114 = vpack.c.b16 %v1986, %v1985
  %2243 = vmatprep.subr.bf16.mxu0 0
  %2244 = vmatpush1.bf16.msra.mxu0 %v1994
  %2245 = vmatprep.subr.bf16.mxu0 0
  %2246 = vmatpush1.bf16.msra.mxu0 %v1993
  %2247 = vmatprep.subr.bf16.mxu0 0
  %2248 = vmatpush1.bf16.msra.mxu0 %v1992
  %2249 = vmatprep.subr.bf16.mxu0 0
  %2250 = vmatpush1.bf16.msra.mxu0 %v1991
  %2251 = vmatprep.subr.bf16.mxu0 0
  %2252 = vmatpush1.bf16.msra.mxu0 %v1990
  %2253 = vmatprep.subr.bf16.mxu0 0
  %2254 = vmatpush1.bf16.msra.mxu0 %v1989
  %2255 = vmatprep.subr.bf16.mxu0 0
  %2256 = vmatpush1.bf16.msra.mxu0 %v1988
  %2257 = vmatprep.subr.bf16.mxu0 0
  %2258 = vmatpush1.bf16.msra.mxu0 %v1987
  %2259 = vmatprep.subr.bf16.mxu0 0
  %2260 = vmatpush2.bf16.msra.mxu0 %v2002
  %2261 = vmatprep.subr.bf16.mxu0 0
  %2262 = vmatpush2.bf16.msra.mxu0 %v2001
  %2263 = vmatprep.subr.bf16.mxu0 0
  %2264 = vmatpush2.bf16.msra.mxu0 %v2000
  %2265 = vmatprep.subr.bf16.mxu0 0
  %2266 = vmatpush2.bf16.msra.mxu0 %v1999
  %2267 = vmatprep.subr.bf16.mxu0 0
  %2268 = vmatpush2.bf16.msra.mxu0 %v1998
  %2269 = vmatprep.subr.bf16.mxu0 0
  %2270 = vmatpush2.bf16.msra.mxu0 %v1997
  %2271 = vmatprep.subr.bf16.mxu0 0
  %2272 = vmatpush2.bf16.msra.mxu0 %v1996
  %2273 = vmatprep.subr.bf16.mxu0 0
  %2274 = vmatpush2.bf16.msra.mxu0 %v1995
  %2275 = vmatprep.mubr.bf16.mxu0 %v1199
  %2276 = vmatmul.mubr.bf16.gmra.mxu0 %v1198
  %v2277 = vpop.f32.mrf.mxu0
  %v2278 = vadd.f32 %v1474, %v2277
  %v2279 = vpop.f32.mrf.mxu0
  %v2280 = vpop.f32.mrf.mxu0
  %v2281 = vadd.f32 %v1474, %v2280
  %v2282 = vpop.f32.mrf.mxu0
  %2283 = vdwg.mxu0
  %2284 = vmatprep.subr.bf16.mxu0 0
  %2285 = vmatpush1.bf16.msra.mxu0 %v2010
  %2286 = vmatprep.subr.bf16.mxu0 0
  %2287 = vmatpush1.bf16.msra.mxu0 %v2009
  %2288 = vmatprep.subr.bf16.mxu0 0
  %2289 = vmatpush1.bf16.msra.mxu0 %v2008
  %2290 = vmatprep.subr.bf16.mxu0 0
  %2291 = vmatpush1.bf16.msra.mxu0 %v2007
  %2292 = vmatprep.subr.bf16.mxu0 0
  %2293 = vmatpush1.bf16.msra.mxu0 %v2006
  %2294 = vmatprep.subr.bf16.mxu0 0
  %2295 = vmatpush1.bf16.msra.mxu0 %v2005
  %2296 = vmatprep.subr.bf16.mxu0 0
  %2297 = vmatpush1.bf16.msra.mxu0 %v2004
  %2298 = vmatprep.subr.bf16.mxu0 0
  %2299 = vmatpush1.bf16.msra.mxu0 %v2003
  %2300 = vmatprep.subr.bf16.mxu0 0
  %2301 = vmatpush2.bf16.msra.mxu0 %v2018
  %2302 = vmatprep.subr.bf16.mxu0 0
  %2303 = vmatpush2.bf16.msra.mxu0 %v2017
  %2304 = vmatprep.subr.bf16.mxu0 0
  %2305 = vmatpush2.bf16.msra.mxu0 %v2016
  %2306 = vmatprep.subr.bf16.mxu0 0
  %2307 = vmatpush2.bf16.msra.mxu0 %v2015
  %2308 = vmatprep.subr.bf16.mxu0 0
  %2309 = vmatpush2.bf16.msra.mxu0 %v2014
  %2310 = vmatprep.subr.bf16.mxu0 0
  %2311 = vmatpush2.bf16.msra.mxu0 %v2013
  %2312 = vmatprep.subr.bf16.mxu0 0
  %2313 = vmatpush2.bf16.msra.mxu0 %v2012
  %2314 = vmatprep.subr.bf16.mxu0 0
  %2315 = vmatpush2.bf16.msra.mxu0 %v2011
  %2316 = vmatprep.mubr.bf16.mxu0 %v1201
  %2317 = vmatmul.mubr.bf16.gmra.mxu0 %v1200
  %v2318 = vpop.f32.mrf.mxu0
  %v2319 = vadd.f32 %v2278, %v2318
  %v2320 = vpop.f32.mrf.mxu0
  %v2321 = vpop.f32.mrf.mxu0
  %v2322 = vadd.f32 %v2281, %v2321
  %v2323 = vpop.f32.mrf.mxu0
  %2324 = vdwg.mxu0
  %2325 = vmatprep.subr.bf16.mxu0 0
  %2326 = vmatpush1.bf16.msra.mxu0 %v2026
  %2327 = vmatprep.subr.bf16.mxu0 0
  %2328 = vmatpush1.bf16.msra.mxu0 %v2025
  %2329 = vmatprep.subr.bf16.mxu0 0
  %2330 = vmatpush1.bf16.msra.mxu0 %v2024
  %2331 = vmatprep.subr.bf16.mxu0 0
  %2332 = vmatpush1.bf16.msra.mxu0 %v2023
  %2333 = vmatprep.subr.bf16.mxu0 0
  %2334 = vmatpush1.bf16.msra.mxu0 %v2022
  %2335 = vmatprep.subr.bf16.mxu0 0
  %2336 = vmatpush1.bf16.msra.mxu0 %v2021
  %2337 = vmatprep.subr.bf16.mxu0 0
  %2338 = vmatpush1.bf16.msra.mxu0 %v2020
  %2339 = vmatprep.subr.bf16.mxu0 0
  %2340 = vmatpush1.bf16.msra.mxu0 %v2019
  %2341 = vmatprep.subr.bf16.mxu0 0
  %2342 = vmatpush2.bf16.msra.mxu0 %v2034
  %2343 = vmatprep.subr.bf16.mxu0 0
  %2344 = vmatpush2.bf16.msra.mxu0 %v2033
  %2345 = vmatprep.subr.bf16.mxu0 0
  %2346 = vmatpush2.bf16.msra.mxu0 %v2032
  %2347 = vmatprep.subr.bf16.mxu0 0
  %2348 = vmatpush2.bf16.msra.mxu0 %v2031
  %2349 = vmatprep.subr.bf16.mxu0 0
  %2350 = vmatpush2.bf16.msra.mxu0 %v2030
  %2351 = vmatprep.subr.bf16.mxu0 0
  %2352 = vmatpush2.bf16.msra.mxu0 %v2029
  %2353 = vmatprep.subr.bf16.mxu0 0
  %2354 = vmatpush2.bf16.msra.mxu0 %v2028
  %2355 = vmatprep.subr.bf16.mxu0 0
  %2356 = vmatpush2.bf16.msra.mxu0 %v2027
  %2357 = vmatprep.mubr.bf16.mxu0 %v1203
  %2358 = vmatmul.mubr.bf16.gmra.mxu0 %v1202
  %v2359 = vpop.f32.mrf.mxu0
  %v2360 = vadd.f32 %v2319, %v2359
  %v2361 = vpop.f32.mrf.mxu0
  %v2362 = vpop.f32.mrf.mxu0
  %v2363 = vadd.f32 %v2322, %v2362
  %v2364 = vpop.f32.mrf.mxu0
  %2365 = vdwg.mxu0
  %2366 = vmatprep.subr.bf16.mxu0 0
  %2367 = vmatpush1.bf16.msra.mxu0 %v2042
  %2368 = vmatprep.subr.bf16.mxu0 0
  %2369 = vmatpush1.bf16.msra.mxu0 %v2041
  %2370 = vmatprep.subr.bf16.mxu0 0
  %2371 = vmatpush1.bf16.msra.mxu0 %v2040
  %2372 = vmatprep.subr.bf16.mxu0 0
  %2373 = vmatpush1.bf16.msra.mxu0 %v2039
  %2374 = vmatprep.subr.bf16.mxu0 0
  %2375 = vmatpush1.bf16.msra.mxu0 %v2038
  %2376 = vmatprep.subr.bf16.mxu0 0
  %2377 = vmatpush1.bf16.msra.mxu0 %v2037
  %2378 = vmatprep.subr.bf16.mxu0 0
  %2379 = vmatpush1.bf16.msra.mxu0 %v2036
  %2380 = vmatprep.subr.bf16.mxu0 0
  %2381 = vmatpush1.bf16.msra.mxu0 %v2035
  %2382 = vmatprep.subr.bf16.mxu0 0
  %2383 = vmatpush2.bf16.msra.mxu0 %v2050
  %2384 = vmatprep.subr.bf16.mxu0 0
  %2385 = vmatpush2.bf16.msra.mxu0 %v2049
  %2386 = vmatprep.subr.bf16.mxu0 0
  %2387 = vmatpush2.bf16.msra.mxu0 %v2048
  %2388 = vmatprep.subr.bf16.mxu0 0
  %2389 = vmatpush2.bf16.msra.mxu0 %v2047
  %2390 = vmatprep.subr.bf16.mxu0 0
  %2391 = vmatpush2.bf16.msra.mxu0 %v2046
  %2392 = vmatprep.subr.bf16.mxu0 0
  %2393 = vmatpush2.bf16.msra.mxu0 %v2045
  %2394 = vmatprep.subr.bf16.mxu0 0
  %2395 = vmatpush2.bf16.msra.mxu0 %v2044
  %2396 = vmatprep.subr.bf16.mxu0 0
  %2397 = vmatpush2.bf16.msra.mxu0 %v2043
  %2398 = vmatprep.mubr.bf16.mxu0 %v1205
  %2399 = vmatmul.mubr.bf16.gmra.mxu0 %v1204
  %v2400 = vpop.f32.mrf.mxu0
  %v2401 = vadd.f32 %v2360, %v2400
  %v2402 = vpop.f32.mrf.mxu0
  %v2403 = vpop.f32.mrf.mxu0
  %v2404 = vadd.f32 %v2363, %v2403
  %v2405 = vpop.f32.mrf.mxu0
  %2406 = vdwg.mxu0
  %2407 = vmatprep.subr.bf16.mxu0 0
  %2408 = vmatpush1.bf16.msra.mxu0 %v2058
  %2409 = vmatprep.subr.bf16.mxu0 0
  %2410 = vmatpush1.bf16.msra.mxu0 %v2057
  %2411 = vmatprep.subr.bf16.mxu0 0
  %2412 = vmatpush1.bf16.msra.mxu0 %v2056
  %2413 = vmatprep.subr.bf16.mxu0 0
  %2414 = vmatpush1.bf16.msra.mxu0 %v2055
  %2415 = vmatprep.subr.bf16.mxu0 0
  %2416 = vmatpush1.bf16.msra.mxu0 %v2054
  %2417 = vmatprep.subr.bf16.mxu0 0
  %2418 = vmatpush1.bf16.msra.mxu0 %v2053
  %2419 = vmatprep.subr.bf16.mxu0 0
  %2420 = vmatpush1.bf16.msra.mxu0 %v2052
  %2421 = vmatprep.subr.bf16.mxu0 0
  %2422 = vmatpush1.bf16.msra.mxu0 %v2051
  %2423 = vmatprep.subr.bf16.mxu0 0
  %2424 = vmatpush2.bf16.msra.mxu0 %v2066
  %2425 = vmatprep.subr.bf16.mxu0 0
  %2426 = vmatpush2.bf16.msra.mxu0 %v2065
  %2427 = vmatprep.subr.bf16.mxu0 0
  %2428 = vmatpush2.bf16.msra.mxu0 %v2064
  %2429 = vmatprep.subr.bf16.mxu0 0
  %2430 = vmatpush2.bf16.msra.mxu0 %v2063
  %2431 = vmatprep.subr.bf16.mxu0 0
  %2432 = vmatpush2.bf16.msra.mxu0 %v2062
  %2433 = vmatprep.subr.bf16.mxu0 0
  %2434 = vmatpush2.bf16.msra.mxu0 %v2061
  %2435 = vmatprep.subr.bf16.mxu0 0
  %2436 = vmatpush2.bf16.msra.mxu0 %v2060
  %2437 = vmatprep.subr.bf16.mxu0 0
  %2438 = vmatpush2.bf16.msra.mxu0 %v2059
  %2439 = vmatprep.mubr.bf16.mxu0 %v1207
  %2440 = vmatmul.mubr.bf16.gmra.mxu0 %v1206
  %v2441 = vpop.f32.mrf.mxu0
  %v2442 = vadd.f32 %v2401, %v2441
  %v2443 = vpop.f32.mrf.mxu0
  %v2444 = vpop.f32.mrf.mxu0
  %v2445 = vadd.f32 %v2404, %v2444
  %v2446 = vpop.f32.mrf.mxu0
  %2447 = vdwg.mxu0
  %2448 = vmatprep.subr.bf16.mxu0 0
  %2449 = vmatpush1.bf16.msra.mxu0 %v2074
  %2450 = vmatprep.subr.bf16.mxu0 0
  %2451 = vmatpush1.bf16.msra.mxu0 %v2073
  %2452 = vmatprep.subr.bf16.mxu0 0
  %2453 = vmatpush1.bf16.msra.mxu0 %v2072
  %2454 = vmatprep.subr.bf16.mxu0 0
  %2455 = vmatpush1.bf16.msra.mxu0 %v2071
  %2456 = vmatprep.subr.bf16.mxu0 0
  %2457 = vmatpush1.bf16.msra.mxu0 %v2070
  %2458 = vmatprep.subr.bf16.mxu0 0
  %2459 = vmatpush1.bf16.msra.mxu0 %v2069
  %2460 = vmatprep.subr.bf16.mxu0 0
  %2461 = vmatpush1.bf16.msra.mxu0 %v2068
  %2462 = vmatprep.subr.bf16.mxu0 0
  %2463 = vmatpush1.bf16.msra.mxu0 %v2067
  %2464 = vmatprep.subr.bf16.mxu0 0
  %2465 = vmatpush2.bf16.msra.mxu0 %v2082
  %2466 = vmatprep.subr.bf16.mxu0 0
  %2467 = vmatpush2.bf16.msra.mxu0 %v2081
  %2468 = vmatprep.subr.bf16.mxu0 0
  %2469 = vmatpush2.bf16.msra.mxu0 %v2080
  %2470 = vmatprep.subr.bf16.mxu0 0
  %2471 = vmatpush2.bf16.msra.mxu0 %v2079
  %2472 = vmatprep.subr.bf16.mxu0 0
  %2473 = vmatpush2.bf16.msra.mxu0 %v2078
  %2474 = vmatprep.subr.bf16.mxu0 0
  %2475 = vmatpush2.bf16.msra.mxu0 %v2077
  %2476 = vmatprep.subr.bf16.mxu0 0
  %2477 = vmatpush2.bf16.msra.mxu0 %v2076
  %2478 = vmatprep.subr.bf16.mxu0 0
  %2479 = vmatpush2.bf16.msra.mxu0 %v2075
  %2480 = vmatprep.mubr.bf16.mxu0 %v1209
  %2481 = vmatmul.mubr.bf16.gmra.mxu0 %v1208
  %v2482 = vpop.f32.mrf.mxu0
  %v2483 = vadd.f32 %v2442, %v2482
  %v2484 = vpop.f32.mrf.mxu0
  %v2485 = vpop.f32.mrf.mxu0
  %v2486 = vadd.f32 %v2445, %v2485
  %v2487 = vpop.f32.mrf.mxu0
  %2488 = vdwg.mxu0
  %2489 = vmatprep.subr.bf16.mxu0 0
  %2490 = vmatpush1.bf16.msra.mxu0 %v2090
  %2491 = vmatprep.subr.bf16.mxu0 0
  %2492 = vmatpush1.bf16.msra.mxu0 %v2089
  %2493 = vmatprep.subr.bf16.mxu0 0
  %2494 = vmatpush1.bf16.msra.mxu0 %v2088
  %2495 = vmatprep.subr.bf16.mxu0 0
  %2496 = vmatpush1.bf16.msra.mxu0 %v2087
  %2497 = vmatprep.subr.bf16.mxu0 0
  %2498 = vmatpush1.bf16.msra.mxu0 %v2086
  %2499 = vmatprep.subr.bf16.mxu0 0
  %2500 = vmatpush1.bf16.msra.mxu0 %v2085
  %2501 = vmatprep.subr.bf16.mxu0 0
  %2502 = vmatpush1.bf16.msra.mxu0 %v2084
  %2503 = vmatprep.subr.bf16.mxu0 0
  %2504 = vmatpush1.bf16.msra.mxu0 %v2083
  %2505 = vmatprep.subr.bf16.mxu0 0
  %2506 = vmatpush2.bf16.msra.mxu0 %v2098
  %2507 = vmatprep.subr.bf16.mxu0 0
  %2508 = vmatpush2.bf16.msra.mxu0 %v2097
  %2509 = vmatprep.subr.bf16.mxu0 0
  %2510 = vmatpush2.bf16.msra.mxu0 %v2096
  %2511 = vmatprep.subr.bf16.mxu0 0
  %2512 = vmatpush2.bf16.msra.mxu0 %v2095
  %2513 = vmatprep.subr.bf16.mxu0 0
  %2514 = vmatpush2.bf16.msra.mxu0 %v2094
  %2515 = vmatprep.subr.bf16.mxu0 0
  %2516 = vmatpush2.bf16.msra.mxu0 %v2093
  %2517 = vmatprep.subr.bf16.mxu0 0
  %2518 = vmatpush2.bf16.msra.mxu0 %v2092
  %2519 = vmatprep.subr.bf16.mxu0 0
  %2520 = vmatpush2.bf16.msra.mxu0 %v2091
  %2521 = vmatprep.mubr.bf16.mxu0 %v1211
  %2522 = vmatmul.mubr.bf16.gmra.mxu0 %v1210
  %v2523 = vpop.f32.mrf.mxu0
  %v2524 = vadd.f32 %v2483, %v2523
  %v2525 = vpop.f32.mrf.mxu0
  %v2526 = vpop.f32.mrf.mxu0
  %v2527 = vadd.f32 %v2486, %v2526
  %v2528 = vpop.f32.mrf.mxu0
  %2529 = vdwg.mxu0
  %2530 = vmatprep.subr.bf16.mxu0 0
  %2531 = vmatpush1.bf16.msra.mxu0 %v2106
  %2532 = vmatprep.subr.bf16.mxu0 0
  %2533 = vmatpush1.bf16.msra.mxu0 %v2105
  %2534 = vmatprep.subr.bf16.mxu0 0
  %2535 = vmatpush1.bf16.msra.mxu0 %v2104
  %2536 = vmatprep.subr.bf16.mxu0 0
  %2537 = vmatpush1.bf16.msra.mxu0 %v2103
  %2538 = vmatprep.subr.bf16.mxu0 0
  %2539 = vmatpush1.bf16.msra.mxu0 %v2102
  %2540 = vmatprep.subr.bf16.mxu0 0
  %2541 = vmatpush1.bf16.msra.mxu0 %v2101
  %2542 = vmatprep.subr.bf16.mxu0 0
  %2543 = vmatpush1.bf16.msra.mxu0 %v2100
  %2544 = vmatprep.subr.bf16.mxu0 0
  %2545 = vmatpush1.bf16.msra.mxu0 %v2099
  %2546 = vmatprep.subr.bf16.mxu0 0
  %2547 = vmatpush2.bf16.msra.mxu0 %v2114
  %2548 = vmatprep.subr.bf16.mxu0 0
  %2549 = vmatpush2.bf16.msra.mxu0 %v2113
  %2550 = vmatprep.subr.bf16.mxu0 0
  %2551 = vmatpush2.bf16.msra.mxu0 %v2112
  %2552 = vmatprep.subr.bf16.mxu0 0
  %2553 = vmatpush2.bf16.msra.mxu0 %v2111
  %2554 = vmatprep.subr.bf16.mxu0 0
  %2555 = vmatpush2.bf16.msra.mxu0 %v2110
  %2556 = vmatprep.subr.bf16.mxu0 0
  %2557 = vmatpush2.bf16.msra.mxu0 %v2109
  %2558 = vmatprep.subr.bf16.mxu0 0
  %2559 = vmatpush2.bf16.msra.mxu0 %v2108
  %2560 = vmatprep.subr.bf16.mxu0 0
  %2561 = vmatpush2.bf16.msra.mxu0 %v2107
  %2562 = vmatprep.mubr.bf16.mxu0 %v1213
  %2563 = vmatmul.mubr.bf16.gmra.mxu0 %v1212
  %v2564 = vpop.f32.mrf.mxu0
  %v2565 = vadd.f32 %v2524, %v2564
  %v2566 = vpop.f32.mrf.mxu0
  %v2567 = vpop.f32.mrf.mxu0
  %v2568 = vadd.f32 %v2527, %v2567
  %v2569 = vpop.f32.mrf.mxu0
  %2570 = vdwg.mxu0
  %v2571 = vadd.f32 %v347, %v2565
  %v2572 = vadd.f32 %v348, %v2568
  %v2573 = vld [vmem:[%s13] sm:$0x1]
  %v2574 = vld [vmem:[%s14] sm:$0x1]
  %v2575 = vsel %vm179, %v2571, 0.0
  %2576 = vadd.xlane.f32.xlu0 %v2575
  %v2577 = vpop.xlane.xlu0 %2576
  %v2578 = vsel %vm179, %v2572, 0.0
  %2579 = vadd.xlane.f32.xlu0 %v2578
  %v2580 = vpop.xlane.xlu0 %2579
  %v2581 = vmul.f32 %v2577, %v316
  %v2582 = vmul.f32 %v2580, %v316
  %v2583 = vsub.f32 %v2571, %v2581
  %v2584 = vsub.f32 %v2572, %v2582
  %v2585 = vmul.f32 %v2583, %v2583
  %v2586 = vmul.f32 %v2584, %v2584
  %v2587 = vsel %vm179, %v2585, 0.0
  %2588 = vadd.xlane.f32.xlu0 %v2587
  %v2589 = vpop.xlane.xlu0 %2588
  %v2590 = vsel %vm179, %v2586, 0.0
  %2591 = vadd.xlane.f32.xlu0 %v2590
  %v2592 = vpop.xlane.xlu0 %2591
  %v2593 = vmul.f32 %v2589, %v316
  %v2594 = vmul.f32 %v2592, %v316
  %v2595 = vadd.f32 %v2593, 1e-05
  %v2596 = vadd.f32 %v2594, 1e-05
  %v2597 = vrsqrt.pop %v2595
  %v2598 = vrsqrt.pop %v2596
  %v2599 = vmul.f32 %v2583, %v2597
  %v2600 = vmul.f32 %v2584, %v2598
  %v2601 = vlaneseq
  %v2602 = vshrl.u32 %v2601, 7
  %v2603 = vsub.s32 0, %v2602
  %v2604 = vrot.slane %v2573, %v2603
  %v2605 = vmul.f32 %v2599, %v2604
  %v2606 = vmul.f32 %v2600, %v2604
  %v2607 = vlaneseq
  %v2608 = vshrl.u32 %v2607, 7
  %v2609 = vsub.s32 0, %v2608
  %v2610 = vrot.slane %v2574, %v2609
  %v2611 = vadd.f32 %v2605, %v2610
  %v2612 = vadd.f32 %v2606, %v2610
  %v2613 = vpack.c.bf16 %v2612, %v2611
  %s2614 = scalar_lea.vmem %s3, 32
  %v2615 = vld [vmem:[%s2614] sm:$0xf]
  %v2616 = vld [vmem:[%s2614 + $0x4] sm:$0xf]
  %v2617 = vld [vmem:[%s2614 + $0x8] sm:$0xf]
  %v2618 = vld [vmem:[%s2614 + $0xc] sm:$0xf]
  %v2619 = vld [vmem:[%s2614 + $0x10] sm:$0xf]
  %v2620 = vld [vmem:[%s2614 + $0x14] sm:$0xf]
  %v2621 = vld [vmem:[%s2614 + $0x18] sm:$0xf]
  %v2622 = vld [vmem:[%s2614 + $0x1c] sm:$0xf]
  %v2623 = vld [vmem:[%s4 + $0x1] sm:$0x1]
  %v2624 = vlaneseq
  %v2625 = vshrl.u32 %v2624, 7
  %v2626 = vsub.s32 0, %v2625
  %v2627 = vrot.slane %v2623, %v2626
  %v2636 = vunpack.c.l.b16 %v2615
  %v2637 = vunpack.c.l.b16 %v2616
  %v2638 = vunpack.c.l.b16 %v2617
  %v2639 = vunpack.c.l.b16 %v2618
  %v2640 = vunpack.c.l.b16 %v2619
  %v2641 = vunpack.c.l.b16 %v2620
  %v2642 = vunpack.c.l.b16 %v2621
  %v2643 = vunpack.c.l.b16 %v2622
  %v2644 = vpack.c.b16 %v2637, %v2636
  %v2645 = vpack.c.b16 %v2639, %v2638
  %v2646 = vpack.c.b16 %v2641, %v2640
  %v2647 = vpack.c.b16 %v2643, %v2642
  %v2653 = vsel %vm179, %v2613, 0
  %2655 = vmatprep.subr.bf16.mxu0 0
  %2656 = vmatpush1.bf16.msra.mxu0 0
  %2657 = vmatprep.subr.bf16.mxu0 0
  %2658 = vmatpush1.bf16.msra.mxu0 0
  %2659 = vmatprep.subr.bf16.mxu0 0
  %2660 = vmatpush1.bf16.msra.mxu0 0
  %2661 = vmatprep.subr.bf16.mxu0 0
  %2662 = vmatpush1.bf16.msra.mxu0 0
  %2663 = vmatprep.subr.bf16.mxu0 0
  %2664 = vmatpush1.bf16.msra.mxu0 %v2647
  %2665 = vmatprep.subr.bf16.mxu0 0
  %2666 = vmatpush1.bf16.msra.mxu0 %v2646
  %2667 = vmatprep.subr.bf16.mxu0 0
  %2668 = vmatpush1.bf16.msra.mxu0 %v2645
  %2669 = vmatprep.subr.bf16.mxu0 0
  %2670 = vmatpush1.bf16.msra.mxu0 %v2644
  %2671 = vmatprep.subr.bf16.mxu0 0
  %2672 = vmatpush2.bf16.msra.mxu0 0
  %2673 = vmatprep.subr.bf16.mxu0 0
  %2674 = vmatpush2.bf16.msra.mxu0 0
  %2675 = vmatprep.subr.bf16.mxu0 0
  %2676 = vmatpush2.bf16.msra.mxu0 0
  %2677 = vmatprep.subr.bf16.mxu0 0
  %2678 = vmatpush2.bf16.msra.mxu0 0
  %2679 = vmatprep.subr.bf16.mxu0 0
  %2680 = vmatpush2.bf16.msra.mxu0 0
  %2681 = vmatprep.subr.bf16.mxu0 0
  %2682 = vmatpush2.bf16.msra.mxu0 0
  %2683 = vmatprep.subr.bf16.mxu0 0
  %2684 = vmatpush2.bf16.msra.mxu0 0
  %2685 = vmatprep.subr.bf16.mxu0 0
  %2686 = vmatpush2.bf16.msra.mxu0 0
  %2687 = vmatprep.mubr.bf16.mxu0 0
  %2688 = vmatmul.mubr.bf16.gmra.mxu0 %v2653
  %v2689 = vpop.f32.mrf.mxu0
  %v2690 = vadd.f32 %v2627, %v2689
  %v2691 = vpop.f32.mrf.mxu0
  %v2692 = vpop.f32.mrf.mxu0
  %v2693 = vadd.f32 %v2627, %v2692
  %v2694 = vpop.f32.mrf.mxu0
  %2695 = vdwg.mxu0
  %v2696 = vpack.c.bf16 %v2693, %v2690
  %s2697 = scalar_lea.vmem %s5, 32
  %v2698 = vld [vmem:[%s2697] sm:$0xf]
  %v2699 = vld [vmem:[%s2697 + $0x4] sm:$0xf]
  %v2700 = vld [vmem:[%s2697 + $0x8] sm:$0xf]
  %v2701 = vld [vmem:[%s2697 + $0xc] sm:$0xf]
  %v2702 = vld [vmem:[%s2697 + $0x10] sm:$0xf]
  %v2703 = vld [vmem:[%s2697 + $0x14] sm:$0xf]
  %v2704 = vld [vmem:[%s2697 + $0x18] sm:$0xf]
  %v2705 = vld [vmem:[%s2697 + $0x1c] sm:$0xf]
  %v2706 = vld [vmem:[%s6 + $0x1] sm:$0x1]
  %v2707 = vlaneseq
  %v2708 = vshrl.u32 %v2707, 7
  %v2709 = vsub.s32 0, %v2708
  %v2710 = vrot.slane %v2706, %v2709
  %v2719 = vunpack.c.l.b16 %v2698
  %v2720 = vunpack.c.l.b16 %v2699
  %v2721 = vunpack.c.l.b16 %v2700
  %v2722 = vunpack.c.l.b16 %v2701
  %v2723 = vunpack.c.l.b16 %v2702
  %v2724 = vunpack.c.l.b16 %v2703
  %v2725 = vunpack.c.l.b16 %v2704
  %v2726 = vunpack.c.l.b16 %v2705
  %v2727 = vpack.c.b16 %v2720, %v2719
  %v2728 = vpack.c.b16 %v2722, %v2721
  %v2729 = vpack.c.b16 %v2724, %v2723
  %v2730 = vpack.c.b16 %v2726, %v2725
  %v2736 = vsel %vm179, %v2696, 0
  %2738 = vmatprep.subr.bf16.mxu0 0
  %2739 = vmatpush1.bf16.msra.mxu0 0
  %2740 = vmatprep.subr.bf16.mxu0 0
  %2741 = vmatpush1.bf16.msra.mxu0 0
  %2742 = vmatprep.subr.bf16.mxu0 0
  %2743 = vmatpush1.bf16.msra.mxu0 0
  %2744 = vmatprep.subr.bf16.mxu0 0
  %2745 = vmatpush1.bf16.msra.mxu0 0
  %2746 = vmatprep.subr.bf16.mxu0 0
  %2747 = vmatpush1.bf16.msra.mxu0 %v2730
  %2748 = vmatprep.subr.bf16.mxu0 0
  %2749 = vmatpush1.bf16.msra.mxu0 %v2729
  %2750 = vmatprep.subr.bf16.mxu0 0
  %2751 = vmatpush1.bf16.msra.mxu0 %v2728
  %2752 = vmatprep.subr.bf16.mxu0 0
  %2753 = vmatpush1.bf16.msra.mxu0 %v2727
  %2754 = vmatprep.subr.bf16.mxu0 0
  %2755 = vmatpush2.bf16.msra.mxu0 0
  %2756 = vmatprep.subr.bf16.mxu0 0
  %2757 = vmatpush2.bf16.msra.mxu0 0
  %2758 = vmatprep.subr.bf16.mxu0 0
  %2759 = vmatpush2.bf16.msra.mxu0 0
  %2760 = vmatprep.subr.bf16.mxu0 0
  %2761 = vmatpush2.bf16.msra.mxu0 0
  %2762 = vmatprep.subr.bf16.mxu0 0
  %2763 = vmatpush2.bf16.msra.mxu0 0
  %2764 = vmatprep.subr.bf16.mxu0 0
  %2765 = vmatpush2.bf16.msra.mxu0 0
  %2766 = vmatprep.subr.bf16.mxu0 0
  %2767 = vmatpush2.bf16.msra.mxu0 0
  %2768 = vmatprep.subr.bf16.mxu0 0
  %2769 = vmatpush2.bf16.msra.mxu0 0
  %2770 = vmatprep.mubr.bf16.mxu0 0
  %2771 = vmatmul.mubr.bf16.gmra.mxu0 %v2736
  %v2772 = vpop.f32.mrf.mxu0
  %v2773 = vadd.f32 %v2710, %v2772
  %v2774 = vpop.f32.mrf.mxu0
  %v2775 = vpop.f32.mrf.mxu0
  %v2776 = vadd.f32 %v2710, %v2775
  %v2777 = vpop.f32.mrf.mxu0
  %2778 = vdwg.mxu0
  %v2779 = vadd.f32 %v2611, %v2773
  %v2780 = vadd.f32 %v2612, %v2776
  %v2781 = vld [vmem:[%s11 + $0x1] sm:$0x1]
  %v2782 = vld [vmem:[%s12 + $0x1] sm:$0x1]
  %v2783 = vsel %vm179, %v2779, 0.0
  %2784 = vadd.xlane.f32.xlu0 %v2783
  %v2785 = vpop.xlane.xlu0 %2784
  %v2786 = vsel %vm179, %v2780, 0.0
  %2787 = vadd.xlane.f32.xlu0 %v2786
  %v2788 = vpop.xlane.xlu0 %2787
  %v2789 = vmul.f32 %v2785, %v316
  %v2790 = vmul.f32 %v2788, %v316
  %v2791 = vsub.f32 %v2779, %v2789
  %v2792 = vsub.f32 %v2780, %v2790
  %v2793 = vmul.f32 %v2791, %v2791
  %v2794 = vmul.f32 %v2792, %v2792
  %v2795 = vsel %vm179, %v2793, 0.0
  %2796 = vadd.xlane.f32.xlu0 %v2795
  %v2797 = vpop.xlane.xlu0 %2796
  %v2798 = vsel %vm179, %v2794, 0.0
  %2799 = vadd.xlane.f32.xlu0 %v2798
  %v2800 = vpop.xlane.xlu0 %2799
  %v2801 = vmul.f32 %v2797, %v316
  %v2802 = vmul.f32 %v2800, %v316
  %v2803 = vadd.f32 %v2801, 1e-05
  %v2804 = vadd.f32 %v2802, 1e-05
  %v2805 = vrsqrt.pop %v2803
  %v2806 = vrsqrt.pop %v2804
  %v2807 = vmul.f32 %v2791, %v2805
  %v2808 = vmul.f32 %v2792, %v2806
  %v2809 = vlaneseq
  %v2810 = vshrl.u32 %v2809, 7
  %v2811 = vsub.s32 0, %v2810
  %v2812 = vrot.slane %v2781, %v2811
  %v2813 = vmul.f32 %v2807, %v2812
  %v2814 = vmul.f32 %v2808, %v2812
  %v2815 = vlaneseq
  %v2816 = vshrl.u32 %v2815, 7
  %v2817 = vsub.s32 0, %v2816
  %v2818 = vrot.slane %v2782, %v2817
  %v2819 = vadd.f32 %v2813, %v2818
  %v2820 = vadd.f32 %v2814, %v2818
  %v2821 = vpack.c.bf16 %v2820, %v2819
  %s2822 = scalar_lea.vmem %s7, 512
  %v2823 = vld [vmem:[%s2822] sm:$0xff]
  %v2824 = vld [vmem:[%s2822 + $0x8] sm:$0xff]
  %v2825 = vld [vmem:[%s2822 + $0x10] sm:$0xff]
  %v2826 = vld [vmem:[%s2822 + $0x18] sm:$0xff]
  %v2827 = vld [vmem:[%s2822 + $0x20] sm:$0xff]
  %v2828 = vld [vmem:[%s2822 + $0x28] sm:$0xff]
  %v2829 = vld [vmem:[%s2822 + $0x30] sm:$0xff]
  %v2830 = vld [vmem:[%s2822 + $0x38] sm:$0xff]
  %v2831 = vld [vmem:[%s2822 + $0x40] sm:$0xff]
  %v2832 = vld [vmem:[%s2822 + $0x48] sm:$0xff]
  %v2833 = vld [vmem:[%s2822 + $0x50] sm:$0xff]
  %v2834 = vld [vmem:[%s2822 + $0x58] sm:$0xff]
  %v2835 = vld [vmem:[%s2822 + $0x60] sm:$0xff]
  %v2836 = vld [vmem:[%s2822 + $0x68] sm:$0xff]
  %v2837 = vld [vmem:[%s2822 + $0x70] sm:$0xff]
  %v2838 = vld [vmem:[%s2822 + $0x78] sm:$0xff]
  %v2839 = vld [vmem:[%s2822 + $0x80] sm:$0xff]
  %v2840 = vld [vmem:[%s2822 + $0x88] sm:$0xff]
  %v2841 = vld [vmem:[%s2822 + $0x90] sm:$0xff]
  %v2842 = vld [vmem:[%s2822 + $0x98] sm:$0xff]
  %v2843 = vld [vmem:[%s2822 + $0xa0] sm:$0xff]
  %v2844 = vld [vmem:[%s2822 + $0xa8] sm:$0xff]
  %v2845 = vld [vmem:[%s2822 + $0xb0] sm:$0xff]
  %v2846 = vld [vmem:[%s2822 + $0xb8] sm:$0xff]
  %v2847 = vld [vmem:[%s2822 + $0xc0] sm:$0xff]
  %v2848 = vld [vmem:[%s2822 + $0xc8] sm:$0xff]
  %v2849 = vld [vmem:[%s2822 + $0xd0] sm:$0xff]
  %v2850 = vld [vmem:[%s2822 + $0xd8] sm:$0xff]
  %v2851 = vld [vmem:[%s2822 + $0xe0] sm:$0xff]
  %v2852 = vld [vmem:[%s2822 + $0xe8] sm:$0xff]
  %v2853 = vld [vmem:[%s2822 + $0xf0] sm:$0xff]
  %v2854 = vld [vmem:[%s2822 + $0xf8] sm:$0xff]
  %v2855 = vld [vmem:[%s2822 + $0x100] sm:$0xff]
  %v2856 = vld [vmem:[%s2822 + $0x108] sm:$0xff]
  %v2857 = vld [vmem:[%s2822 + $0x110] sm:$0xff]
  %v2858 = vld [vmem:[%s2822 + $0x118] sm:$0xff]
  %v2859 = vld [vmem:[%s2822 + $0x120] sm:$0xff]
  %v2860 = vld [vmem:[%s2822 + $0x128] sm:$0xff]
  %v2861 = vld [vmem:[%s2822 + $0x130] sm:$0xff]
  %v2862 = vld [vmem:[%s2822 + $0x138] sm:$0xff]
  %v2863 = vld [vmem:[%s2822 + $0x140] sm:$0xff]
  %v2864 = vld [vmem:[%s2822 + $0x148] sm:$0xff]
  %v2865 = vld [vmem:[%s2822 + $0x150] sm:$0xff]
  %v2866 = vld [vmem:[%s2822 + $0x158] sm:$0xff]
  %v2867 = vld [vmem:[%s2822 + $0x160] sm:$0xff]
  %v2868 = vld [vmem:[%s2822 + $0x168] sm:$0xff]
  %v2869 = vld [vmem:[%s2822 + $0x170] sm:$0xff]
  %v2870 = vld [vmem:[%s2822 + $0x178] sm:$0xff]
  %v2871 = vld [vmem:[%s2822 + $0x180] sm:$0xff]
  %v2872 = vld [vmem:[%s2822 + $0x188] sm:$0xff]
  %v2873 = vld [vmem:[%s2822 + $0x190] sm:$0xff]
  %v2874 = vld [vmem:[%s2822 + $0x198] sm:$0xff]
  %v2875 = vld [vmem:[%s2822 + $0x1a0] sm:$0xff]
  %v2876 = vld [vmem:[%s2822 + $0x1a8] sm:$0xff]
  %v2877 = vld [vmem:[%s2822 + $0x1b0] sm:$0xff]
  %v2878 = vld [vmem:[%s2822 + $0x1b8] sm:$0xff]
  %v2879 = vld [vmem:[%s2822 + $0x1c0] sm:$0xff]
  %v2880 = vld [vmem:[%s2822 + $0x1c8] sm:$0xff]
  %v2881 = vld [vmem:[%s2822 + $0x1d0] sm:$0xff]
  %v2882 = vld [vmem:[%s2822 + $0x1d8] sm:$0xff]
  %v2883 = vld [vmem:[%s2822 + $0x1e0] sm:$0xff]
  %v2884 = vld [vmem:[%s2822 + $0x1e8] sm:$0xff]
  %v2885 = vld [vmem:[%s2822 + $0x1f0] sm:$0xff]
  %v2886 = vld [vmem:[%s2822 + $0x1f8] sm:$0xff]
  %s2887 = scalar_lea.vmem %s8, 1
  %v2888 = vld [vmem:[%s2887] ss:$2 sm:$0xff]
  %s2889 = scalar_lea.vmem %s8, 17
  %v2890 = vld [vmem:[%s2889] ss:$2 sm:$0xff]
  %v2893 = vlaneseq
  %v2894 = vshrl.u32 %v2893, 7
  %v2895 = vsub.s32 0, %v2894
  %v2896 = vrot.slane %v2888, %v2895
  %v2897 = vlaneseq
  %v2898 = vshrl.u32 %v2897, 7
  %v2899 = vsub.s32 1, %v2898
  %v2900 = vrot.slane %v2888, %v2899
  %v2901 = vlaneseq
  %v2902 = vshrl.u32 %v2901, 7
  %v2903 = vsub.s32 2, %v2902
  %v2904 = vrot.slane %v2888, %v2903
  %v2905 = vlaneseq
  %v2906 = vshrl.u32 %v2905, 7
  %v2907 = vsub.s32 3, %v2906
  %v2908 = vrot.slane %v2888, %v2907
  %v2909 = vlaneseq
  %v2910 = vshrl.u32 %v2909, 7
  %v2911 = vsub.s32 4, %v2910
  %v2912 = vrot.slane %v2888, %v2911
  %v2913 = vlaneseq
  %v2914 = vshrl.u32 %v2913, 7
  %v2915 = vsub.s32 5, %v2914
  %v2916 = vrot.slane %v2888, %v2915
  %v2917 = vlaneseq
  %v2918 = vshrl.u32 %v2917, 7
  %v2919 = vsub.s32 6, %v2918
  %v2920 = vrot.slane %v2888, %v2919
  %v2921 = vlaneseq
  %v2922 = vshrl.u32 %v2921, 7
  %v2923 = vsub.s32 7, %v2922
  %v2924 = vrot.slane %v2888, %v2923
  %v2925 = vlaneseq
  %v2926 = vshrl.u32 %v2925, 7
  %v2927 = vsub.s32 0, %v2926
  %v2928 = vrot.slane %v2890, %v2927
  %v2929 = vlaneseq
  %v2930 = vshrl.u32 %v2929, 7
  %v2931 = vsub.s32 1, %v2930
  %v2932 = vrot.slane %v2890, %v2931
  %v2933 = vlaneseq
  %v2934 = vshrl.u32 %v2933, 7
  %v2935 = vsub.s32 2, %v2934
  %v2936 = vrot.slane %v2890, %v2935
  %v2937 = vlaneseq
  %v2938 = vshrl.u32 %v2937, 7
  %v2939 = vsub.s32 3, %v2938
  %v2940 = vrot.slane %v2890, %v2939
  %v2941 = vlaneseq
  %v2942 = vshrl.u32 %v2941, 7
  %v2943 = vsub.s32 4, %v2942
  %v2944 = vrot.slane %v2890, %v2943
  %v2945 = vlaneseq
  %v2946 = vshrl.u32 %v2945, 7
  %v2947 = vsub.s32 5, %v2946
  %v2948 = vrot.slane %v2890, %v2947
  %v2949 = vlaneseq
  %v2950 = vshrl.u32 %v2949, 7
  %v2951 = vsub.s32 6, %v2950
  %v2952 = vrot.slane %v2890, %v2951
  %v2953 = vlaneseq
  %v2954 = vshrl.u32 %v2953, 7
  %v2955 = vsub.s32 7, %v2954
  %v2956 = vrot.slane %v2890, %v2955
  %v3037 = vunpack.c.l.b16 %v2823
  %v3038 = vunpack.c.h.b16 %v2823
  %v3039 = vunpack.c.l.b16 %v2824
  %v3040 = vunpack.c.h.b16 %v2824
  %v3041 = vunpack.c.l.b16 %v2825
  %v3042 = vunpack.c.h.b16 %v2825
  %v3043 = vunpack.c.l.b16 %v2826
  %v3044 = vunpack.c.h.b16 %v2826
  %v3045 = vunpack.c.l.b16 %v2827
  %v3046 = vunpack.c.h.b16 %v2827
  %v3047 = vunpack.c.l.b16 %v2828
  %v3048 = vunpack.c.h.b16 %v2828
  %v3049 = vunpack.c.l.b16 %v2829
  %v3050 = vunpack.c.h.b16 %v2829
  %v3051 = vunpack.c.l.b16 %v2830
  %v3052 = vunpack.c.h.b16 %v2830
  %v3053 = vunpack.c.l.b16 %v2831
  %v3054 = vunpack.c.h.b16 %v2831
  %v3055 = vunpack.c.l.b16 %v2832
  %v3056 = vunpack.c.h.b16 %v2832
  %v3057 = vunpack.c.l.b16 %v2833
  %v3058 = vunpack.c.h.b16 %v2833
  %v3059 = vunpack.c.l.b16 %v2834
  %v3060 = vunpack.c.h.b16 %v2834
  %v3061 = vunpack.c.l.b16 %v2835
  %v3062 = vunpack.c.h.b16 %v2835
  %v3063 = vunpack.c.l.b16 %v2836
  %v3064 = vunpack.c.h.b16 %v2836
  %v3065 = vunpack.c.l.b16 %v2837
  %v3066 = vunpack.c.h.b16 %v2837
  %v3067 = vunpack.c.l.b16 %v2838
  %v3068 = vunpack.c.h.b16 %v2838
  %v3069 = vunpack.c.l.b16 %v2839
  %v3070 = vunpack.c.h.b16 %v2839
  %v3071 = vunpack.c.l.b16 %v2840
  %v3072 = vunpack.c.h.b16 %v2840
  %v3073 = vunpack.c.l.b16 %v2841
  %v3074 = vunpack.c.h.b16 %v2841
  %v3075 = vunpack.c.l.b16 %v2842
  %v3076 = vunpack.c.h.b16 %v2842
  %v3077 = vunpack.c.l.b16 %v2843
  %v3078 = vunpack.c.h.b16 %v2843
  %v3079 = vunpack.c.l.b16 %v2844
  %v3080 = vunpack.c.h.b16 %v2844
  %v3081 = vunpack.c.l.b16 %v2845
  %v3082 = vunpack.c.h.b16 %v2845
  %v3083 = vunpack.c.l.b16 %v2846
  %v3084 = vunpack.c.h.b16 %v2846
  %v3085 = vunpack.c.l.b16 %v2847
  %v3086 = vunpack.c.h.b16 %v2847
  %v3087 = vunpack.c.l.b16 %v2848
  %v3088 = vunpack.c.h.b16 %v2848
  %v3089 = vunpack.c.l.b16 %v2849
  %v3090 = vunpack.c.h.b16 %v2849
  %v3091 = vunpack.c.l.b16 %v2850
  %v3092 = vunpack.c.h.b16 %v2850
  %v3093 = vunpack.c.l.b16 %v2851
  %v3094 = vunpack.c.h.b16 %v2851
  %v3095 = vunpack.c.l.b16 %v2852
  %v3096 = vunpack.c.h.b16 %v2852
  %v3097 = vunpack.c.l.b16 %v2853
  %v3098 = vunpack.c.h.b16 %v2853
  %v3099 = vunpack.c.l.b16 %v2854
  %v3100 = vunpack.c.h.b16 %v2854
  %v3101 = vunpack.c.l.b16 %v2855
  %v3102 = vunpack.c.h.b16 %v2855
  %v3103 = vunpack.c.l.b16 %v2856
  %v3104 = vunpack.c.h.b16 %v2856
  %v3105 = vunpack.c.l.b16 %v2857
  %v3106 = vunpack.c.h.b16 %v2857
  %v3107 = vunpack.c.l.b16 %v2858
  %v3108 = vunpack.c.h.b16 %v2858
  %v3109 = vunpack.c.l.b16 %v2859
  %v3110 = vunpack.c.h.b16 %v2859
  %v3111 = vunpack.c.l.b16 %v2860
  %v3112 = vunpack.c.h.b16 %v2860
  %v3113 = vunpack.c.l.b16 %v2861
  %v3114 = vunpack.c.h.b16 %v2861
  %v3115 = vunpack.c.l.b16 %v2862
  %v3116 = vunpack.c.h.b16 %v2862
  %v3117 = vunpack.c.l.b16 %v2863
  %v3118 = vunpack.c.h.b16 %v2863
  %v3119 = vunpack.c.l.b16 %v2864
  %v3120 = vunpack.c.h.b16 %v2864
  %v3121 = vunpack.c.l.b16 %v2865
  %v3122 = vunpack.c.h.b16 %v2865
  %v3123 = vunpack.c.l.b16 %v2866
  %v3124 = vunpack.c.h.b16 %v2866
  %v3125 = vunpack.c.l.b16 %v2867
  %v3126 = vunpack.c.h.b16 %v2867
  %v3127 = vunpack.c.l.b16 %v2868
  %v3128 = vunpack.c.h.b16 %v2868
  %v3129 = vunpack.c.l.b16 %v2869
  %v3130 = vunpack.c.h.b16 %v2869
  %v3131 = vunpack.c.l.b16 %v2870
  %v3132 = vunpack.c.h.b16 %v2870
  %v3133 = vunpack.c.l.b16 %v2871
  %v3134 = vunpack.c.h.b16 %v2871
  %v3135 = vunpack.c.l.b16 %v2872
  %v3136 = vunpack.c.h.b16 %v2872
  %v3137 = vunpack.c.l.b16 %v2873
  %v3138 = vunpack.c.h.b16 %v2873
  %v3139 = vunpack.c.l.b16 %v2874
  %v3140 = vunpack.c.h.b16 %v2874
  %v3141 = vunpack.c.l.b16 %v2875
  %v3142 = vunpack.c.h.b16 %v2875
  %v3143 = vunpack.c.l.b16 %v2876
  %v3144 = vunpack.c.h.b16 %v2876
  %v3145 = vunpack.c.l.b16 %v2877
  %v3146 = vunpack.c.h.b16 %v2877
  %v3147 = vunpack.c.l.b16 %v2878
  %v3148 = vunpack.c.h.b16 %v2878
  %v3149 = vunpack.c.l.b16 %v2879
  %v3150 = vunpack.c.h.b16 %v2879
  %v3151 = vunpack.c.l.b16 %v2880
  %v3152 = vunpack.c.h.b16 %v2880
  %v3153 = vunpack.c.l.b16 %v2881
  %v3154 = vunpack.c.h.b16 %v2881
  %v3155 = vunpack.c.l.b16 %v2882
  %v3156 = vunpack.c.h.b16 %v2882
  %v3157 = vunpack.c.l.b16 %v2883
  %v3158 = vunpack.c.h.b16 %v2883
  %v3159 = vunpack.c.l.b16 %v2884
  %v3160 = vunpack.c.h.b16 %v2884
  %v3161 = vunpack.c.l.b16 %v2885
  %v3162 = vunpack.c.h.b16 %v2885
  %v3163 = vunpack.c.l.b16 %v2886
  %v3164 = vunpack.c.h.b16 %v2886
  %v3165 = vpack.c.b16 %v3053, %v3037
  %v3166 = vpack.c.b16 %v3054, %v3038
  %v3167 = vpack.c.b16 %v3055, %v3039
  %v3168 = vpack.c.b16 %v3056, %v3040
  %v3169 = vpack.c.b16 %v3057, %v3041
  %v3170 = vpack.c.b16 %v3058, %v3042
  %v3171 = vpack.c.b16 %v3059, %v3043
  %v3172 = vpack.c.b16 %v3060, %v3044
  %v3173 = vpack.c.b16 %v3061, %v3045
  %v3174 = vpack.c.b16 %v3062, %v3046
  %v3175 = vpack.c.b16 %v3063, %v3047
  %v3176 = vpack.c.b16 %v3064, %v3048
  %v3177 = vpack.c.b16 %v3065, %v3049
  %v3178 = vpack.c.b16 %v3066, %v3050
  %v3179 = vpack.c.b16 %v3067, %v3051
  %v3180 = vpack.c.b16 %v3068, %v3052
  %v3181 = vpack.c.b16 %v3085, %v3069
  %v3182 = vpack.c.b16 %v3086, %v3070
  %v3183 = vpack.c.b16 %v3087, %v3071
  %v3184 = vpack.c.b16 %v3088, %v3072
  %v3185 = vpack.c.b16 %v3089, %v3073
  %v3186 = vpack.c.b16 %v3090, %v3074
  %v3187 = vpack.c.b16 %v3091, %v3075
  %v3188 = vpack.c.b16 %v3092, %v3076
  %v3189 = vpack.c.b16 %v3093, %v3077
  %v3190 = vpack.c.b16 %v3094, %v3078
  %v3191 = vpack.c.b16 %v3095, %v3079
  %v3192 = vpack.c.b16 %v3096, %v3080
  %v3193 = vpack.c.b16 %v3097, %v3081
  %v3194 = vpack.c.b16 %v3098, %v3082
  %v3195 = vpack.c.b16 %v3099, %v3083
  %v3196 = vpack.c.b16 %v3100, %v3084
  %v3197 = vpack.c.b16 %v3117, %v3101
  %v3198 = vpack.c.b16 %v3118, %v3102
  %v3199 = vpack.c.b16 %v3119, %v3103
  %v3200 = vpack.c.b16 %v3120, %v3104
  %v3201 = vpack.c.b16 %v3121, %v3105
  %v3202 = vpack.c.b16 %v3122, %v3106
  %v3203 = vpack.c.b16 %v3123, %v3107
  %v3204 = vpack.c.b16 %v3124, %v3108
  %v3205 = vpack.c.b16 %v3125, %v3109
  %v3206 = vpack.c.b16 %v3126, %v3110
  %v3207 = vpack.c.b16 %v3127, %v3111
  %v3208 = vpack.c.b16 %v3128, %v3112
  %v3209 = vpack.c.b16 %v3129, %v3113
  %v3210 = vpack.c.b16 %v3130, %v3114
  %v3211 = vpack.c.b16 %v3131, %v3115
  %v3212 = vpack.c.b16 %v3132, %v3116
  %v3213 = vpack.c.b16 %v3149, %v3133
  %v3214 = vpack.c.b16 %v3150, %v3134
  %v3215 = vpack.c.b16 %v3151, %v3135
  %v3216 = vpack.c.b16 %v3152, %v3136
  %v3217 = vpack.c.b16 %v3153, %v3137
  %v3218 = vpack.c.b16 %v3154, %v3138
  %v3219 = vpack.c.b16 %v3155, %v3139
  %v3220 = vpack.c.b16 %v3156, %v3140
  %v3221 = vpack.c.b16 %v3157, %v3141
  %v3222 = vpack.c.b16 %v3158, %v3142
  %v3223 = vpack.c.b16 %v3159, %v3143
  %v3224 = vpack.c.b16 %v3160, %v3144
  %v3225 = vpack.c.b16 %v3161, %v3145
  %v3226 = vpack.c.b16 %v3162, %v3146
  %v3227 = vpack.c.b16 %v3163, %v3147
  %v3228 = vpack.c.b16 %v3164, %v3148
  %v3294 = vsel %vm179, %v2821, 0
  %3296 = vmatprep.subr.bf16.mxu0 0
  %3297 = vmatpush1.bf16.msra.mxu0 0
  %3298 = vmatprep.subr.bf16.mxu0 0
  %3299 = vmatpush1.bf16.msra.mxu0 0
  %3300 = vmatprep.subr.bf16.mxu0 0
  %3301 = vmatpush1.bf16.msra.mxu0 0
  %3302 = vmatprep.subr.bf16.mxu0 0
  %3303 = vmatpush1.bf16.msra.mxu0 0
  %3304 = vmatprep.subr.bf16.mxu0 %v3214
  %3305 = vmatpush1.bf16.msra.mxu0 %v3213
  %3306 = vmatprep.subr.bf16.mxu0 %v3198
  %3307 = vmatpush1.bf16.msra.mxu0 %v3197
  %3308 = vmatprep.subr.bf16.mxu0 %v3182
  %3309 = vmatpush1.bf16.msra.mxu0 %v3181
  %3310 = vmatprep.subr.bf16.mxu0 %v3166
  %3311 = vmatpush1.bf16.msra.mxu0 %v3165
  %3312 = vmatprep.subr.bf16.mxu0 0
  %3313 = vmatpush2.bf16.msra.mxu0 0
  %3314 = vmatprep.subr.bf16.mxu0 0
  %3315 = vmatpush2.bf16.msra.mxu0 0
  %3316 = vmatprep.subr.bf16.mxu0 0
  %3317 = vmatpush2.bf16.msra.mxu0 0
  %3318 = vmatprep.subr.bf16.mxu0 0
  %3319 = vmatpush2.bf16.msra.mxu0 0
  %3320 = vmatprep.subr.bf16.mxu0 0
  %3321 = vmatpush2.bf16.msra.mxu0 0
  %3322 = vmatprep.subr.bf16.mxu0 0
  %3323 = vmatpush2.bf16.msra.mxu0 0
  %3324 = vmatprep.subr.bf16.mxu0 0
  %3325 = vmatpush2.bf16.msra.mxu0 0
  %3326 = vmatprep.subr.bf16.mxu0 0
  %3327 = vmatpush2.bf16.msra.mxu0 0
  %3328 = vmatprep.mubr.bf16.mxu0 0
  %3329 = vmatmul.mubr.bf16.gmra.mxu0 %v3294
  %v3330 = vpop.f32.mrf.mxu0
  %v3331 = vadd.f32 %v2896, %v3330
  %v3332 = vpop.f32.mrf.mxu0
  %v3333 = vadd.f32 %v2900, %v3332
  %v3334 = vpop.f32.mrf.mxu0
  %v3335 = vadd.f32 %v2896, %v3334
  %v3336 = vpop.f32.mrf.mxu0
  %v3337 = vadd.f32 %v2900, %v3336
  %3338 = vdwg.mxu0
  %3339 = vmatprep.subr.bf16.mxu0 0
  %3340 = vmatpush1.bf16.msra.mxu0 0
  %3341 = vmatprep.subr.bf16.mxu0 0
  %3342 = vmatpush1.bf16.msra.mxu0 0
  %3343 = vmatprep.subr.bf16.mxu0 0
  %3344 = vmatpush1.bf16.msra.mxu0 0
  %3345 = vmatprep.subr.bf16.mxu0 0
  %3346 = vmatpush1.bf16.msra.mxu0 0
  %3347 = vmatprep.subr.bf16.mxu0 %v3216
  %3348 = vmatpush1.bf16.msra.mxu0 %v3215
  %3349 = vmatprep.subr.bf16.mxu0 %v3200
  %3350 = vmatpush1.bf16.msra.mxu0 %v3199
  %3351 = vmatprep.subr.bf16.mxu0 %v3184
  %3352 = vmatpush1.bf16.msra.mxu0 %v3183
  %3353 = vmatprep.subr.bf16.mxu0 %v3168
  %3354 = vmatpush1.bf16.msra.mxu0 %v3167
  %3355 = vmatprep.subr.bf16.mxu0 0
  %3356 = vmatpush2.bf16.msra.mxu0 0
  %3357 = vmatprep.subr.bf16.mxu0 0
  %3358 = vmatpush2.bf16.msra.mxu0 0
  %3359 = vmatprep.subr.bf16.mxu0 0
  %3360 = vmatpush2.bf16.msra.mxu0 0
  %3361 = vmatprep.subr.bf16.mxu0 0
  %3362 = vmatpush2.bf16.msra.mxu0 0
  %3363 = vmatprep.subr.bf16.mxu0 0
  %3364 = vmatpush2.bf16.msra.mxu0 0
  %3365 = vmatprep.subr.bf16.mxu0 0
  %3366 = vmatpush2.bf16.msra.mxu0 0
  %3367 = vmatprep.subr.bf16.mxu0 0
  %3368 = vmatpush2.bf16.msra.mxu0 0
  %3369 = vmatprep.subr.bf16.mxu0 0
  %3370 = vmatpush2.bf16.msra.mxu0 0
  %3371 = vmatprep.mubr.bf16.mxu0 0
  %3372 = vmatmul.mubr.bf16.gmra.mxu0 %v3294
  %v3373 = vpop.f32.mrf.mxu0
  %v3374 = vadd.f32 %v2904, %v3373
  %v3375 = vpop.f32.mrf.mxu0
  %v3376 = vadd.f32 %v2908, %v3375
  %v3377 = vpop.f32.mrf.mxu0
  %v3378 = vadd.f32 %v2904, %v3377
  %v3379 = vpop.f32.mrf.mxu0
  %v3380 = vadd.f32 %v2908, %v3379
  %3381 = vdwg.mxu0
  %3382 = vmatprep.subr.bf16.mxu0 0
  %3383 = vmatpush1.bf16.msra.mxu0 0
  %3384 = vmatprep.subr.bf16.mxu0 0
  %3385 = vmatpush1.bf16.msra.mxu0 0
  %3386 = vmatprep.subr.bf16.mxu0 0
  %3387 = vmatpush1.bf16.msra.mxu0 0
  %3388 = vmatprep.subr.bf16.mxu0 0
  %3389 = vmatpush1.bf16.msra.mxu0 0
  %3390 = vmatprep.subr.bf16.mxu0 %v3218
  %3391 = vmatpush1.bf16.msra.mxu0 %v3217
  %3392 = vmatprep.subr.bf16.mxu0 %v3202
  %3393 = vmatpush1.bf16.msra.mxu0 %v3201
  %3394 = vmatprep.subr.bf16.mxu0 %v3186
  %3395 = vmatpush1.bf16.msra.mxu0 %v3185
  %3396 = vmatprep.subr.bf16.mxu0 %v3170
  %3397 = vmatpush1.bf16.msra.mxu0 %v3169
  %3398 = vmatprep.subr.bf16.mxu0 0
  %3399 = vmatpush2.bf16.msra.mxu0 0
  %3400 = vmatprep.subr.bf16.mxu0 0
  %3401 = vmatpush2.bf16.msra.mxu0 0
  %3402 = vmatprep.subr.bf16.mxu0 0
  %3403 = vmatpush2.bf16.msra.mxu0 0
  %3404 = vmatprep.subr.bf16.mxu0 0
  %3405 = vmatpush2.bf16.msra.mxu0 0
  %3406 = vmatprep.subr.bf16.mxu0 0
  %3407 = vmatpush2.bf16.msra.mxu0 0
  %3408 = vmatprep.subr.bf16.mxu0 0
  %3409 = vmatpush2.bf16.msra.mxu0 0
  %3410 = vmatprep.subr.bf16.mxu0 0
  %3411 = vmatpush2.bf16.msra.mxu0 0
  %3412 = vmatprep.subr.bf16.mxu0 0
  %3413 = vmatpush2.bf16.msra.mxu0 0
  %3414 = vmatprep.mubr.bf16.mxu0 0
  %3415 = vmatmul.mubr.bf16.gmra.mxu0 %v3294
  %v3416 = vpop.f32.mrf.mxu0
  %v3417 = vadd.f32 %v2912, %v3416
  %v3418 = vpop.f32.mrf.mxu0
  %v3419 = vadd.f32 %v2916, %v3418
  %v3420 = vpop.f32.mrf.mxu0
  %v3421 = vadd.f32 %v2912, %v3420
  %v3422 = vpop.f32.mrf.mxu0
  %v3423 = vadd.f32 %v2916, %v3422
  %3424 = vdwg.mxu0
  %3425 = vmatprep.subr.bf16.mxu0 0
  %3426 = vmatpush1.bf16.msra.mxu0 0
  %3427 = vmatprep.subr.bf16.mxu0 0
  %3428 = vmatpush1.bf16.msra.mxu0 0
  %3429 = vmatprep.subr.bf16.mxu0 0
  %3430 = vmatpush1.bf16.msra.mxu0 0
  %3431 = vmatprep.subr.bf16.mxu0 0
  %3432 = vmatpush1.bf16.msra.mxu0 0
  %3433 = vmatprep.subr.bf16.mxu0 %v3220
  %3434 = vmatpush1.bf16.msra.mxu0 %v3219
  %3435 = vmatprep.subr.bf16.mxu0 %v3204
  %3436 = vmatpush1.bf16.msra.mxu0 %v3203
  %3437 = vmatprep.subr.bf16.mxu0 %v3188
  %3438 = vmatpush1.bf16.msra.mxu0 %v3187
  %3439 = vmatprep.subr.bf16.mxu0 %v3172
  %3440 = vmatpush1.bf16.msra.mxu0 %v3171
  %3441 = vmatprep.subr.bf16.mxu0 0
  %3442 = vmatpush2.bf16.msra.mxu0 0
  %3443 = vmatprep.subr.bf16.mxu0 0
  %3444 = vmatpush2.bf16.msra.mxu0 0
  %3445 = vmatprep.subr.bf16.mxu0 0
  %3446 = vmatpush2.bf16.msra.mxu0 0
  %3447 = vmatprep.subr.bf16.mxu0 0
  %3448 = vmatpush2.bf16.msra.mxu0 0
  %3449 = vmatprep.subr.bf16.mxu0 0
  %3450 = vmatpush2.bf16.msra.mxu0 0
  %3451 = vmatprep.subr.bf16.mxu0 0
  %3452 = vmatpush2.bf16.msra.mxu0 0
  %3453 = vmatprep.subr.bf16.mxu0 0
  %3454 = vmatpush2.bf16.msra.mxu0 0
  %3455 = vmatprep.subr.bf16.mxu0 0
  %3456 = vmatpush2.bf16.msra.mxu0 0
  %3457 = vmatprep.mubr.bf16.mxu0 0
  %3458 = vmatmul.mubr.bf16.gmra.mxu0 %v3294
  %v3459 = vpop.f32.mrf.mxu0
  %v3460 = vadd.f32 %v2920, %v3459
  %v3461 = vpop.f32.mrf.mxu0
  %v3462 = vadd.f32 %v2924, %v3461
  %v3463 = vpop.f32.mrf.mxu0
  %v3464 = vadd.f32 %v2920, %v3463
  %v3465 = vpop.f32.mrf.mxu0
  %v3466 = vadd.f32 %v2924, %v3465
  %3467 = vdwg.mxu0
  %3468 = vmatprep.subr.bf16.mxu0 0
  %3469 = vmatpush1.bf16.msra.mxu0 0
  %3470 = vmatprep.subr.bf16.mxu0 0
  %3471 = vmatpush1.bf16.msra.mxu0 0
  %3472 = vmatprep.subr.bf16.mxu0 0
  %3473 = vmatpush1.bf16.msra.mxu0 0
  %3474 = vmatprep.subr.bf16.mxu0 0
  %3475 = vmatpush1.bf16.msra.mxu0 0
  %3476 = vmatprep.subr.bf16.mxu0 %v3222
  %3477 = vmatpush1.bf16.msra.mxu0 %v3221
  %3478 = vmatprep.subr.bf16.mxu0 %v3206
  %3479 = vmatpush1.bf16.msra.mxu0 %v3205
  %3480 = vmatprep.subr.bf16.mxu0 %v3190
  %3481 = vmatpush1.bf16.msra.mxu0 %v3189
  %3482 = vmatprep.subr.bf16.mxu0 %v3174
  %3483 = vmatpush1.bf16.msra.mxu0 %v3173
  %3484 = vmatprep.subr.bf16.mxu0 0
  %3485 = vmatpush2.bf16.msra.mxu0 0
  %3486 = vmatprep.subr.bf16.mxu0 0
  %3487 = vmatpush2.bf16.msra.mxu0 0
  %3488 = vmatprep.subr.bf16.mxu0 0
  %3489 = vmatpush2.bf16.msra.mxu0 0
  %3490 = vmatprep.subr.bf16.mxu0 0
  %3491 = vmatpush2.bf16.msra.mxu0 0
  %3492 = vmatprep.subr.bf16.mxu0 0
  %3493 = vmatpush2.bf16.msra.mxu0 0
  %3494 = vmatprep.subr.bf16.mxu0 0
  %3495 = vmatpush2.bf16.msra.mxu0 0
  %3496 = vmatprep.subr.bf16.mxu0 0
  %3497 = vmatpush2.bf16.msra.mxu0 0
  %3498 = vmatprep.subr.bf16.mxu0 0
  %3499 = vmatpush2.bf16.msra.mxu0 0
  %3500 = vmatprep.mubr.bf16.mxu0 0
  %3501 = vmatmul.mubr.bf16.gmra.mxu0 %v3294
  %v3502 = vpop.f32.mrf.mxu0
  %v3503 = vadd.f32 %v2928, %v3502
  %v3504 = vpop.f32.mrf.mxu0
  %v3505 = vadd.f32 %v2932, %v3504
  %v3506 = vpop.f32.mrf.mxu0
  %v3507 = vadd.f32 %v2928, %v3506
  %v3508 = vpop.f32.mrf.mxu0
  %v3509 = vadd.f32 %v2932, %v3508
  %3510 = vdwg.mxu0
  %3511 = vmatprep.subr.bf16.mxu0 0
  %3512 = vmatpush1.bf16.msra.mxu0 0
  %3513 = vmatprep.subr.bf16.mxu0 0
  %3514 = vmatpush1.bf16.msra.mxu0 0
  %3515 = vmatprep.subr.bf16.mxu0 0
  %3516 = vmatpush1.bf16.msra.mxu0 0
  %3517 = vmatprep.subr.bf16.mxu0 0
  %3518 = vmatpush1.bf16.msra.mxu0 0
  %3519 = vmatprep.subr.bf16.mxu0 %v3224
  %3520 = vmatpush1.bf16.msra.mxu0 %v3223
  %3521 = vmatprep.subr.bf16.mxu0 %v3208
  %3522 = vmatpush1.bf16.msra.mxu0 %v3207
  %3523 = vmatprep.subr.bf16.mxu0 %v3192
  %3524 = vmatpush1.bf16.msra.mxu0 %v3191
  %3525 = vmatprep.subr.bf16.mxu0 %v3176
  %3526 = vmatpush1.bf16.msra.mxu0 %v3175
  %3527 = vmatprep.subr.bf16.mxu0 0
  %3528 = vmatpush2.bf16.msra.mxu0 0
  %3529 = vmatprep.subr.bf16.mxu0 0
  %3530 = vmatpush2.bf16.msra.mxu0 0
  %3531 = vmatprep.subr.bf16.mxu0 0
  %3532 = vmatpush2.bf16.msra.mxu0 0
  %3533 = vmatprep.subr.bf16.mxu0 0
  %3534 = vmatpush2.bf16.msra.mxu0 0
  %3535 = vmatprep.subr.bf16.mxu0 0
  %3536 = vmatpush2.bf16.msra.mxu0 0
  %3537 = vmatprep.subr.bf16.mxu0 0
  %3538 = vmatpush2.bf16.msra.mxu0 0
  %3539 = vmatprep.subr.bf16.mxu0 0
  %3540 = vmatpush2.bf16.msra.mxu0 0
  %3541 = vmatprep.subr.bf16.mxu0 0
  %3542 = vmatpush2.bf16.msra.mxu0 0
  %3543 = vmatprep.mubr.bf16.mxu0 0
  %3544 = vmatmul.mubr.bf16.gmra.mxu0 %v3294
  %v3545 = vpop.f32.mrf.mxu0
  %v3546 = vadd.f32 %v2936, %v3545
  %v3547 = vpop.f32.mrf.mxu0
  %v3548 = vadd.f32 %v2940, %v3547
  %v3549 = vpop.f32.mrf.mxu0
  %v3550 = vadd.f32 %v2936, %v3549
  %v3551 = vpop.f32.mrf.mxu0
  %v3552 = vadd.f32 %v2940, %v3551
  %3553 = vdwg.mxu0
  %3554 = vmatprep.subr.bf16.mxu0 0
  %3555 = vmatpush1.bf16.msra.mxu0 0
  %3556 = vmatprep.subr.bf16.mxu0 0
  %3557 = vmatpush1.bf16.msra.mxu0 0
  %3558 = vmatprep.subr.bf16.mxu0 0
  %3559 = vmatpush1.bf16.msra.mxu0 0
  %3560 = vmatprep.subr.bf16.mxu0 0
  %3561 = vmatpush1.bf16.msra.mxu0 0
  %3562 = vmatprep.subr.bf16.mxu0 %v3226
  %3563 = vmatpush1.bf16.msra.mxu0 %v3225
  %3564 = vmatprep.subr.bf16.mxu0 %v3210
  %3565 = vmatpush1.bf16.msra.mxu0 %v3209
  %3566 = vmatprep.subr.bf16.mxu0 %v3194
  %3567 = vmatpush1.bf16.msra.mxu0 %v3193
  %3568 = vmatprep.subr.bf16.mxu0 %v3178
  %3569 = vmatpush1.bf16.msra.mxu0 %v3177
  %3570 = vmatprep.subr.bf16.mxu0 0
  %3571 = vmatpush2.bf16.msra.mxu0 0
  %3572 = vmatprep.subr.bf16.mxu0 0
  %3573 = vmatpush2.bf16.msra.mxu0 0
  %3574 = vmatprep.subr.bf16.mxu0 0
  %3575 = vmatpush2.bf16.msra.mxu0 0
  %3576 = vmatprep.subr.bf16.mxu0 0
  %3577 = vmatpush2.bf16.msra.mxu0 0
  %3578 = vmatprep.subr.bf16.mxu0 0
  %3579 = vmatpush2.bf16.msra.mxu0 0
  %3580 = vmatprep.subr.bf16.mxu0 0
  %3581 = vmatpush2.bf16.msra.mxu0 0
  %3582 = vmatprep.subr.bf16.mxu0 0
  %3583 = vmatpush2.bf16.msra.mxu0 0
  %3584 = vmatprep.subr.bf16.mxu0 0
  %3585 = vmatpush2.bf16.msra.mxu0 0
  %3586 = vmatprep.mubr.bf16.mxu0 0
  %3587 = vmatmul.mubr.bf16.gmra.mxu0 %v3294
  %v3588 = vpop.f32.mrf.mxu0
  %v3589 = vadd.f32 %v2944, %v3588
  %v3590 = vpop.f32.mrf.mxu0
  %v3591 = vadd.f32 %v2948, %v3590
  %v3592 = vpop.f32.mrf.mxu0
  %v3593 = vadd.f32 %v2944, %v3592
  %v3594 = vpop.f32.mrf.mxu0
  %v3595 = vadd.f32 %v2948, %v3594
  %3596 = vdwg.mxu0
  %3597 = vmatprep.subr.bf16.mxu0 0
  %3598 = vmatpush1.bf16.msra.mxu0 0
  %3599 = vmatprep.subr.bf16.mxu0 0
  %3600 = vmatpush1.bf16.msra.mxu0 0
  %3601 = vmatprep.subr.bf16.mxu0 0
  %3602 = vmatpush1.bf16.msra.mxu0 0
  %3603 = vmatprep.subr.bf16.mxu0 0
  %3604 = vmatpush1.bf16.msra.mxu0 0
  %3605 = vmatprep.subr.bf16.mxu0 %v3228
  %3606 = vmatpush1.bf16.msra.mxu0 %v3227
  %3607 = vmatprep.subr.bf16.mxu0 %v3212
  %3608 = vmatpush1.bf16.msra.mxu0 %v3211
  %3609 = vmatprep.subr.bf16.mxu0 %v3196
  %3610 = vmatpush1.bf16.msra.mxu0 %v3195
  %3611 = vmatprep.subr.bf16.mxu0 %v3180
  %3612 = vmatpush1.bf16.msra.mxu0 %v3179
  %3613 = vmatprep.subr.bf16.mxu0 0
  %3614 = vmatpush2.bf16.msra.mxu0 0
  %3615 = vmatprep.subr.bf16.mxu0 0
  %3616 = vmatpush2.bf16.msra.mxu0 0
  %3617 = vmatprep.subr.bf16.mxu0 0
  %3618 = vmatpush2.bf16.msra.mxu0 0
  %3619 = vmatprep.subr.bf16.mxu0 0
  %3620 = vmatpush2.bf16.msra.mxu0 0
  %3621 = vmatprep.subr.bf16.mxu0 0
  %3622 = vmatpush2.bf16.msra.mxu0 0
  %3623 = vmatprep.subr.bf16.mxu0 0
  %3624 = vmatpush2.bf16.msra.mxu0 0
  %3625 = vmatprep.subr.bf16.mxu0 0
  %3626 = vmatpush2.bf16.msra.mxu0 0
  %3627 = vmatprep.subr.bf16.mxu0 0
  %3628 = vmatpush2.bf16.msra.mxu0 0
  %3629 = vmatprep.mubr.bf16.mxu0 0
  %3630 = vmatmul.mubr.bf16.gmra.mxu0 %v3294
  %v3631 = vpop.f32.mrf.mxu0
  %v3632 = vadd.f32 %v2952, %v3631
  %v3633 = vpop.f32.mrf.mxu0
  %v3634 = vadd.f32 %v2956, %v3633
  %v3635 = vpop.f32.mrf.mxu0
  %v3636 = vadd.f32 %v2952, %v3635
  %v3637 = vpop.f32.mrf.mxu0
  %v3638 = vadd.f32 %v2956, %v3637
  %3639 = vdwg.mxu0
  %v3640 = vmax.f32 %v3331, 0.0
  %v3641 = vmax.f32 %v3333, 0.0
  %v3642 = vmax.f32 %v3374, 0.0
  %v3643 = vmax.f32 %v3376, 0.0
  %v3644 = vmax.f32 %v3417, 0.0
  %v3645 = vmax.f32 %v3419, 0.0
  %v3646 = vmax.f32 %v3460, 0.0
  %v3647 = vmax.f32 %v3462, 0.0
  %v3648 = vmax.f32 %v3503, 0.0
  %v3649 = vmax.f32 %v3505, 0.0
  %v3650 = vmax.f32 %v3546, 0.0
  %v3651 = vmax.f32 %v3548, 0.0
  %v3652 = vmax.f32 %v3589, 0.0
  %v3653 = vmax.f32 %v3591, 0.0
  %v3654 = vmax.f32 %v3632, 0.0
  %v3655 = vmax.f32 %v3634, 0.0
  %v3656 = vmax.f32 %v3335, 0.0
  %v3657 = vmax.f32 %v3337, 0.0
  %v3658 = vmax.f32 %v3378, 0.0
  %v3659 = vmax.f32 %v3380, 0.0
  %v3660 = vmax.f32 %v3421, 0.0
  %v3661 = vmax.f32 %v3423, 0.0
  %v3662 = vmax.f32 %v3464, 0.0
  %v3663 = vmax.f32 %v3466, 0.0
  %v3664 = vmax.f32 %v3507, 0.0
  %v3665 = vmax.f32 %v3509, 0.0
  %v3666 = vmax.f32 %v3550, 0.0
  %v3667 = vmax.f32 %v3552, 0.0
  %v3668 = vmax.f32 %v3593, 0.0
  %v3669 = vmax.f32 %v3595, 0.0
  %v3670 = vmax.f32 %v3636, 0.0
  %v3671 = vmax.f32 %v3638, 0.0
  %v3672 = vpack.c.bf16 %v3656, %v3640
  %v3673 = vpack.c.bf16 %v3657, %v3641
  %v3674 = vpack.c.bf16 %v3658, %v3642
  %v3675 = vpack.c.bf16 %v3659, %v3643
  %v3676 = vpack.c.bf16 %v3660, %v3644
  %v3677 = vpack.c.bf16 %v3661, %v3645
  %v3678 = vpack.c.bf16 %v3662, %v3646
  %v3679 = vpack.c.bf16 %v3663, %v3647
  %v3680 = vpack.c.bf16 %v3664, %v3648
  %v3681 = vpack.c.bf16 %v3665, %v3649
  %v3682 = vpack.c.bf16 %v3666, %v3650
  %v3683 = vpack.c.bf16 %v3667, %v3651
  %v3684 = vpack.c.bf16 %v3668, %v3652
  %v3685 = vpack.c.bf16 %v3669, %v3653
  %v3686 = vpack.c.bf16 %v3670, %v3654
  %v3687 = vpack.c.bf16 %v3671, %v3655
  %s3688 = scalar_lea.vmem %s9, 1024
  %v3689 = vld [vmem:[%s3688] sm:$0xf]
  %v3690 = vld [vmem:[%s3688 + $0x4] sm:$0xf]
  %v3691 = vld [vmem:[%s3688 + $0x8] sm:$0xf]
  %v3692 = vld [vmem:[%s3688 + $0xc] sm:$0xf]
  %v3693 = vld [vmem:[%s3688 + $0x10] sm:$0xf]
  %v3694 = vld [vmem:[%s3688 + $0x14] sm:$0xf]
  %v3695 = vld [vmem:[%s3688 + $0x18] sm:$0xf]
  %v3696 = vld [vmem:[%s3688 + $0x1c] sm:$0xf]
  %v3697 = vld [vmem:[%s3688 + $0x20] sm:$0xf]
  %v3698 = vld [vmem:[%s3688 + $0x24] sm:$0xf]
  %v3699 = vld [vmem:[%s3688 + $0x28] sm:$0xf]
  %v3700 = vld [vmem:[%s3688 + $0x2c] sm:$0xf]
  %v3701 = vld [vmem:[%s3688 + $0x30] sm:$0xf]
  %v3702 = vld [vmem:[%s3688 + $0x34] sm:$0xf]
  %v3703 = vld [vmem:[%s3688 + $0x38] sm:$0xf]
  %v3704 = vld [vmem:[%s3688 + $0x3c] sm:$0xf]
  %v3705 = vld [vmem:[%s3688 + $0x40] sm:$0xf]
  %v3706 = vld [vmem:[%s3688 + $0x44] sm:$0xf]
  %v3707 = vld [vmem:[%s3688 + $0x48] sm:$0xf]
  %v3708 = vld [vmem:[%s3688 + $0x4c] sm:$0xf]
  %v3709 = vld [vmem:[%s3688 + $0x50] sm:$0xf]
  %v3710 = vld [vmem:[%s3688 + $0x54] sm:$0xf]
  %v3711 = vld [vmem:[%s3688 + $0x58] sm:$0xf]
  %v3712 = vld [vmem:[%s3688 + $0x5c] sm:$0xf]
  %v3713 = vld [vmem:[%s3688 + $0x60] sm:$0xf]
  %v3714 = vld [vmem:[%s3688 + $0x64] sm:$0xf]
  %v3715 = vld [vmem:[%s3688 + $0x68] sm:$0xf]
  %v3716 = vld [vmem:[%s3688 + $0x6c] sm:$0xf]
  %v3717 = vld [vmem:[%s3688 + $0x70] sm:$0xf]
  %v3718 = vld [vmem:[%s3688 + $0x74] sm:$0xf]
  %v3719 = vld [vmem:[%s3688 + $0x78] sm:$0xf]
  %v3720 = vld [vmem:[%s3688 + $0x7c] sm:$0xf]
  %v3721 = vld [vmem:[%s3688 + $0x80] sm:$0xf]
  %v3722 = vld [vmem:[%s3688 + $0x84] sm:$0xf]
  %v3723 = vld [vmem:[%s3688 + $0x88] sm:$0xf]
  %v3724 = vld [vmem:[%s3688 + $0x8c] sm:$0xf]
  %v3725 = vld [vmem:[%s3688 + $0x90] sm:$0xf]
  %v3726 = vld [vmem:[%s3688 + $0x94] sm:$0xf]
  %v3727 = vld [vmem:[%s3688 + $0x98] sm:$0xf]
  %v3728 = vld [vmem:[%s3688 + $0x9c] sm:$0xf]
  %v3729 = vld [vmem:[%s3688 + $0xa0] sm:$0xf]
  %v3730 = vld [vmem:[%s3688 + $0xa4] sm:$0xf]
  %v3731 = vld [vmem:[%s3688 + $0xa8] sm:$0xf]
  %v3732 = vld [vmem:[%s3688 + $0xac] sm:$0xf]
  %v3733 = vld [vmem:[%s3688 + $0xb0] sm:$0xf]
  %v3734 = vld [vmem:[%s3688 + $0xb4] sm:$0xf]
  %v3735 = vld [vmem:[%s3688 + $0xb8] sm:$0xf]
  %v3736 = vld [vmem:[%s3688 + $0xbc] sm:$0xf]
  %v3737 = vld [vmem:[%s3688 + $0xc0] sm:$0xf]
  %v3738 = vld [vmem:[%s3688 + $0xc4] sm:$0xf]
  %v3739 = vld [vmem:[%s3688 + $0xc8] sm:$0xf]
  %v3740 = vld [vmem:[%s3688 + $0xcc] sm:$0xf]
  %v3741 = vld [vmem:[%s3688 + $0xd0] sm:$0xf]
  %v3742 = vld [vmem:[%s3688 + $0xd4] sm:$0xf]
  %v3743 = vld [vmem:[%s3688 + $0xd8] sm:$0xf]
  %v3744 = vld [vmem:[%s3688 + $0xdc] sm:$0xf]
  %v3745 = vld [vmem:[%s3688 + $0xe0] sm:$0xf]
  %v3746 = vld [vmem:[%s3688 + $0xe4] sm:$0xf]
  %v3747 = vld [vmem:[%s3688 + $0xe8] sm:$0xf]
  %v3748 = vld [vmem:[%s3688 + $0xec] sm:$0xf]
  %v3749 = vld [vmem:[%s3688 + $0xf0] sm:$0xf]
  %v3750 = vld [vmem:[%s3688 + $0xf4] sm:$0xf]
  %v3751 = vld [vmem:[%s3688 + $0xf8] sm:$0xf]
  %v3752 = vld [vmem:[%s3688 + $0xfc] sm:$0xf]
  %v3753 = vld [vmem:[%s3688 + $0x100] sm:$0xf]
  %v3754 = vld [vmem:[%s3688 + $0x104] sm:$0xf]
  %v3755 = vld [vmem:[%s3688 + $0x108] sm:$0xf]
  %v3756 = vld [vmem:[%s3688 + $0x10c] sm:$0xf]
  %v3757 = vld [vmem:[%s3688 + $0x110] sm:$0xf]
  %v3758 = vld [vmem:[%s3688 + $0x114] sm:$0xf]
  %v3759 = vld [vmem:[%s3688 + $0x118] sm:$0xf]
  %v3760 = vld [vmem:[%s3688 + $0x11c] sm:$0xf]
  %v3761 = vld [vmem:[%s3688 + $0x120] sm:$0xf]
  %v3762 = vld [vmem:[%s3688 + $0x124] sm:$0xf]
  %v3763 = vld [vmem:[%s3688 + $0x128] sm:$0xf]
  %v3764 = vld [vmem:[%s3688 + $0x12c] sm:$0xf]
  %v3765 = vld [vmem:[%s3688 + $0x130] sm:$0xf]
  %v3766 = vld [vmem:[%s3688 + $0x134] sm:$0xf]
  %v3767 = vld [vmem:[%s3688 + $0x138] sm:$0xf]
  %v3768 = vld [vmem:[%s3688 + $0x13c] sm:$0xf]
  %v3769 = vld [vmem:[%s3688 + $0x140] sm:$0xf]
  %v3770 = vld [vmem:[%s3688 + $0x144] sm:$0xf]
  %v3771 = vld [vmem:[%s3688 + $0x148] sm:$0xf]
  %v3772 = vld [vmem:[%s3688 + $0x14c] sm:$0xf]
  %v3773 = vld [vmem:[%s3688 + $0x150] sm:$0xf]
  %v3774 = vld [vmem:[%s3688 + $0x154] sm:$0xf]
  %v3775 = vld [vmem:[%s3688 + $0x158] sm:$0xf]
  %v3776 = vld [vmem:[%s3688 + $0x15c] sm:$0xf]
  %v3777 = vld [vmem:[%s3688 + $0x160] sm:$0xf]
  %v3778 = vld [vmem:[%s3688 + $0x164] sm:$0xf]
  %v3779 = vld [vmem:[%s3688 + $0x168] sm:$0xf]
  %v3780 = vld [vmem:[%s3688 + $0x16c] sm:$0xf]
  %v3781 = vld [vmem:[%s3688 + $0x170] sm:$0xf]
  %v3782 = vld [vmem:[%s3688 + $0x174] sm:$0xf]
  %v3783 = vld [vmem:[%s3688 + $0x178] sm:$0xf]
  %v3784 = vld [vmem:[%s3688 + $0x17c] sm:$0xf]
  %v3785 = vld [vmem:[%s3688 + $0x180] sm:$0xf]
  %v3786 = vld [vmem:[%s3688 + $0x184] sm:$0xf]
  %v3787 = vld [vmem:[%s3688 + $0x188] sm:$0xf]
  %v3788 = vld [vmem:[%s3688 + $0x18c] sm:$0xf]
  %v3789 = vld [vmem:[%s3688 + $0x190] sm:$0xf]
  %v3790 = vld [vmem:[%s3688 + $0x194] sm:$0xf]
  %v3791 = vld [vmem:[%s3688 + $0x198] sm:$0xf]
  %v3792 = vld [vmem:[%s3688 + $0x19c] sm:$0xf]
  %v3793 = vld [vmem:[%s3688 + $0x1a0] sm:$0xf]
  %v3794 = vld [vmem:[%s3688 + $0x1a4] sm:$0xf]
  %v3795 = vld [vmem:[%s3688 + $0x1a8] sm:$0xf]
  %v3796 = vld [vmem:[%s3688 + $0x1ac] sm:$0xf]
  %v3797 = vld [vmem:[%s3688 + $0x1b0] sm:$0xf]
  %v3798 = vld [vmem:[%s3688 + $0x1b4] sm:$0xf]
  %v3799 = vld [vmem:[%s3688 + $0x1b8] sm:$0xf]
  %v3800 = vld [vmem:[%s3688 + $0x1bc] sm:$0xf]
  %v3801 = vld [vmem:[%s3688 + $0x1c0] sm:$0xf]
  %v3802 = vld [vmem:[%s3688 + $0x1c4] sm:$0xf]
  %v3803 = vld [vmem:[%s3688 + $0x1c8] sm:$0xf]
  %v3804 = vld [vmem:[%s3688 + $0x1cc] sm:$0xf]
  %v3805 = vld [vmem:[%s3688 + $0x1d0] sm:$0xf]
  %v3806 = vld [vmem:[%s3688 + $0x1d4] sm:$0xf]
  %v3807 = vld [vmem:[%s3688 + $0x1d8] sm:$0xf]
  %v3808 = vld [vmem:[%s3688 + $0x1dc] sm:$0xf]
  %v3809 = vld [vmem:[%s3688 + $0x1e0] sm:$0xf]
  %v3810 = vld [vmem:[%s3688 + $0x1e4] sm:$0xf]
  %v3811 = vld [vmem:[%s3688 + $0x1e8] sm:$0xf]
  %v3812 = vld [vmem:[%s3688 + $0x1ec] sm:$0xf]
  %v3813 = vld [vmem:[%s3688 + $0x1f0] sm:$0xf]
  %v3814 = vld [vmem:[%s3688 + $0x1f4] sm:$0xf]
  %v3815 = vld [vmem:[%s3688 + $0x1f8] sm:$0xf]
  %v3816 = vld [vmem:[%s3688 + $0x1fc] sm:$0xf]
  %v3817 = vld [vmem:[%s3688 + $0x200] sm:$0xf]
  %v3818 = vld [vmem:[%s3688 + $0x204] sm:$0xf]
  %v3819 = vld [vmem:[%s3688 + $0x208] sm:$0xf]
  %v3820 = vld [vmem:[%s3688 + $0x20c] sm:$0xf]
  %v3821 = vld [vmem:[%s3688 + $0x210] sm:$0xf]
  %v3822 = vld [vmem:[%s3688 + $0x214] sm:$0xf]
  %v3823 = vld [vmem:[%s3688 + $0x218] sm:$0xf]
  %v3824 = vld [vmem:[%s3688 + $0x21c] sm:$0xf]
  %v3825 = vld [vmem:[%s3688 + $0x220] sm:$0xf]
  %v3826 = vld [vmem:[%s3688 + $0x224] sm:$0xf]
  %v3827 = vld [vmem:[%s3688 + $0x228] sm:$0xf]
  %v3828 = vld [vmem:[%s3688 + $0x22c] sm:$0xf]
  %v3829 = vld [vmem:[%s3688 + $0x230] sm:$0xf]
  %v3830 = vld [vmem:[%s3688 + $0x234] sm:$0xf]
  %v3831 = vld [vmem:[%s3688 + $0x238] sm:$0xf]
  %v3832 = vld [vmem:[%s3688 + $0x23c] sm:$0xf]
  %v3833 = vld [vmem:[%s3688 + $0x240] sm:$0xf]
  %v3834 = vld [vmem:[%s3688 + $0x244] sm:$0xf]
  %v3835 = vld [vmem:[%s3688 + $0x248] sm:$0xf]
  %v3836 = vld [vmem:[%s3688 + $0x24c] sm:$0xf]
  %v3837 = vld [vmem:[%s3688 + $0x250] sm:$0xf]
  %v3838 = vld [vmem:[%s3688 + $0x254] sm:$0xf]
  %v3839 = vld [vmem:[%s3688 + $0x258] sm:$0xf]
  %v3840 = vld [vmem:[%s3688 + $0x25c] sm:$0xf]
  %v3841 = vld [vmem:[%s3688 + $0x260] sm:$0xf]
  %v3842 = vld [vmem:[%s3688 + $0x264] sm:$0xf]
  %v3843 = vld [vmem:[%s3688 + $0x268] sm:$0xf]
  %v3844 = vld [vmem:[%s3688 + $0x26c] sm:$0xf]
  %v3845 = vld [vmem:[%s3688 + $0x270] sm:$0xf]
  %v3846 = vld [vmem:[%s3688 + $0x274] sm:$0xf]
  %v3847 = vld [vmem:[%s3688 + $0x278] sm:$0xf]
  %v3848 = vld [vmem:[%s3688 + $0x27c] sm:$0xf]
  %v3849 = vld [vmem:[%s3688 + $0x280] sm:$0xf]
  %v3850 = vld [vmem:[%s3688 + $0x284] sm:$0xf]
  %v3851 = vld [vmem:[%s3688 + $0x288] sm:$0xf]
  %v3852 = vld [vmem:[%s3688 + $0x28c] sm:$0xf]
  %v3853 = vld [vmem:[%s3688 + $0x290] sm:$0xf]
  %v3854 = vld [vmem:[%s3688 + $0x294] sm:$0xf]
  %v3855 = vld [vmem:[%s3688 + $0x298] sm:$0xf]
  %v3856 = vld [vmem:[%s3688 + $0x29c] sm:$0xf]
  %v3857 = vld [vmem:[%s3688 + $0x2a0] sm:$0xf]
  %v3858 = vld [vmem:[%s3688 + $0x2a4] sm:$0xf]
  %v3859 = vld [vmem:[%s3688 + $0x2a8] sm:$0xf]
  %v3860 = vld [vmem:[%s3688 + $0x2ac] sm:$0xf]
  %v3861 = vld [vmem:[%s3688 + $0x2b0] sm:$0xf]
  %v3862 = vld [vmem:[%s3688 + $0x2b4] sm:$0xf]
  %v3863 = vld [vmem:[%s3688 + $0x2b8] sm:$0xf]
  %v3864 = vld [vmem:[%s3688 + $0x2bc] sm:$0xf]
  %v3865 = vld [vmem:[%s3688 + $0x2c0] sm:$0xf]
  %v3866 = vld [vmem:[%s3688 + $0x2c4] sm:$0xf]
  %v3867 = vld [vmem:[%s3688 + $0x2c8] sm:$0xf]
  %v3868 = vld [vmem:[%s3688 + $0x2cc] sm:$0xf]
  %v3869 = vld [vmem:[%s3688 + $0x2d0] sm:$0xf]
  %v3870 = vld [vmem:[%s3688 + $0x2d4] sm:$0xf]
  %v3871 = vld [vmem:[%s3688 + $0x2d8] sm:$0xf]
  %v3872 = vld [vmem:[%s3688 + $0x2dc] sm:$0xf]
  %v3873 = vld [vmem:[%s3688 + $0x2e0] sm:$0xf]
  %v3874 = vld [vmem:[%s3688 + $0x2e4] sm:$0xf]
  %v3875 = vld [vmem:[%s3688 + $0x2e8] sm:$0xf]
  %v3876 = vld [vmem:[%s3688 + $0x2ec] sm:$0xf]
  %v3877 = vld [vmem:[%s3688 + $0x2f0] sm:$0xf]
  %v3878 = vld [vmem:[%s3688 + $0x2f4] sm:$0xf]
  %v3879 = vld [vmem:[%s3688 + $0x2f8] sm:$0xf]
  %v3880 = vld [vmem:[%s3688 + $0x2fc] sm:$0xf]
  %v3881 = vld [vmem:[%s3688 + $0x300] sm:$0xf]
  %v3882 = vld [vmem:[%s3688 + $0x304] sm:$0xf]
  %v3883 = vld [vmem:[%s3688 + $0x308] sm:$0xf]
  %v3884 = vld [vmem:[%s3688 + $0x30c] sm:$0xf]
  %v3885 = vld [vmem:[%s3688 + $0x310] sm:$0xf]
  %v3886 = vld [vmem:[%s3688 + $0x314] sm:$0xf]
  %v3887 = vld [vmem:[%s3688 + $0x318] sm:$0xf]
  %v3888 = vld [vmem:[%s3688 + $0x31c] sm:$0xf]
  %v3889 = vld [vmem:[%s3688 + $0x320] sm:$0xf]
  %v3890 = vld [vmem:[%s3688 + $0x324] sm:$0xf]
  %v3891 = vld [vmem:[%s3688 + $0x328] sm:$0xf]
  %v3892 = vld [vmem:[%s3688 + $0x32c] sm:$0xf]
  %v3893 = vld [vmem:[%s3688 + $0x330] sm:$0xf]
  %v3894 = vld [vmem:[%s3688 + $0x334] sm:$0xf]
  %v3895 = vld [vmem:[%s3688 + $0x338] sm:$0xf]
  %v3896 = vld [vmem:[%s3688 + $0x33c] sm:$0xf]
  %v3897 = vld [vmem:[%s3688 + $0x340] sm:$0xf]
  %v3898 = vld [vmem:[%s3688 + $0x344] sm:$0xf]
  %v3899 = vld [vmem:[%s3688 + $0x348] sm:$0xf]
  %v3900 = vld [vmem:[%s3688 + $0x34c] sm:$0xf]
  %v3901 = vld [vmem:[%s3688 + $0x350] sm:$0xf]
  %v3902 = vld [vmem:[%s3688 + $0x354] sm:$0xf]
  %v3903 = vld [vmem:[%s3688 + $0x358] sm:$0xf]
  %v3904 = vld [vmem:[%s3688 + $0x35c] sm:$0xf]
  %v3905 = vld [vmem:[%s3688 + $0x360] sm:$0xf]
  %v3906 = vld [vmem:[%s3688 + $0x364] sm:$0xf]
  %v3907 = vld [vmem:[%s3688 + $0x368] sm:$0xf]
  %v3908 = vld [vmem:[%s3688 + $0x36c] sm:$0xf]
  %v3909 = vld [vmem:[%s3688 + $0x370] sm:$0xf]
  %v3910 = vld [vmem:[%s3688 + $0x374] sm:$0xf]
  %v3911 = vld [vmem:[%s3688 + $0x378] sm:$0xf]
  %v3912 = vld [vmem:[%s3688 + $0x37c] sm:$0xf]
  %v3913 = vld [vmem:[%s3688 + $0x380] sm:$0xf]
  %v3914 = vld [vmem:[%s3688 + $0x384] sm:$0xf]
  %v3915 = vld [vmem:[%s3688 + $0x388] sm:$0xf]
  %v3916 = vld [vmem:[%s3688 + $0x38c] sm:$0xf]
  %v3917 = vld [vmem:[%s3688 + $0x390] sm:$0xf]
  %v3918 = vld [vmem:[%s3688 + $0x394] sm:$0xf]
  %v3919 = vld [vmem:[%s3688 + $0x398] sm:$0xf]
  %v3920 = vld [vmem:[%s3688 + $0x39c] sm:$0xf]
  %v3921 = vld [vmem:[%s3688 + $0x3a0] sm:$0xf]
  %v3922 = vld [vmem:[%s3688 + $0x3a4] sm:$0xf]
  %v3923 = vld [vmem:[%s3688 + $0x3a8] sm:$0xf]
  %v3924 = vld [vmem:[%s3688 + $0x3ac] sm:$0xf]
  %v3925 = vld [vmem:[%s3688 + $0x3b0] sm:$0xf]
  %v3926 = vld [vmem:[%s3688 + $0x3b4] sm:$0xf]
  %v3927 = vld [vmem:[%s3688 + $0x3b8] sm:$0xf]
  %v3928 = vld [vmem:[%s3688 + $0x3bc] sm:$0xf]
  %v3929 = vld [vmem:[%s3688 + $0x3c0] sm:$0xf]
  %v3930 = vld [vmem:[%s3688 + $0x3c4] sm:$0xf]
  %v3931 = vld [vmem:[%s3688 + $0x3c8] sm:$0xf]
  %v3932 = vld [vmem:[%s3688 + $0x3cc] sm:$0xf]
  %v3933 = vld [vmem:[%s3688 + $0x3d0] sm:$0xf]
  %v3934 = vld [vmem:[%s3688 + $0x3d4] sm:$0xf]
  %v3935 = vld [vmem:[%s3688 + $0x3d8] sm:$0xf]
  %v3936 = vld [vmem:[%s3688 + $0x3dc] sm:$0xf]
  %v3937 = vld [vmem:[%s3688 + $0x3e0] sm:$0xf]
  %v3938 = vld [vmem:[%s3688 + $0x3e4] sm:$0xf]
  %v3939 = vld [vmem:[%s3688 + $0x3e8] sm:$0xf]
  %v3940 = vld [vmem:[%s3688 + $0x3ec] sm:$0xf]
  %v3941 = vld [vmem:[%s3688 + $0x3f0] sm:$0xf]
  %v3942 = vld [vmem:[%s3688 + $0x3f4] sm:$0xf]
  %v3943 = vld [vmem:[%s3688 + $0x3f8] sm:$0xf]
  %v3944 = vld [vmem:[%s3688 + $0x3fc] sm:$0xf]
  %v3945 = vld [vmem:[%s10 + $0x1] sm:$0x1]
  %v3946 = vlaneseq
  %v3947 = vshrl.u32 %v3946, 7
  %v3948 = vsub.s32 0, %v3947
  %v3949 = vrot.slane %v3945, %v3948
  %v4206 = vunpack.c.l.b16 %v3689
  %v4207 = vunpack.c.l.b16 %v3690
  %v4208 = vunpack.c.l.b16 %v3691
  %v4209 = vunpack.c.l.b16 %v3692
  %v4210 = vunpack.c.l.b16 %v3693
  %v4211 = vunpack.c.l.b16 %v3694
  %v4212 = vunpack.c.l.b16 %v3695
  %v4213 = vunpack.c.l.b16 %v3696
  %v4214 = vunpack.c.l.b16 %v3697
  %v4215 = vunpack.c.l.b16 %v3698
  %v4216 = vunpack.c.l.b16 %v3699
  %v4217 = vunpack.c.l.b16 %v3700
  %v4218 = vunpack.c.l.b16 %v3701
  %v4219 = vunpack.c.l.b16 %v3702
  %v4220 = vunpack.c.l.b16 %v3703
  %v4221 = vunpack.c.l.b16 %v3704
  %v4222 = vunpack.c.l.b16 %v3705
  %v4223 = vunpack.c.l.b16 %v3706
  %v4224 = vunpack.c.l.b16 %v3707
  %v4225 = vunpack.c.l.b16 %v3708
  %v4226 = vunpack.c.l.b16 %v3709
  %v4227 = vunpack.c.l.b16 %v3710
  %v4228 = vunpack.c.l.b16 %v3711
  %v4229 = vunpack.c.l.b16 %v3712
  %v4230 = vunpack.c.l.b16 %v3713
  %v4231 = vunpack.c.l.b16 %v3714
  %v4232 = vunpack.c.l.b16 %v3715
  %v4233 = vunpack.c.l.b16 %v3716
  %v4234 = vunpack.c.l.b16 %v3717
  %v4235 = vunpack.c.l.b16 %v3718
  %v4236 = vunpack.c.l.b16 %v3719
  %v4237 = vunpack.c.l.b16 %v3720
  %v4238 = vunpack.c.l.b16 %v3721
  %v4239 = vunpack.c.l.b16 %v3722
  %v4240 = vunpack.c.l.b16 %v3723
  %v4241 = vunpack.c.l.b16 %v3724
  %v4242 = vunpack.c.l.b16 %v3725
  %v4243 = vunpack.c.l.b16 %v3726
  %v4244 = vunpack.c.l.b16 %v3727
  %v4245 = vunpack.c.l.b16 %v3728
  %v4246 = vunpack.c.l.b16 %v3729
  %v4247 = vunpack.c.l.b16 %v3730
  %v4248 = vunpack.c.l.b16 %v3731
  %v4249 = vunpack.c.l.b16 %v3732
  %v4250 = vunpack.c.l.b16 %v3733
  %v4251 = vunpack.c.l.b16 %v3734
  %v4252 = vunpack.c.l.b16 %v3735
  %v4253 = vunpack.c.l.b16 %v3736
  %v4254 = vunpack.c.l.b16 %v3737
  %v4255 = vunpack.c.l.b16 %v3738
  %v4256 = vunpack.c.l.b16 %v3739
  %v4257 = vunpack.c.l.b16 %v3740
  %v4258 = vunpack.c.l.b16 %v3741
  %v4259 = vunpack.c.l.b16 %v3742
  %v4260 = vunpack.c.l.b16 %v3743
  %v4261 = vunpack.c.l.b16 %v3744
  %v4262 = vunpack.c.l.b16 %v3745
  %v4263 = vunpack.c.l.b16 %v3746
  %v4264 = vunpack.c.l.b16 %v3747
  %v4265 = vunpack.c.l.b16 %v3748
  %v4266 = vunpack.c.l.b16 %v3749
  %v4267 = vunpack.c.l.b16 %v3750
  %v4268 = vunpack.c.l.b16 %v3751
  %v4269 = vunpack.c.l.b16 %v3752
  %v4270 = vunpack.c.l.b16 %v3753
  %v4271 = vunpack.c.l.b16 %v3754
  %v4272 = vunpack.c.l.b16 %v3755
  %v4273 = vunpack.c.l.b16 %v3756
  %v4274 = vunpack.c.l.b16 %v3757
  %v4275 = vunpack.c.l.b16 %v3758
  %v4276 = vunpack.c.l.b16 %v3759
  %v4277 = vunpack.c.l.b16 %v3760
  %v4278 = vunpack.c.l.b16 %v3761
  %v4279 = vunpack.c.l.b16 %v3762
  %v4280 = vunpack.c.l.b16 %v3763
  %v4281 = vunpack.c.l.b16 %v3764
  %v4282 = vunpack.c.l.b16 %v3765
  %v4283 = vunpack.c.l.b16 %v3766
  %v4284 = vunpack.c.l.b16 %v3767
  %v4285 = vunpack.c.l.b16 %v3768
  %v4286 = vunpack.c.l.b16 %v3769
  %v4287 = vunpack.c.l.b16 %v3770
  %v4288 = vunpack.c.l.b16 %v3771
  %v4289 = vunpack.c.l.b16 %v3772
  %v4290 = vunpack.c.l.b16 %v3773
  %v4291 = vunpack.c.l.b16 %v3774
  %v4292 = vunpack.c.l.b16 %v3775
  %v4293 = vunpack.c.l.b16 %v3776
  %v4294 = vunpack.c.l.b16 %v3777
  %v4295 = vunpack.c.l.b16 %v3778
  %v4296 = vunpack.c.l.b16 %v3779
  %v4297 = vunpack.c.l.b16 %v3780
  %v4298 = vunpack.c.l.b16 %v3781
  %v4299 = vunpack.c.l.b16 %v3782
  %v4300 = vunpack.c.l.b16 %v3783
  %v4301 = vunpack.c.l.b16 %v3784
  %v4302 = vunpack.c.l.b16 %v3785
  %v4303 = vunpack.c.l.b16 %v3786
  %v4304 = vunpack.c.l.b16 %v3787
  %v4305 = vunpack.c.l.b16 %v3788
  %v4306 = vunpack.c.l.b16 %v3789
  %v4307 = vunpack.c.l.b16 %v3790
  %v4308 = vunpack.c.l.b16 %v3791
  %v4309 = vunpack.c.l.b16 %v3792
  %v4310 = vunpack.c.l.b16 %v3793
  %v4311 = vunpack.c.l.b16 %v3794
  %v4312 = vunpack.c.l.b16 %v3795
  %v4313 = vunpack.c.l.b16 %v3796
  %v4314 = vunpack.c.l.b16 %v3797
  %v4315 = vunpack.c.l.b16 %v3798
  %v4316 = vunpack.c.l.b16 %v3799
  %v4317 = vunpack.c.l.b16 %v3800
  %v4318 = vunpack.c.l.b16 %v3801
  %v4319 = vunpack.c.l.b16 %v3802
  %v4320 = vunpack.c.l.b16 %v3803
  %v4321 = vunpack.c.l.b16 %v3804
  %v4322 = vunpack.c.l.b16 %v3805
  %v4323 = vunpack.c.l.b16 %v3806
  %v4324 = vunpack.c.l.b16 %v3807
  %v4325 = vunpack.c.l.b16 %v3808
  %v4326 = vunpack.c.l.b16 %v3809
  %v4327 = vunpack.c.l.b16 %v3810
  %v4328 = vunpack.c.l.b16 %v3811
  %v4329 = vunpack.c.l.b16 %v3812
  %v4330 = vunpack.c.l.b16 %v3813
  %v4331 = vunpack.c.l.b16 %v3814
  %v4332 = vunpack.c.l.b16 %v3815
  %v4333 = vunpack.c.l.b16 %v3816
  %v4334 = vunpack.c.l.b16 %v3817
  %v4335 = vunpack.c.l.b16 %v3818
  %v4336 = vunpack.c.l.b16 %v3819
  %v4337 = vunpack.c.l.b16 %v3820
  %v4338 = vunpack.c.l.b16 %v3821
  %v4339 = vunpack.c.l.b16 %v3822
  %v4340 = vunpack.c.l.b16 %v3823
  %v4341 = vunpack.c.l.b16 %v3824
  %v4342 = vunpack.c.l.b16 %v3825
  %v4343 = vunpack.c.l.b16 %v3826
  %v4344 = vunpack.c.l.b16 %v3827
  %v4345 = vunpack.c.l.b16 %v3828
  %v4346 = vunpack.c.l.b16 %v3829
  %v4347 = vunpack.c.l.b16 %v3830
  %v4348 = vunpack.c.l.b16 %v3831
  %v4349 = vunpack.c.l.b16 %v3832
  %v4350 = vunpack.c.l.b16 %v3833
  %v4351 = vunpack.c.l.b16 %v3834
  %v4352 = vunpack.c.l.b16 %v3835
  %v4353 = vunpack.c.l.b16 %v3836
  %v4354 = vunpack.c.l.b16 %v3837
  %v4355 = vunpack.c.l.b16 %v3838
  %v4356 = vunpack.c.l.b16 %v3839
  %v4357 = vunpack.c.l.b16 %v3840
  %v4358 = vunpack.c.l.b16 %v3841
  %v4359 = vunpack.c.l.b16 %v3842
  %v4360 = vunpack.c.l.b16 %v3843
  %v4361 = vunpack.c.l.b16 %v3844
  %v4362 = vunpack.c.l.b16 %v3845
  %v4363 = vunpack.c.l.b16 %v3846
  %v4364 = vunpack.c.l.b16 %v3847
  %v4365 = vunpack.c.l.b16 %v3848
  %v4366 = vunpack.c.l.b16 %v3849
  %v4367 = vunpack.c.l.b16 %v3850
  %v4368 = vunpack.c.l.b16 %v3851
  %v4369 = vunpack.c.l.b16 %v3852
  %v4370 = vunpack.c.l.b16 %v3853
  %v4371 = vunpack.c.l.b16 %v3854
  %v4372 = vunpack.c.l.b16 %v3855
  %v4373 = vunpack.c.l.b16 %v3856
  %v4374 = vunpack.c.l.b16 %v3857
  %v4375 = vunpack.c.l.b16 %v3858
  %v4376 = vunpack.c.l.b16 %v3859
  %v4377 = vunpack.c.l.b16 %v3860
  %v4378 = vunpack.c.l.b16 %v3861
  %v4379 = vunpack.c.l.b16 %v3862
  %v4380 = vunpack.c.l.b16 %v3863
  %v4381 = vunpack.c.l.b16 %v3864
  %v4382 = vunpack.c.l.b16 %v3865
  %v4383 = vunpack.c.l.b16 %v3866
  %v4384 = vunpack.c.l.b16 %v3867
  %v4385 = vunpack.c.l.b16 %v3868
  %v4386 = vunpack.c.l.b16 %v3869
  %v4387 = vunpack.c.l.b16 %v3870
  %v4388 = vunpack.c.l.b16 %v3871
  %v4389 = vunpack.c.l.b16 %v3872
  %v4390 = vunpack.c.l.b16 %v3873
  %v4391 = vunpack.c.l.b16 %v3874
  %v4392 = vunpack.c.l.b16 %v3875
  %v4393 = vunpack.c.l.b16 %v3876
  %v4394 = vunpack.c.l.b16 %v3877
  %v4395 = vunpack.c.l.b16 %v3878
  %v4396 = vunpack.c.l.b16 %v3879
  %v4397 = vunpack.c.l.b16 %v3880
  %v4398 = vunpack.c.l.b16 %v3881
  %v4399 = vunpack.c.l.b16 %v3882
  %v4400 = vunpack.c.l.b16 %v3883
  %v4401 = vunpack.c.l.b16 %v3884
  %v4402 = vunpack.c.l.b16 %v3885
  %v4403 = vunpack.c.l.b16 %v3886
  %v4404 = vunpack.c.l.b16 %v3887
  %v4405 = vunpack.c.l.b16 %v3888
  %v4406 = vunpack.c.l.b16 %v3889
  %v4407 = vunpack.c.l.b16 %v3890
  %v4408 = vunpack.c.l.b16 %v3891
  %v4409 = vunpack.c.l.b16 %v3892
  %v4410 = vunpack.c.l.b16 %v3893
  %v4411 = vunpack.c.l.b16 %v3894
  %v4412 = vunpack.c.l.b16 %v3895
  %v4413 = vunpack.c.l.b16 %v3896
  %v4414 = vunpack.c.l.b16 %v3897
  %v4415 = vunpack.c.l.b16 %v3898
  %v4416 = vunpack.c.l.b16 %v3899
  %v4417 = vunpack.c.l.b16 %v3900
  %v4418 = vunpack.c.l.b16 %v3901
  %v4419 = vunpack.c.l.b16 %v3902
  %v4420 = vunpack.c.l.b16 %v3903
  %v4421 = vunpack.c.l.b16 %v3904
  %v4422 = vunpack.c.l.b16 %v3905
  %v4423 = vunpack.c.l.b16 %v3906
  %v4424 = vunpack.c.l.b16 %v3907
  %v4425 = vunpack.c.l.b16 %v3908
  %v4426 = vunpack.c.l.b16 %v3909
  %v4427 = vunpack.c.l.b16 %v3910
  %v4428 = vunpack.c.l.b16 %v3911
  %v4429 = vunpack.c.l.b16 %v3912
  %v4430 = vunpack.c.l.b16 %v3913
  %v4431 = vunpack.c.l.b16 %v3914
  %v4432 = vunpack.c.l.b16 %v3915
  %v4433 = vunpack.c.l.b16 %v3916
  %v4434 = vunpack.c.l.b16 %v3917
  %v4435 = vunpack.c.l.b16 %v3918
  %v4436 = vunpack.c.l.b16 %v3919
  %v4437 = vunpack.c.l.b16 %v3920
  %v4438 = vunpack.c.l.b16 %v3921
  %v4439 = vunpack.c.l.b16 %v3922
  %v4440 = vunpack.c.l.b16 %v3923
  %v4441 = vunpack.c.l.b16 %v3924
  %v4442 = vunpack.c.l.b16 %v3925
  %v4443 = vunpack.c.l.b16 %v3926
  %v4444 = vunpack.c.l.b16 %v3927
  %v4445 = vunpack.c.l.b16 %v3928
  %v4446 = vunpack.c.l.b16 %v3929
  %v4447 = vunpack.c.l.b16 %v3930
  %v4448 = vunpack.c.l.b16 %v3931
  %v4449 = vunpack.c.l.b16 %v3932
  %v4450 = vunpack.c.l.b16 %v3933
  %v4451 = vunpack.c.l.b16 %v3934
  %v4452 = vunpack.c.l.b16 %v3935
  %v4453 = vunpack.c.l.b16 %v3936
  %v4454 = vunpack.c.l.b16 %v3937
  %v4455 = vunpack.c.l.b16 %v3938
  %v4456 = vunpack.c.l.b16 %v3939
  %v4457 = vunpack.c.l.b16 %v3940
  %v4458 = vunpack.c.l.b16 %v3941
  %v4459 = vunpack.c.l.b16 %v3942
  %v4460 = vunpack.c.l.b16 %v3943
  %v4461 = vunpack.c.l.b16 %v3944
  %v4462 = vpack.c.b16 %v4207, %v4206
  %v4463 = vpack.c.b16 %v4209, %v4208
  %v4464 = vpack.c.b16 %v4211, %v4210
  %v4465 = vpack.c.b16 %v4213, %v4212
  %v4466 = vpack.c.b16 %v4215, %v4214
  %v4467 = vpack.c.b16 %v4217, %v4216
  %v4468 = vpack.c.b16 %v4219, %v4218
  %v4469 = vpack.c.b16 %v4221, %v4220
  %v4470 = vpack.c.b16 %v4223, %v4222
  %v4471 = vpack.c.b16 %v4225, %v4224
  %v4472 = vpack.c.b16 %v4227, %v4226
  %v4473 = vpack.c.b16 %v4229, %v4228
  %v4474 = vpack.c.b16 %v4231, %v4230
  %v4475 = vpack.c.b16 %v4233, %v4232
  %v4476 = vpack.c.b16 %v4235, %v4234
  %v4477 = vpack.c.b16 %v4237, %v4236
  %v4478 = vpack.c.b16 %v4239, %v4238
  %v4479 = vpack.c.b16 %v4241, %v4240
  %v4480 = vpack.c.b16 %v4243, %v4242
  %v4481 = vpack.c.b16 %v4245, %v4244
  %v4482 = vpack.c.b16 %v4247, %v4246
  %v4483 = vpack.c.b16 %v4249, %v4248
  %v4484 = vpack.c.b16 %v4251, %v4250
  %v4485 = vpack.c.b16 %v4253, %v4252
  %v4486 = vpack.c.b16 %v4255, %v4254
  %v4487 = vpack.c.b16 %v4257, %v4256
  %v4488 = vpack.c.b16 %v4259, %v4258
  %v4489 = vpack.c.b16 %v4261, %v4260
  %v4490 = vpack.c.b16 %v4263, %v4262
  %v4491 = vpack.c.b16 %v4265, %v4264
  %v4492 = vpack.c.b16 %v4267, %v4266
  %v4493 = vpack.c.b16 %v4269, %v4268
  %v4494 = vpack.c.b16 %v4271, %v4270
  %v4495 = vpack.c.b16 %v4273, %v4272
  %v4496 = vpack.c.b16 %v4275, %v4274
  %v4497 = vpack.c.b16 %v4277, %v4276
  %v4498 = vpack.c.b16 %v4279, %v4278
  %v4499 = vpack.c.b16 %v4281, %v4280
  %v4500 = vpack.c.b16 %v4283, %v4282
  %v4501 = vpack.c.b16 %v4285, %v4284
  %v4502 = vpack.c.b16 %v4287, %v4286
  %v4503 = vpack.c.b16 %v4289, %v4288
  %v4504 = vpack.c.b16 %v4291, %v4290
  %v4505 = vpack.c.b16 %v4293, %v4292
  %v4506 = vpack.c.b16 %v4295, %v4294
  %v4507 = vpack.c.b16 %v4297, %v4296
  %v4508 = vpack.c.b16 %v4299, %v4298
  %v4509 = vpack.c.b16 %v4301, %v4300
  %v4510 = vpack.c.b16 %v4303, %v4302
  %v4511 = vpack.c.b16 %v4305, %v4304
  %v4512 = vpack.c.b16 %v4307, %v4306
  %v4513 = vpack.c.b16 %v4309, %v4308
  %v4514 = vpack.c.b16 %v4311, %v4310
  %v4515 = vpack.c.b16 %v4313, %v4312
  %v4516 = vpack.c.b16 %v4315, %v4314
  %v4517 = vpack.c.b16 %v4317, %v4316
  %v4518 = vpack.c.b16 %v4319, %v4318
  %v4519 = vpack.c.b16 %v4321, %v4320
  %v4520 = vpack.c.b16 %v4323, %v4322
  %v4521 = vpack.c.b16 %v4325, %v4324
  %v4522 = vpack.c.b16 %v4327, %v4326
  %v4523 = vpack.c.b16 %v4329, %v4328
  %v4524 = vpack.c.b16 %v4331, %v4330
  %v4525 = vpack.c.b16 %v4333, %v4332
  %v4526 = vpack.c.b16 %v4335, %v4334
  %v4527 = vpack.c.b16 %v4337, %v4336
  %v4528 = vpack.c.b16 %v4339, %v4338
  %v4529 = vpack.c.b16 %v4341, %v4340
  %v4530 = vpack.c.b16 %v4343, %v4342
  %v4531 = vpack.c.b16 %v4345, %v4344
  %v4532 = vpack.c.b16 %v4347, %v4346
  %v4533 = vpack.c.b16 %v4349, %v4348
  %v4534 = vpack.c.b16 %v4351, %v4350
  %v4535 = vpack.c.b16 %v4353, %v4352
  %v4536 = vpack.c.b16 %v4355, %v4354
  %v4537 = vpack.c.b16 %v4357, %v4356
  %v4538 = vpack.c.b16 %v4359, %v4358
  %v4539 = vpack.c.b16 %v4361, %v4360
  %v4540 = vpack.c.b16 %v4363, %v4362
  %v4541 = vpack.c.b16 %v4365, %v4364
  %v4542 = vpack.c.b16 %v4367, %v4366
  %v4543 = vpack.c.b16 %v4369, %v4368
  %v4544 = vpack.c.b16 %v4371, %v4370
  %v4545 = vpack.c.b16 %v4373, %v4372
  %v4546 = vpack.c.b16 %v4375, %v4374
  %v4547 = vpack.c.b16 %v4377, %v4376
  %v4548 = vpack.c.b16 %v4379, %v4378
  %v4549 = vpack.c.b16 %v4381, %v4380
  %v4550 = vpack.c.b16 %v4383, %v4382
  %v4551 = vpack.c.b16 %v4385, %v4384
  %v4552 = vpack.c.b16 %v4387, %v4386
  %v4553 = vpack.c.b16 %v4389, %v4388
  %v4554 = vpack.c.b16 %v4391, %v4390
  %v4555 = vpack.c.b16 %v4393, %v4392
  %v4556 = vpack.c.b16 %v4395, %v4394
  %v4557 = vpack.c.b16 %v4397, %v4396
  %v4558 = vpack.c.b16 %v4399, %v4398
  %v4559 = vpack.c.b16 %v4401, %v4400
  %v4560 = vpack.c.b16 %v4403, %v4402
  %v4561 = vpack.c.b16 %v4405, %v4404
  %v4562 = vpack.c.b16 %v4407, %v4406
  %v4563 = vpack.c.b16 %v4409, %v4408
  %v4564 = vpack.c.b16 %v4411, %v4410
  %v4565 = vpack.c.b16 %v4413, %v4412
  %v4566 = vpack.c.b16 %v4415, %v4414
  %v4567 = vpack.c.b16 %v4417, %v4416
  %v4568 = vpack.c.b16 %v4419, %v4418
  %v4569 = vpack.c.b16 %v4421, %v4420
  %v4570 = vpack.c.b16 %v4423, %v4422
  %v4571 = vpack.c.b16 %v4425, %v4424
  %v4572 = vpack.c.b16 %v4427, %v4426
  %v4573 = vpack.c.b16 %v4429, %v4428
  %v4574 = vpack.c.b16 %v4431, %v4430
  %v4575 = vpack.c.b16 %v4433, %v4432
  %v4576 = vpack.c.b16 %v4435, %v4434
  %v4577 = vpack.c.b16 %v4437, %v4436
  %v4578 = vpack.c.b16 %v4439, %v4438
  %v4579 = vpack.c.b16 %v4441, %v4440
  %v4580 = vpack.c.b16 %v4443, %v4442
  %v4581 = vpack.c.b16 %v4445, %v4444
  %v4582 = vpack.c.b16 %v4447, %v4446
  %v4583 = vpack.c.b16 %v4449, %v4448
  %v4584 = vpack.c.b16 %v4451, %v4450
  %v4585 = vpack.c.b16 %v4453, %v4452
  %v4586 = vpack.c.b16 %v4455, %v4454
  %v4587 = vpack.c.b16 %v4457, %v4456
  %v4588 = vpack.c.b16 %v4459, %v4458
  %v4589 = vpack.c.b16 %v4461, %v4460
  %4718 = vmatprep.subr.bf16.mxu0 0
  %4719 = vmatpush1.bf16.msra.mxu0 %v4469
  %4720 = vmatprep.subr.bf16.mxu0 0
  %4721 = vmatpush1.bf16.msra.mxu0 %v4468
  %4722 = vmatprep.subr.bf16.mxu0 0
  %4723 = vmatpush1.bf16.msra.mxu0 %v4467
  %4724 = vmatprep.subr.bf16.mxu0 0
  %4725 = vmatpush1.bf16.msra.mxu0 %v4466
  %4726 = vmatprep.subr.bf16.mxu0 0
  %4727 = vmatpush1.bf16.msra.mxu0 %v4465
  %4728 = vmatprep.subr.bf16.mxu0 0
  %4729 = vmatpush1.bf16.msra.mxu0 %v4464
  %4730 = vmatprep.subr.bf16.mxu0 0
  %4731 = vmatpush1.bf16.msra.mxu0 %v4463
  %4732 = vmatprep.subr.bf16.mxu0 0
  %4733 = vmatpush1.bf16.msra.mxu0 %v4462
  %4734 = vmatprep.subr.bf16.mxu0 0
  %4735 = vmatpush2.bf16.msra.mxu0 %v4477
  %4736 = vmatprep.subr.bf16.mxu0 0
  %4737 = vmatpush2.bf16.msra.mxu0 %v4476
  %4738 = vmatprep.subr.bf16.mxu0 0
  %4739 = vmatpush2.bf16.msra.mxu0 %v4475
  %4740 = vmatprep.subr.bf16.mxu0 0
  %4741 = vmatpush2.bf16.msra.mxu0 %v4474
  %4742 = vmatprep.subr.bf16.mxu0 0
  %4743 = vmatpush2.bf16.msra.mxu0 %v4473
  %4744 = vmatprep.subr.bf16.mxu0 0
  %4745 = vmatpush2.bf16.msra.mxu0 %v4472
  %4746 = vmatprep.subr.bf16.mxu0 0
  %4747 = vmatpush2.bf16.msra.mxu0 %v4471
  %4748 = vmatprep.subr.bf16.mxu0 0
  %4749 = vmatpush2.bf16.msra.mxu0 %v4470
  %4750 = vmatprep.mubr.bf16.mxu0 %v3673
  %4751 = vmatmul.mubr.bf16.gmra.mxu0 %v3672
  %v4752 = vpop.f32.mrf.mxu0
  %v4753 = vadd.f32 %v3949, %v4752
  %v4754 = vpop.f32.mrf.mxu0
  %v4755 = vpop.f32.mrf.mxu0
  %v4756 = vadd.f32 %v3949, %v4755
  %v4757 = vpop.f32.mrf.mxu0
  %4758 = vdwg.mxu0
  %4759 = vmatprep.subr.bf16.mxu0 0
  %4760 = vmatpush1.bf16.msra.mxu0 %v4485
  %4761 = vmatprep.subr.bf16.mxu0 0
  %4762 = vmatpush1.bf16.msra.mxu0 %v4484
  %4763 = vmatprep.subr.bf16.mxu0 0
  %4764 = vmatpush1.bf16.msra.mxu0 %v4483
  %4765 = vmatprep.subr.bf16.mxu0 0
  %4766 = vmatpush1.bf16.msra.mxu0 %v4482
  %4767 = vmatprep.subr.bf16.mxu0 0
  %4768 = vmatpush1.bf16.msra.mxu0 %v4481
  %4769 = vmatprep.subr.bf16.mxu0 0
  %4770 = vmatpush1.bf16.msra.mxu0 %v4480
  %4771 = vmatprep.subr.bf16.mxu0 0
  %4772 = vmatpush1.bf16.msra.mxu0 %v4479
  %4773 = vmatprep.subr.bf16.mxu0 0
  %4774 = vmatpush1.bf16.msra.mxu0 %v4478
  %4775 = vmatprep.subr.bf16.mxu0 0
  %4776 = vmatpush2.bf16.msra.mxu0 %v4493
  %4777 = vmatprep.subr.bf16.mxu0 0
  %4778 = vmatpush2.bf16.msra.mxu0 %v4492
  %4779 = vmatprep.subr.bf16.mxu0 0
  %4780 = vmatpush2.bf16.msra.mxu0 %v4491
  %4781 = vmatprep.subr.bf16.mxu0 0
  %4782 = vmatpush2.bf16.msra.mxu0 %v4490
  %4783 = vmatprep.subr.bf16.mxu0 0
  %4784 = vmatpush2.bf16.msra.mxu0 %v4489
  %4785 = vmatprep.subr.bf16.mxu0 0
  %4786 = vmatpush2.bf16.msra.mxu0 %v4488
  %4787 = vmatprep.subr.bf16.mxu0 0
  %4788 = vmatpush2.bf16.msra.mxu0 %v4487
  %4789 = vmatprep.subr.bf16.mxu0 0
  %4790 = vmatpush2.bf16.msra.mxu0 %v4486
  %4791 = vmatprep.mubr.bf16.mxu0 %v3675
  %4792 = vmatmul.mubr.bf16.gmra.mxu0 %v3674
  %v4793 = vpop.f32.mrf.mxu0
  %v4794 = vadd.f32 %v4753, %v4793
  %v4795 = vpop.f32.mrf.mxu0
  %v4796 = vpop.f32.mrf.mxu0
  %v4797 = vadd.f32 %v4756, %v4796
  %v4798 = vpop.f32.mrf.mxu0
  %4799 = vdwg.mxu0
  %4800 = vmatprep.subr.bf16.mxu0 0
  %4801 = vmatpush1.bf16.msra.mxu0 %v4501
  %4802 = vmatprep.subr.bf16.mxu0 0
  %4803 = vmatpush1.bf16.msra.mxu0 %v4500
  %4804 = vmatprep.subr.bf16.mxu0 0
  %4805 = vmatpush1.bf16.msra.mxu0 %v4499
  %4806 = vmatprep.subr.bf16.mxu0 0
  %4807 = vmatpush1.bf16.msra.mxu0 %v4498
  %4808 = vmatprep.subr.bf16.mxu0 0
  %4809 = vmatpush1.bf16.msra.mxu0 %v4497
  %4810 = vmatprep.subr.bf16.mxu0 0
  %4811 = vmatpush1.bf16.msra.mxu0 %v4496
  %4812 = vmatprep.subr.bf16.mxu0 0
  %4813 = vmatpush1.bf16.msra.mxu0 %v4495
  %4814 = vmatprep.subr.bf16.mxu0 0
  %4815 = vmatpush1.bf16.msra.mxu0 %v4494
  %4816 = vmatprep.subr.bf16.mxu0 0
  %4817 = vmatpush2.bf16.msra.mxu0 %v4509
  %4818 = vmatprep.subr.bf16.mxu0 0
  %4819 = vmatpush2.bf16.msra.mxu0 %v4508
  %4820 = vmatprep.subr.bf16.mxu0 0
  %4821 = vmatpush2.bf16.msra.mxu0 %v4507
  %4822 = vmatprep.subr.bf16.mxu0 0
  %4823 = vmatpush2.bf16.msra.mxu0 %v4506
  %4824 = vmatprep.subr.bf16.mxu0 0
  %4825 = vmatpush2.bf16.msra.mxu0 %v4505
  %4826 = vmatprep.subr.bf16.mxu0 0
  %4827 = vmatpush2.bf16.msra.mxu0 %v4504
  %4828 = vmatprep.subr.bf16.mxu0 0
  %4829 = vmatpush2.bf16.msra.mxu0 %v4503
  %4830 = vmatprep.subr.bf16.mxu0 0
  %4831 = vmatpush2.bf16.msra.mxu0 %v4502
  %4832 = vmatprep.mubr.bf16.mxu0 %v3677
  %4833 = vmatmul.mubr.bf16.gmra.mxu0 %v3676
  %v4834 = vpop.f32.mrf.mxu0
  %v4835 = vadd.f32 %v4794, %v4834
  %v4836 = vpop.f32.mrf.mxu0
  %v4837 = vpop.f32.mrf.mxu0
  %v4838 = vadd.f32 %v4797, %v4837
  %v4839 = vpop.f32.mrf.mxu0
  %4840 = vdwg.mxu0
  %4841 = vmatprep.subr.bf16.mxu0 0
  %4842 = vmatpush1.bf16.msra.mxu0 %v4517
  %4843 = vmatprep.subr.bf16.mxu0 0
  %4844 = vmatpush1.bf16.msra.mxu0 %v4516
  %4845 = vmatprep.subr.bf16.mxu0 0
  %4846 = vmatpush1.bf16.msra.mxu0 %v4515
  %4847 = vmatprep.subr.bf16.mxu0 0
  %4848 = vmatpush1.bf16.msra.mxu0 %v4514
  %4849 = vmatprep.subr.bf16.mxu0 0
  %4850 = vmatpush1.bf16.msra.mxu0 %v4513
  %4851 = vmatprep.subr.bf16.mxu0 0
  %4852 = vmatpush1.bf16.msra.mxu0 %v4512
  %4853 = vmatprep.subr.bf16.mxu0 0
  %4854 = vmatpush1.bf16.msra.mxu0 %v4511
  %4855 = vmatprep.subr.bf16.mxu0 0
  %4856 = vmatpush1.bf16.msra.mxu0 %v4510
  %4857 = vmatprep.subr.bf16.mxu0 0
  %4858 = vmatpush2.bf16.msra.mxu0 %v4525
  %4859 = vmatprep.subr.bf16.mxu0 0
  %4860 = vmatpush2.bf16.msra.mxu0 %v4524
  %4861 = vmatprep.subr.bf16.mxu0 0
  %4862 = vmatpush2.bf16.msra.mxu0 %v4523
  %4863 = vmatprep.subr.bf16.mxu0 0
  %4864 = vmatpush2.bf16.msra.mxu0 %v4522
  %4865 = vmatprep.subr.bf16.mxu0 0
  %4866 = vmatpush2.bf16.msra.mxu0 %v4521
  %4867 = vmatprep.subr.bf16.mxu0 0
  %4868 = vmatpush2.bf16.msra.mxu0 %v4520
  %4869 = vmatprep.subr.bf16.mxu0 0
  %4870 = vmatpush2.bf16.msra.mxu0 %v4519
  %4871 = vmatprep.subr.bf16.mxu0 0
  %4872 = vmatpush2.bf16.msra.mxu0 %v4518
  %4873 = vmatprep.mubr.bf16.mxu0 %v3679
  %4874 = vmatmul.mubr.bf16.gmra.mxu0 %v3678
  %v4875 = vpop.f32.mrf.mxu0
  %v4876 = vadd.f32 %v4835, %v4875
  %v4877 = vpop.f32.mrf.mxu0
  %v4878 = vpop.f32.mrf.mxu0
  %v4879 = vadd.f32 %v4838, %v4878
  %v4880 = vpop.f32.mrf.mxu0
  %4881 = vdwg.mxu0
  %4882 = vmatprep.subr.bf16.mxu0 0
  %4883 = vmatpush1.bf16.msra.mxu0 %v4533
  %4884 = vmatprep.subr.bf16.mxu0 0
  %4885 = vmatpush1.bf16.msra.mxu0 %v4532
  %4886 = vmatprep.subr.bf16.mxu0 0
  %4887 = vmatpush1.bf16.msra.mxu0 %v4531
  %4888 = vmatprep.subr.bf16.mxu0 0
  %4889 = vmatpush1.bf16.msra.mxu0 %v4530
  %4890 = vmatprep.subr.bf16.mxu0 0
  %4891 = vmatpush1.bf16.msra.mxu0 %v4529
  %4892 = vmatprep.subr.bf16.mxu0 0
  %4893 = vmatpush1.bf16.msra.mxu0 %v4528
  %4894 = vmatprep.subr.bf16.mxu0 0
  %4895 = vmatpush1.bf16.msra.mxu0 %v4527
  %4896 = vmatprep.subr.bf16.mxu0 0
  %4897 = vmatpush1.bf16.msra.mxu0 %v4526
  %4898 = vmatprep.subr.bf16.mxu0 0
  %4899 = vmatpush2.bf16.msra.mxu0 %v4541
  %4900 = vmatprep.subr.bf16.mxu0 0
  %4901 = vmatpush2.bf16.msra.mxu0 %v4540
  %4902 = vmatprep.subr.bf16.mxu0 0
  %4903 = vmatpush2.bf16.msra.mxu0 %v4539
  %4904 = vmatprep.subr.bf16.mxu0 0
  %4905 = vmatpush2.bf16.msra.mxu0 %v4538
  %4906 = vmatprep.subr.bf16.mxu0 0
  %4907 = vmatpush2.bf16.msra.mxu0 %v4537
  %4908 = vmatprep.subr.bf16.mxu0 0
  %4909 = vmatpush2.bf16.msra.mxu0 %v4536
  %4910 = vmatprep.subr.bf16.mxu0 0
  %4911 = vmatpush2.bf16.msra.mxu0 %v4535
  %4912 = vmatprep.subr.bf16.mxu0 0
  %4913 = vmatpush2.bf16.msra.mxu0 %v4534
  %4914 = vmatprep.mubr.bf16.mxu0 %v3681
  %4915 = vmatmul.mubr.bf16.gmra.mxu0 %v3680
  %v4916 = vpop.f32.mrf.mxu0
  %v4917 = vadd.f32 %v4876, %v4916
  %v4918 = vpop.f32.mrf.mxu0
  %v4919 = vpop.f32.mrf.mxu0
  %v4920 = vadd.f32 %v4879, %v4919
  %v4921 = vpop.f32.mrf.mxu0
  %4922 = vdwg.mxu0
  %4923 = vmatprep.subr.bf16.mxu0 0
  %4924 = vmatpush1.bf16.msra.mxu0 %v4549
  %4925 = vmatprep.subr.bf16.mxu0 0
  %4926 = vmatpush1.bf16.msra.mxu0 %v4548
  %4927 = vmatprep.subr.bf16.mxu0 0
  %4928 = vmatpush1.bf16.msra.mxu0 %v4547
  %4929 = vmatprep.subr.bf16.mxu0 0
  %4930 = vmatpush1.bf16.msra.mxu0 %v4546
  %4931 = vmatprep.subr.bf16.mxu0 0
  %4932 = vmatpush1.bf16.msra.mxu0 %v4545
  %4933 = vmatprep.subr.bf16.mxu0 0
  %4934 = vmatpush1.bf16.msra.mxu0 %v4544
  %4935 = vmatprep.subr.bf16.mxu0 0
  %4936 = vmatpush1.bf16.msra.mxu0 %v4543
  %4937 = vmatprep.subr.bf16.mxu0 0
  %4938 = vmatpush1.bf16.msra.mxu0 %v4542
  %4939 = vmatprep.subr.bf16.mxu0 0
  %4940 = vmatpush2.bf16.msra.mxu0 %v4557
  %4941 = vmatprep.subr.bf16.mxu0 0
  %4942 = vmatpush2.bf16.msra.mxu0 %v4556
  %4943 = vmatprep.subr.bf16.mxu0 0
  %4944 = vmatpush2.bf16.msra.mxu0 %v4555
  %4945 = vmatprep.subr.bf16.mxu0 0
  %4946 = vmatpush2.bf16.msra.mxu0 %v4554
  %4947 = vmatprep.subr.bf16.mxu0 0
  %4948 = vmatpush2.bf16.msra.mxu0 %v4553
  %4949 = vmatprep.subr.bf16.mxu0 0
  %4950 = vmatpush2.bf16.msra.mxu0 %v4552
  %4951 = vmatprep.subr.bf16.mxu0 0
  %4952 = vmatpush2.bf16.msra.mxu0 %v4551
  %4953 = vmatprep.subr.bf16.mxu0 0
  %4954 = vmatpush2.bf16.msra.mxu0 %v4550
  %4955 = vmatprep.mubr.bf16.mxu0 %v3683
  %4956 = vmatmul.mubr.bf16.gmra.mxu0 %v3682
  %v4957 = vpop.f32.mrf.mxu0
  %v4958 = vadd.f32 %v4917, %v4957
  %v4959 = vpop.f32.mrf.mxu0
  %v4960 = vpop.f32.mrf.mxu0
  %v4961 = vadd.f32 %v4920, %v4960
  %v4962 = vpop.f32.mrf.mxu0
  %4963 = vdwg.mxu0
  %4964 = vmatprep.subr.bf16.mxu0 0
  %4965 = vmatpush1.bf16.msra.mxu0 %v4565
  %4966 = vmatprep.subr.bf16.mxu0 0
  %4967 = vmatpush1.bf16.msra.mxu0 %v4564
  %4968 = vmatprep.subr.bf16.mxu0 0
  %4969 = vmatpush1.bf16.msra.mxu0 %v4563
  %4970 = vmatprep.subr.bf16.mxu0 0
  %4971 = vmatpush1.bf16.msra.mxu0 %v4562
  %4972 = vmatprep.subr.bf16.mxu0 0
  %4973 = vmatpush1.bf16.msra.mxu0 %v4561
  %4974 = vmatprep.subr.bf16.mxu0 0
  %4975 = vmatpush1.bf16.msra.mxu0 %v4560
  %4976 = vmatprep.subr.bf16.mxu0 0
  %4977 = vmatpush1.bf16.msra.mxu0 %v4559
  %4978 = vmatprep.subr.bf16.mxu0 0
  %4979 = vmatpush1.bf16.msra.mxu0 %v4558
  %4980 = vmatprep.subr.bf16.mxu0 0
  %4981 = vmatpush2.bf16.msra.mxu0 %v4573
  %4982 = vmatprep.subr.bf16.mxu0 0
  %4983 = vmatpush2.bf16.msra.mxu0 %v4572
  %4984 = vmatprep.subr.bf16.mxu0 0
  %4985 = vmatpush2.bf16.msra.mxu0 %v4571
  %4986 = vmatprep.subr.bf16.mxu0 0
  %4987 = vmatpush2.bf16.msra.mxu0 %v4570
  %4988 = vmatprep.subr.bf16.mxu0 0
  %4989 = vmatpush2.bf16.msra.mxu0 %v4569
  %4990 = vmatprep.subr.bf16.mxu0 0
  %4991 = vmatpush2.bf16.msra.mxu0 %v4568
  %4992 = vmatprep.subr.bf16.mxu0 0
  %4993 = vmatpush2.bf16.msra.mxu0 %v4567
  %4994 = vmatprep.subr.bf16.mxu0 0
  %4995 = vmatpush2.bf16.msra.mxu0 %v4566
  %4996 = vmatprep.mubr.bf16.mxu0 %v3685
  %4997 = vmatmul.mubr.bf16.gmra.mxu0 %v3684
  %v4998 = vpop.f32.mrf.mxu0
  %v4999 = vadd.f32 %v4958, %v4998
  %v5000 = vpop.f32.mrf.mxu0
  %v5001 = vpop.f32.mrf.mxu0
  %v5002 = vadd.f32 %v4961, %v5001
  %v5003 = vpop.f32.mrf.mxu0
  %5004 = vdwg.mxu0
  %5005 = vmatprep.subr.bf16.mxu0 0
  %5006 = vmatpush1.bf16.msra.mxu0 %v4581
  %5007 = vmatprep.subr.bf16.mxu0 0
  %5008 = vmatpush1.bf16.msra.mxu0 %v4580
  %5009 = vmatprep.subr.bf16.mxu0 0
  %5010 = vmatpush1.bf16.msra.mxu0 %v4579
  %5011 = vmatprep.subr.bf16.mxu0 0
  %5012 = vmatpush1.bf16.msra.mxu0 %v4578
  %5013 = vmatprep.subr.bf16.mxu0 0
  %5014 = vmatpush1.bf16.msra.mxu0 %v4577
  %5015 = vmatprep.subr.bf16.mxu0 0
  %5016 = vmatpush1.bf16.msra.mxu0 %v4576
  %5017 = vmatprep.subr.bf16.mxu0 0
  %5018 = vmatpush1.bf16.msra.mxu0 %v4575
  %5019 = vmatprep.subr.bf16.mxu0 0
  %5020 = vmatpush1.bf16.msra.mxu0 %v4574
  %5021 = vmatprep.subr.bf16.mxu0 0
  %5022 = vmatpush2.bf16.msra.mxu0 %v4589
  %5023 = vmatprep.subr.bf16.mxu0 0
  %5024 = vmatpush2.bf16.msra.mxu0 %v4588
  %5025 = vmatprep.subr.bf16.mxu0 0
  %5026 = vmatpush2.bf16.msra.mxu0 %v4587
  %5027 = vmatprep.subr.bf16.mxu0 0
  %5028 = vmatpush2.bf16.msra.mxu0 %v4586
  %5029 = vmatprep.subr.bf16.mxu0 0
  %5030 = vmatpush2.bf16.msra.mxu0 %v4585
  %5031 = vmatprep.subr.bf16.mxu0 0
  %5032 = vmatpush2.bf16.msra.mxu0 %v4584
  %5033 = vmatprep.subr.bf16.mxu0 0
  %5034 = vmatpush2.bf16.msra.mxu0 %v4583
  %5035 = vmatprep.subr.bf16.mxu0 0
  %5036 = vmatpush2.bf16.msra.mxu0 %v4582
  %5037 = vmatprep.mubr.bf16.mxu0 %v3687
  %5038 = vmatmul.mubr.bf16.gmra.mxu0 %v3686
  %v5039 = vpop.f32.mrf.mxu0
  %v5040 = vadd.f32 %v4999, %v5039
  %v5041 = vpop.f32.mrf.mxu0
  %v5042 = vpop.f32.mrf.mxu0
  %v5043 = vadd.f32 %v5002, %v5042
  %v5044 = vpop.f32.mrf.mxu0
  %5045 = vdwg.mxu0
  %v5046 = vadd.f32 %v2819, %v5040
  %v5047 = vadd.f32 %v2820, %v5043
  %v5048 = vld [vmem:[%s13 + $0x1] sm:$0x1]
  %v5049 = vld [vmem:[%s14 + $0x1] sm:$0x1]
  %v5050 = vsel %vm179, %v5046, 0.0
  %5051 = vadd.xlane.f32.xlu0 %v5050
  %v5052 = vpop.xlane.xlu0 %5051
  %v5053 = vsel %vm179, %v5047, 0.0
  %5054 = vadd.xlane.f32.xlu0 %v5053
  %v5055 = vpop.xlane.xlu0 %5054
  %v5056 = vmul.f32 %v5052, %v316
  %v5057 = vmul.f32 %v5055, %v316
  %v5058 = vsub.f32 %v5046, %v5056
  %v5059 = vsub.f32 %v5047, %v5057
  %v5060 = vmul.f32 %v5058, %v5058
  %v5061 = vmul.f32 %v5059, %v5059
  %v5062 = vsel %vm179, %v5060, 0.0
  %5063 = vadd.xlane.f32.xlu0 %v5062
  %v5064 = vpop.xlane.xlu0 %5063
  %v5065 = vsel %vm179, %v5061, 0.0
  %5066 = vadd.xlane.f32.xlu0 %v5065
  %v5067 = vpop.xlane.xlu0 %5066
  %v5068 = vmul.f32 %v5064, %v316
  %v5069 = vmul.f32 %v5067, %v316
  %v5070 = vadd.f32 %v5068, 1e-05
  %v5071 = vadd.f32 %v5069, 1e-05
  %v5072 = vrsqrt.pop %v5070
  %v5073 = vrsqrt.pop %v5071
  %v5074 = vmul.f32 %v5058, %v5072
  %v5075 = vmul.f32 %v5059, %v5073
  %v5076 = vlaneseq
  %v5077 = vshrl.u32 %v5076, 7
  %v5078 = vsub.s32 0, %v5077
  %v5079 = vrot.slane %v5048, %v5078
  %v5080 = vmul.f32 %v5074, %v5079
  %v5081 = vmul.f32 %v5075, %v5079
  %v5082 = vlaneseq
  %v5083 = vshrl.u32 %v5082, 7
  %v5084 = vsub.s32 0, %v5083
  %v5085 = vrot.slane %v5049, %v5084
  %v5086 = vadd.f32 %v5080, %v5085
  %v5087 = vadd.f32 %v5081, %v5085
  %v5088 = vpack.c.bf16 %v5087, %v5086
  %v5089 = vld [vmem:[%s15] sm:$0xf]
  %v5090 = vld [vmem:[%s15 + $0x4] sm:$0xf]
  %v5091 = vld [vmem:[%s15 + $0x8] sm:$0xf]
  %v5092 = vld [vmem:[%s15 + $0xc] sm:$0xf]
  %v5093 = vld [vmem:[%s15 + $0x10] sm:$0xf]
  %v5094 = vld [vmem:[%s15 + $0x14] sm:$0xf]
  %v5095 = vld [vmem:[%s15 + $0x18] sm:$0xf]
  %v5096 = vld [vmem:[%s15 + $0x1c] sm:$0xf]
  %v5097 = vld [vmem:[%s16] sm:$0x1]
  %v5099 = vlaneseq
  %v5100 = vshrl.u32 %v5099, 7
  %v5101 = vsub.s32 0, %v5100
  %v5102 = vrot.slane %v5097, %v5101
  %v5112 = vunpack.c.l.b16 %v5089
  %v5113 = vunpack.c.l.b16 %v5090
  %v5114 = vunpack.c.l.b16 %v5091
  %v5115 = vunpack.c.l.b16 %v5092
  %v5116 = vunpack.c.l.b16 %v5093
  %v5117 = vunpack.c.l.b16 %v5094
  %v5118 = vunpack.c.l.b16 %v5095
  %v5119 = vunpack.c.l.b16 %v5096
  %v5120 = vpack.c.b16 %v5113, %v5112
  %v5121 = vpack.c.b16 %v5115, %v5114
  %v5122 = vpack.c.b16 %v5117, %v5116
  %v5123 = vpack.c.b16 %v5119, %v5118
  %v5129 = vsel %vm179, %v5088, 0
  %5131 = vmatprep.subr.bf16.mxu0 0
  %5132 = vmatpush1.bf16.msra.mxu0 0
  %5133 = vmatprep.subr.bf16.mxu0 0
  %5134 = vmatpush1.bf16.msra.mxu0 0
  %5135 = vmatprep.subr.bf16.mxu0 0
  %5136 = vmatpush1.bf16.msra.mxu0 0
  %5137 = vmatprep.subr.bf16.mxu0 0
  %5138 = vmatpush1.bf16.msra.mxu0 0
  %5139 = vmatprep.subr.bf16.mxu0 0
  %5140 = vmatpush1.bf16.msra.mxu0 %v5123
  %5141 = vmatprep.subr.bf16.mxu0 0
  %5142 = vmatpush1.bf16.msra.mxu0 %v5122
  %5143 = vmatprep.subr.bf16.mxu0 0
  %5144 = vmatpush1.bf16.msra.mxu0 %v5121
  %5145 = vmatprep.subr.bf16.mxu0 0
  %5146 = vmatpush1.bf16.msra.mxu0 %v5120
  %5147 = vmatprep.subr.bf16.mxu0 0
  %5148 = vmatpush2.bf16.msra.mxu0 0
  %5149 = vmatprep.subr.bf16.mxu0 0
  %5150 = vmatpush2.bf16.msra.mxu0 0
  %5151 = vmatprep.subr.bf16.mxu0 0
  %5152 = vmatpush2.bf16.msra.mxu0 0
  %5153 = vmatprep.subr.bf16.mxu0 0
  %5154 = vmatpush2.bf16.msra.mxu0 0
  %5155 = vmatprep.subr.bf16.mxu0 0
  %5156 = vmatpush2.bf16.msra.mxu0 0
  %5157 = vmatprep.subr.bf16.mxu0 0
  %5158 = vmatpush2.bf16.msra.mxu0 0
  %5159 = vmatprep.subr.bf16.mxu0 0
  %5160 = vmatpush2.bf16.msra.mxu0 0
  %5161 = vmatprep.subr.bf16.mxu0 0
  %5162 = vmatpush2.bf16.msra.mxu0 0
  %5163 = vmatprep.mubr.bf16.mxu0 0
  %5164 = vmatmul.mubr.bf16.gmra.mxu0 %v5129
  %v5165 = vpop.f32.mrf.mxu0
  %v5166 = vadd.f32 %v5102, %v5165
  %v5167 = vpop.f32.mrf.mxu0
  %v5168 = vpop.f32.mrf.mxu0
  %v5169 = vadd.f32 %v5102, %v5168
  %v5170 = vpop.f32.mrf.mxu0
  %5171 = vdwg.mxu0
  %v5172 = vmax.f32 %v5166, 0.0
  %v5173 = vmax.f32 %v5169, 0.0
  %v5174 = vpack.c.bf16 %v5173, %v5172
  %v5175 = vld [vmem:[%s17] sm:$0xf]
  %v5176 = vld [vmem:[%s17 + $0x4] sm:$0xf]
  %v5177 = vld [vmem:[%s17 + $0x8] sm:$0xf]
  %v5178 = vld [vmem:[%s17 + $0xc] sm:$0xf]
  %v5179 = vld [vmem:[%s17 + $0x10] sm:$0xf]
  %v5180 = vld [vmem:[%s17 + $0x14] sm:$0xf]
  %v5181 = vld [vmem:[%s17 + $0x18] sm:$0xf]
  %v5182 = vld [vmem:[%s17 + $0x1c] sm:$0xf]
  %v5183 = vld [vmem:[%s17 + $0x20] sm:$0xf]
  %v5184 = vld [vmem:[%s17 + $0x24] sm:$0xf]
  %v5185 = vld [vmem:[%s17 + $0x28] sm:$0xf]
  %v5186 = vld [vmem:[%s17 + $0x2c] sm:$0xf]
  %v5187 = vld [vmem:[%s17 + $0x30] sm:$0xf]
  %v5188 = vld [vmem:[%s17 + $0x34] sm:$0xf]
  %v5189 = vld [vmem:[%s17 + $0x38] sm:$0xf]
  %v5190 = vld [vmem:[%s17 + $0x3c] sm:$0xf]
  %v5191 = vld [vmem:[%s18] sm:$0x1]
  %v5193 = vlaneseq
  %v5194 = vshrl.u32 %v5193, 7
  %v5195 = vsub.s32 0, %v5194
  %v5196 = vrot.slane %v5191, %v5195
  %v5214 = vunpack.c.l.b16 %v5175
  %v5215 = vunpack.c.l.b16 %v5176
  %v5216 = vunpack.c.l.b16 %v5177
  %v5217 = vunpack.c.l.b16 %v5178
  %v5218 = vunpack.c.l.b16 %v5179
  %v5219 = vunpack.c.l.b16 %v5180
  %v5220 = vunpack.c.l.b16 %v5181
  %v5221 = vunpack.c.l.b16 %v5182
  %v5222 = vunpack.c.l.b16 %v5183
  %v5223 = vunpack.c.l.b16 %v5184
  %v5224 = vunpack.c.l.b16 %v5185
  %v5225 = vunpack.c.l.b16 %v5186
  %v5226 = vunpack.c.l.b16 %v5187
  %v5227 = vunpack.c.l.b16 %v5188
  %v5228 = vunpack.c.l.b16 %v5189
  %v5229 = vunpack.c.l.b16 %v5190
  %v5230 = vpack.c.b16 %v5215, %v5214
  %v5231 = vpack.c.b16 %v5217, %v5216
  %v5232 = vpack.c.b16 %v5219, %v5218
  %v5233 = vpack.c.b16 %v5221, %v5220
  %v5234 = vpack.c.b16 %v5223, %v5222
  %v5235 = vpack.c.b16 %v5225, %v5224
  %v5236 = vpack.c.b16 %v5227, %v5226
  %v5237 = vpack.c.b16 %v5229, %v5228
  %5246 = vmatprep.subr.bf16.mxu0 0
  %5247 = vmatpush1.bf16.msra.mxu0 %v5237
  %5248 = vmatprep.subr.bf16.mxu0 0
  %5249 = vmatpush1.bf16.msra.mxu0 %v5236
  %5250 = vmatprep.subr.bf16.mxu0 0
  %5251 = vmatpush1.bf16.msra.mxu0 %v5235
  %5252 = vmatprep.subr.bf16.mxu0 0
  %5253 = vmatpush1.bf16.msra.mxu0 %v5234
  %5254 = vmatprep.subr.bf16.mxu0 0
  %5255 = vmatpush1.bf16.msra.mxu0 %v5233
  %5256 = vmatprep.subr.bf16.mxu0 0
  %5257 = vmatpush1.bf16.msra.mxu0 %v5232
  %5258 = vmatprep.subr.bf16.mxu0 0
  %5259 = vmatpush1.bf16.msra.mxu0 %v5231
  %5260 = vmatprep.subr.bf16.mxu0 0
  %5261 = vmatpush1.bf16.msra.mxu0 %v5230
  %5262 = vmatprep.subr.bf16.mxu0 0
  %5263 = vmatpush2.bf16.msra.mxu0 0
  %5264 = vmatprep.subr.bf16.mxu0 0
  %5265 = vmatpush2.bf16.msra.mxu0 0
  %5266 = vmatprep.subr.bf16.mxu0 0
  %5267 = vmatpush2.bf16.msra.mxu0 0
  %5268 = vmatprep.subr.bf16.mxu0 0
  %5269 = vmatpush2.bf16.msra.mxu0 0
  %5270 = vmatprep.subr.bf16.mxu0 0
  %5271 = vmatpush2.bf16.msra.mxu0 0
  %5272 = vmatprep.subr.bf16.mxu0 0
  %5273 = vmatpush2.bf16.msra.mxu0 0
  %5274 = vmatprep.subr.bf16.mxu0 0
  %5275 = vmatpush2.bf16.msra.mxu0 0
  %5276 = vmatprep.subr.bf16.mxu0 0
  %5277 = vmatpush2.bf16.msra.mxu0 0
  %5278 = vmatprep.mubr.bf16.mxu0 0
  %5279 = vmatmul.mubr.bf16.gmra.mxu0 %v5174
  %v5280 = vpop.f32.mrf.mxu0
  %v5281 = vadd.f32 %v5196, %v5280
  %v5282 = vpop.f32.mrf.mxu0
  %v5283 = vpop.f32.mrf.mxu0
  %v5284 = vadd.f32 %v5196, %v5283
  %v5285 = vpop.f32.mrf.mxu0
  %5286 = vdwg.mxu0
  %v5287 = vld [vmem:[%s19] sm:$0xf]
  %v5288 = vld [vmem:[%s19 + $0x4] sm:$0xf]
  %v5289 = vld [vmem:[%s19 + $0x8] sm:$0xf]
  %v5290 = vld [vmem:[%s19 + $0xc] sm:$0xf]
  %v5291 = vld [vmem:[%s19 + $0x10] sm:$0xf]
  %v5292 = vld [vmem:[%s19 + $0x14] sm:$0xf]
  %v5293 = vld [vmem:[%s19 + $0x18] sm:$0xf]
  %v5294 = vld [vmem:[%s19 + $0x1c] sm:$0xf]
  %v5295 = vld [vmem:[%s20] sm:$0x1]
  %v5297 = vlaneseq
  %v5298 = vshrl.u32 %v5297, 7
  %v5299 = vsub.s32 0, %v5298
  %v5300 = vrot.slane %v5295, %v5299
  %v5310 = vunpack.c.l.b16 %v5287
  %v5311 = vunpack.c.l.b16 %v5288
  %v5312 = vunpack.c.l.b16 %v5289
  %v5313 = vunpack.c.l.b16 %v5290
  %v5314 = vunpack.c.l.b16 %v5291
  %v5315 = vunpack.c.l.b16 %v5292
  %v5316 = vunpack.c.l.b16 %v5293
  %v5317 = vunpack.c.l.b16 %v5294
  %v5318 = vpack.c.b16 %v5311, %v5310
  %v5319 = vpack.c.b16 %v5313, %v5312
  %v5320 = vpack.c.b16 %v5315, %v5314
  %v5321 = vpack.c.b16 %v5317, %v5316
  %5326 = vmatprep.subr.bf16.mxu0 0
  %5327 = vmatpush1.bf16.msra.mxu0 0
  %5328 = vmatprep.subr.bf16.mxu0 0
  %5329 = vmatpush1.bf16.msra.mxu0 0
  %5330 = vmatprep.subr.bf16.mxu0 0
  %5331 = vmatpush1.bf16.msra.mxu0 0
  %5332 = vmatprep.subr.bf16.mxu0 0
  %5333 = vmatpush1.bf16.msra.mxu0 0
  %5334 = vmatprep.subr.bf16.mxu0 0
  %5335 = vmatpush1.bf16.msra.mxu0 %v5321
  %5336 = vmatprep.subr.bf16.mxu0 0
  %5337 = vmatpush1.bf16.msra.mxu0 %v5320
  %5338 = vmatprep.subr.bf16.mxu0 0
  %5339 = vmatpush1.bf16.msra.mxu0 %v5319
  %5340 = vmatprep.subr.bf16.mxu0 0
  %5341 = vmatpush1.bf16.msra.mxu0 %v5318
  %5342 = vmatprep.subr.bf16.mxu0 0
  %5343 = vmatpush2.bf16.msra.mxu0 0
  %5344 = vmatprep.subr.bf16.mxu0 0
  %5345 = vmatpush2.bf16.msra.mxu0 0
  %5346 = vmatprep.subr.bf16.mxu0 0
  %5347 = vmatpush2.bf16.msra.mxu0 0
  %5348 = vmatprep.subr.bf16.mxu0 0
  %5349 = vmatpush2.bf16.msra.mxu0 0
  %5350 = vmatprep.subr.bf16.mxu0 0
  %5351 = vmatpush2.bf16.msra.mxu0 0
  %5352 = vmatprep.subr.bf16.mxu0 0
  %5353 = vmatpush2.bf16.msra.mxu0 0
  %5354 = vmatprep.subr.bf16.mxu0 0
  %5355 = vmatpush2.bf16.msra.mxu0 0
  %5356 = vmatprep.subr.bf16.mxu0 0
  %5357 = vmatpush2.bf16.msra.mxu0 0
  %5358 = vmatprep.mubr.bf16.mxu0 0
  %5359 = vmatmul.mubr.bf16.gmra.mxu0 %v5129
  %v5360 = vpop.f32.mrf.mxu0
  %v5361 = vadd.f32 %v5300, %v5360
  %v5362 = vpop.f32.mrf.mxu0
  %v5363 = vpop.f32.mrf.mxu0
  %v5364 = vadd.f32 %v5300, %v5363
  %v5365 = vpop.f32.mrf.mxu0
  %5366 = vdwg.mxu0
  %v5367 = vmax.f32 %v5361, 0.0
  %v5368 = vmax.f32 %v5364, 0.0
  %v5369 = vpack.c.bf16 %v5368, %v5367
  %v5370 = vld [vmem:[%s21] sm:$0xf]
  %v5371 = vld [vmem:[%s21 + $0x4] sm:$0xf]
  %v5372 = vld [vmem:[%s21 + $0x8] sm:$0xf]
  %v5373 = vld [vmem:[%s21 + $0xc] sm:$0xf]
  %v5374 = vld [vmem:[%s21 + $0x10] sm:$0xf]
  %v5375 = vld [vmem:[%s21 + $0x14] sm:$0xf]
  %v5376 = vld [vmem:[%s21 + $0x18] sm:$0xf]
  %v5377 = vld [vmem:[%s21 + $0x1c] sm:$0xf]
  %v5378 = vld [vmem:[%s22] sm:$0x1]
  %v5380 = vlaneseq
  %v5381 = vshrl.u32 %v5380, 7
  %v5382 = vsub.s32 0, %v5381
  %v5383 = vrot.slane %v5378, %v5382
  %v5393 = vunpack.c.l.b16 %v5370
  %v5394 = vunpack.c.l.b16 %v5371
  %v5395 = vunpack.c.l.b16 %v5372
  %v5396 = vunpack.c.l.b16 %v5373
  %v5397 = vunpack.c.l.b16 %v5374
  %v5398 = vunpack.c.l.b16 %v5375
  %v5399 = vunpack.c.l.b16 %v5376
  %v5400 = vunpack.c.l.b16 %v5377
  %v5401 = vpack.c.b16 %v5394, %v5393
  %v5402 = vpack.c.b16 %v5396, %v5395
  %v5403 = vpack.c.b16 %v5398, %v5397
  %v5404 = vpack.c.b16 %v5400, %v5399
  %v5410 = vsel %vm179, %v5369, 0
  %5412 = vmatprep.subr.bf16.mxu0 0
  %5413 = vmatpush1.bf16.msra.mxu0 0
  %5414 = vmatprep.subr.bf16.mxu0 0
  %5415 = vmatpush1.bf16.msra.mxu0 0
  %5416 = vmatprep.subr.bf16.mxu0 0
  %5417 = vmatpush1.bf16.msra.mxu0 0
  %5418 = vmatprep.subr.bf16.mxu0 0
  %5419 = vmatpush1.bf16.msra.mxu0 0
  %5420 = vmatprep.subr.bf16.mxu0 0
  %5421 = vmatpush1.bf16.msra.mxu0 %v5404
  %5422 = vmatprep.subr.bf16.mxu0 0
  %5423 = vmatpush1.bf16.msra.mxu0 %v5403
  %5424 = vmatprep.subr.bf16.mxu0 0
  %5425 = vmatpush1.bf16.msra.mxu0 %v5402
  %5426 = vmatprep.subr.bf16.mxu0 0
  %5427 = vmatpush1.bf16.msra.mxu0 %v5401
  %5428 = vmatprep.subr.bf16.mxu0 0
  %5429 = vmatpush2.bf16.msra.mxu0 0
  %5430 = vmatprep.subr.bf16.mxu0 0
  %5431 = vmatpush2.bf16.msra.mxu0 0
  %5432 = vmatprep.subr.bf16.mxu0 0
  %5433 = vmatpush2.bf16.msra.mxu0 0
  %5434 = vmatprep.subr.bf16.mxu0 0
  %5435 = vmatpush2.bf16.msra.mxu0 0
  %5436 = vmatprep.subr.bf16.mxu0 0
  %5437 = vmatpush2.bf16.msra.mxu0 0
  %5438 = vmatprep.subr.bf16.mxu0 0
  %5439 = vmatpush2.bf16.msra.mxu0 0
  %5440 = vmatprep.subr.bf16.mxu0 0
  %5441 = vmatpush2.bf16.msra.mxu0 0
  %5442 = vmatprep.subr.bf16.mxu0 0
  %5443 = vmatpush2.bf16.msra.mxu0 0
  %5444 = vmatprep.mubr.bf16.mxu0 0
  %5445 = vmatmul.mubr.bf16.gmra.mxu0 %v5410
  %v5446 = vpop.f32.mrf.mxu0
  %v5447 = vadd.f32 %v5383, %v5446
  %v5448 = vpop.f32.mrf.mxu0
  %v5449 = vpop.f32.mrf.mxu0
  %v5450 = vadd.f32 %v5383, %v5449
  %v5451 = vpop.f32.mrf.mxu0
  %5452 = vdwg.mxu0
  %v5453 = vadd.f32 %v5281, %v5447
  %v5454 = vadd.f32 %v5284, %v5450
  %5455 = vst [vmem:[%s23] sm:$0xff] %v5453
  %5456 = vst [vmem:[%s23 + $0x8] sm:$0xff] %v5454
  // Predicated region
  $region94: #{lottery_transformer.1} parent=0 // pred_check
    _
  $region95: #{lottery_transformer.1} parent=0 // pred_check_branch
    %5458 = sbr.rel (0) target = $region97
  $region96: #{lottery_transformer.1} parent=0 // pred_region
    _
  $region97: #{lottery_transformer.1} parent=0 // pred_fallthru
    _
  // Predicated region
  $region98: #{lottery_transformer.1} parent=0 // pred_check
    _
  $region99: #{lottery_transformer.1} parent=0 // pred_check_branch
    %5460 = sbr.rel (0) target = $region101
  $region100: #{lottery_transformer.1} parent=0 // pred_region
    _
  $region101: #{lottery_transformer.1} parent=0 // pred_fallthru
    _

</llo_original>
